<compile_context>
chip_gen: v7x
topology: tpu7x:2x2x1
jax: 0.10.0
libtpu: 0.0.40
codegen_flags: <defaults>
</compile_context>

<pallas_src>
import jax
import jax.numpy as jnp
from jax.experimental import pallas as pl
from jax.experimental.pallas import tpu as pltpu


# ----------------------------------------------------------------------- conv1

def _conv_gemm_kernel(p_ref, w_ref, b_ref, o_ref):
    # p_ref: (K, P) im2col patches for one batch element (lane dim = spatial P)
    # w_ref: (Cout, K), b_ref: (Cout, 1)  ->  o_ref: (Cout, P)
    acc = jnp.dot(w_ref[...], p_ref[...], preferred_element_type=jnp.float32)
    o_ref[...] = jnp.maximum(acc + b_ref[...], 0.0).astype(o_ref.dtype)


def conv_gemm_relu(patches, w, b):
    """relu(w @ patches[b] + b) per batch element.

    patches: (B, K, P); w: (Cout, K); b: (Cout, 1) -> (B, Cout, P)."""
    B, K, P = patches.shape
    cout = w.shape[0]
    return pl.pallas_call(
        _conv_gemm_kernel,
        out_shape=jax.ShapeDtypeStruct((B, cout, P), patches.dtype),
        grid=(B,),
        in_specs=[
            pl.BlockSpec((None, K, P), lambda i: (i, 0, 0)),   # leading dim squeezed
            pl.BlockSpec((cout, K), lambda i: (0, 0)),
            pl.BlockSpec((cout, 1), lambda i: (0, 0)),
        ],
        out_specs=pl.BlockSpec((None, cout, P), lambda i: (i, 0, 0)),
        compiler_params=pltpu.CompilerParams(
            dimension_semantics=("parallel",)),
    )(patches, w, b)


# --------------------------------------------- fused conv2 + flatten + head

def _conv2_head_kernel(p2_ref, w2_ref, b2_ref, w3_ref, b3_ref, w4_ref, b4_ref,
                       logits_ref, logp_ref, h2_sc, feat_sc):
    # Grid axis = K-chunks of the 6400-wide flatten (4 conv2 channels per step).
    # p2_ref: (B, 768, 200)   w2_ref: (32, 768)   b2_ref: (32, 1)
    # w3_ref: (cpk, 200, H)   b3_ref: (1, H)      w4_ref: (H, N)   b4_ref: (1, N)
    # h2_sc:  (B, 32, 200) VMEM scratch (conv2 activations, resident across grid)
    # feat_sc:(B, H) VMEM accumulator for the linear layer.
    k = pl.program_id(0)
    nk = pl.num_programs(0)
    batch = h2_sc.shape[0]
    cpk = w3_ref.shape[0]

    @pl.when(k == 0)
    def _init():
        # conv2 as GEMM + bias + ReLU for every batch element, kept in VMEM.
        for b in range(batch):
            acc = jnp.dot(w2_ref[...], p2_ref[b],
                          preferred_element_type=jnp.float32)
            h2_sc[b] = jnp.maximum(acc + b2_ref[...], 0.0)
        feat_sc[...] = jnp.zeros_like(feat_sc)

    # Partial linear: flatten channels [cpk*k, cpk*(k+1)).  For each channel the
    # B batch rows are gathered into one (B, 200) LHS so the (200, H) weight
    # block streams through the MXU exactly once (no per-batch weight reload).
    feat = feat_sc[...]
    for j in range(cpk):
        rows = [h2_sc[b, pl.ds(cpk * k + j, 1), :] for b in range(batch)]
        lhs = jnp.concatenate(rows, axis=0) if batch > 1 else rows[0]
        feat = feat + jnp.dot(lhs, w3_ref[j],
                              preferred_element_type=jnp.float32)
    feat_sc[...] = feat

    @pl.when(k == nk - 1)
    def _fin():
        feat_fin = feat_sc[...] + b3_ref[...]
        logits = jnp.dot(feat_fin, w4_ref[...],
                         preferred_element_type=jnp.float32) + b4_ref[...]
        logits_ref[...] = logits.astype(logits_ref.dtype)
        # Categorical(logits=...) normalization: log_probs = logits - logsumexp.
        m = jnp.max(logits, axis=-1, keepdims=True)
        z = logits - m
        lse = jnp.log(jnp.sum(jnp.exp(z), axis=-1, keepdims=True))
        logp_ref[...] = (z - lse).astype(logp_ref.dtype)


def conv2_head_forward(p2, w2, b2, w3r, b3, w4, b4, *, chunks=8):
    """Fused conv2 (as GEMM) + flatten + linear + actor + log-softmax.

    p2:  (B, 768, 200)  conv2 im2col patches
    w2:  (32, 768)   b2: (32, 1)
    w3r: (32, 200, H) linear weight reshaped per conv2 channel
    b3:  (1, H)      w4: (H, N)      b4: (1, N)
    -> (logits (B, N), log_probs (B, N))
    """
    B, K2, P2 = p2.shape
    cout = w2.shape[0]
    H = w3r.shape[-1]
    N = w4.shape[-1]
    assert cout % chunks == 0
    cpk = cout // chunks
    return pl.pallas_call(
        _conv2_head_kernel,
        out_shape=(jax.ShapeDtypeStruct((B, N), p2.dtype),
                   jax.ShapeDtypeStruct((B, N), p2.dtype)),
        grid=(chunks,),
        in_specs=[
            pl.BlockSpec((B, K2, P2), lambda k: (0, 0, 0)),   # constant: 1 fetch
            pl.BlockSpec((cout, K2), lambda k: (0, 0)),
            pl.BlockSpec((cout, 1), lambda k: (0, 0)),
            pl.BlockSpec((cpk, P2, H), lambda k: (k, 0, 0)),  # streamed K-chunks
            pl.BlockSpec((1, H), lambda k: (0, 0)),
            pl.BlockSpec((H, N), lambda k: (0, 0)),
            pl.BlockSpec((1, N), lambda k: (0, 0)),
        ],
        out_specs=(pl.BlockSpec((B, N), lambda k: (0, 0)),
                   pl.BlockSpec((B, N), lambda k: (0, 0))),
        scratch_shapes=[pltpu.VMEM((B, cout, P2), jnp.float32),
                        pltpu.VMEM((B, H), jnp.float32)],
        compiler_params=pltpu.CompilerParams(
            dimension_semantics=("arbitrary",)),
    )(p2, w2, b2, w3r, b3, w4, b4)


# ----------------------------------------------------------------------- model

HIDDEN_DIM = 200
NUM_OUTPUTS = 6  # Pong action space
_DN = ("NCDHW", "OIDHW", "NCDHW")


def init_params(key):
    """Weights stored pre-laid-out for the kernels (no runtime transposes):
       conv*_w: (Cout, Cin*kd*kh*kw)   conv*_b: (Cout, 1)
       linear_w: (6400, 200)           linear_b: (1, 200)
       actor_w:  (200, NUM_OUTPUTS)    actor_b:  (1, NUM_OUTPUTS)"""
    ks = jax.random.split(key, 8)

    def w(k, shape, fan_in):
        return (jax.random.normal(k, shape, jnp.float32) / jnp.sqrt(fan_in)).astype(jnp.float32)

    return {
        "conv1_w": w(ks[0], (16, 1 * 3 * 8 * 8), 1 * 3 * 8 * 8),
        "conv1_b": w(ks[1], (16, 1), 1 * 3 * 8 * 8),
        "conv2_w": w(ks[2], (32, 16 * 3 * 4 * 4), 16 * 3 * 4 * 4),
        "conv2_b": w(ks[3], (32, 1), 16 * 3 * 4 * 4),
        "linear_w": w(ks[4], (32 * 2 * 10 * 10, HIDDEN_DIM), 32 * 2 * 10 * 10),
        "linear_b": w(ks[5], (1, HIDDEN_DIM), 32 * 2 * 10 * 10),
        "actor_w": w(ks[6], (HIDDEN_DIM, NUM_OUTPUTS), HIDDEN_DIM),
        "actor_b": w(ks[7], (1, NUM_OUTPUTS), HIDDEN_DIM),
    }


@jax.jit
def cnn3d_forward(params, x):
    # x: (B, D, H, W, C) -> permute(0,4,1,2,3) -> (B, C, D, H, W) (free for C == 1)
    x = jnp.transpose(x, (0, 4, 1, 2, 3))
    B = x.shape[0]

    # conv1: patch extraction as a single fused XLA op, GEMM+bias+ReLU in Pallas.
    # (channel ordering of the patches op is (Cin, kd, kh, kw), matching the
    # PyTorch weight.reshape(Cout, -1) layout.)
    p1 = jax.lax.conv_general_dilated_patches(
        x, filter_shape=(3, 8, 8), window_strides=(2, 4, 4),
        padding=[(0, 0), (2, 2), (2, 2)], dimension_numbers=_DN)   # (B,192,5,20,20)
    _, K1, D1, H1, W1 = p1.shape
    h1 = conv_gemm_relu(p1.reshape(B, K1, D1 * H1 * W1),
                        params["conv1_w"], params["conv1_b"])      # (B,16,2000)
    h1 = h1.reshape(B, 16, D1, H1, W1)                             # (B,16,5,20,20)

    # conv2 patches, then the fully fused conv2+flatten+linear+actor+log-softmax
    # Pallas kernel (h2 never leaves VMEM).
    p2 = jax.lax.conv_general_dilated_patches(
        h1, filter_shape=(3, 4, 4), window_strides=(2, 2, 2),
        padding=[(0, 0), (1, 1), (1, 1)], dimension_numbers=_DN)   # (B,768,2,10,10)
    _, K2, D2, H2, W2 = p2.shape
    P2 = D2 * H2 * W2                                              # 200

    # linear_w rows are ordered (cout, d, h, w) == PyTorch Flatten of NCDHW;
    # view them as one (200, H) block per conv2 channel (free reshape).
    w3r = params["linear_w"].reshape(32, P2, HIDDEN_DIM)

    logits, log_probs = conv2_head_forward(
        p2.reshape(B, K2, P2), params["conv2_w"], params["conv2_b"],
        w3r, params["linear_b"], params["actor_w"], params["actor_b"])
    # TODO(synk): torch.distributions.Categorical has no Pallas equivalent; we return
    # its parametrization (raw logits + normalized log-probs) instead.
    return logits, log_probs


# Pure-JAX reference for sanity checking the Pallas path.
def cnn3d_forward_ref(params, x):
    x = jnp.transpose(x, (0, 4, 1, 2, 3))
    w1 = params["conv1_w"].reshape(16, 1, 3, 8, 8)
    w2 = params["conv2_w"].reshape(32, 16, 3, 4, 4)
    h = jax.lax.conv_general_dilated(x, w1, (2, 4, 4),
                                     [(0, 0), (2, 2), (2, 2)], dimension_numbers=_DN)
    h = jax.nn.relu(h + params["conv1_b"].reshape(1, 16, 1, 1, 1))
    h = jax.lax.conv_general_dilated(h, w2, (2, 2, 2),
                                     [(0, 0), (1, 1), (1, 1)], dimension_numbers=_DN)
    h = jax.nn.relu(h + params["conv2_b"].reshape(1, 32, 1, 1, 1))
    feat = h.reshape(h.shape[0], -1) @ params["linear_w"] + params["linear_b"]
    logits = feat @ params["actor_w"] + params["actor_b"]
    return logits, jax.nn.log_softmax(logits, axis=-1)


if __name__ == "__main__":
    key = jax.random.PRNGKey(0)
    pkey, xkey = jax.random.split(key)
    params = init_params(pkey)

    # Input shape implied by the module: seq_len=11 frames of 80x80, 1 channel.
    B = 2
    x = jax.random.normal(xkey, (B, 11, 80, 80, 1), dtype=jnp.float32)

    logits, log_probs = cnn3d_forward(params, x)
    logits = jax.block_until_ready(logits)
    log_probs = jax.block_until_ready(log_probs)

    ref_logits, ref_logp = cnn3d_forward_ref(params, x)
    assert logits.shape == (B, NUM_OUTPUTS) and log_probs.shape == (B, NUM_OUTPUTS)
    assert jnp.allclose(logits, ref_logits, atol=1e-3, rtol=1e-3)
    assert jnp.allclose(log_probs, ref_logp, atol=1e-3, rtol=1e-3)

    print("KERNEL_OK")
</pallas_src>

<mosaic_0001>
module attributes {stable_mosaic.version = 11 : i64} {
  func.func @_conv_gemm_kernel(%arg0: i32, %arg1: memref<1x192x2000xf32, #tpu.memory_space<vmem>>, %arg2: memref<16x192xf32, #tpu.memory_space<vmem>>, %arg3: memref<16x1xf32, #tpu.memory_space<vmem>>, %arg4: memref<1x16x2000xf32, #tpu.memory_space<vmem>>) attributes {dimension_semantics = [#tpu.dimension_semantics<parallel>], iteration_bounds = array<i64: 2>, scalar_prefetch = 0 : i64, scratch_operands = 0 : i64, tpu.core_type = #tpu.core_type<tc>, window_params = [{transform_indices = @transform_0, window_bounds = array<i64: 1, 192, 2000>}, {pipeline_mode = #tpu.pipeline_mode<synchronous>, transform_indices = @transform_1, window_bounds = array<i64: 16, 192>}, {pipeline_mode = #tpu.pipeline_mode<synchronous>, transform_indices = @transform_2, window_bounds = array<i64: 16, 1>}, {transform_indices = @transform_3, window_bounds = array<i64: 1, 16, 2000>}]} {
    %c0 = arith.constant 0 : index
    %c0_0 = arith.constant 0 : index
    %0 = vector.load %arg2[%c0, %c0_0] : memref<16x192xf32, #tpu.memory_space<vmem>>, vector<16x192xf32>
    %c0_1 = arith.constant 0 : index
    %c0_2 = arith.constant 0 : index
    %c0_3 = arith.constant 0 : index
    %1 = vector.load %arg1[%c0_1, %c0_2, %c0_3] : memref<1x192x2000xf32, #tpu.memory_space<vmem>>, vector<1x192x2000xf32>
    %2 = vector.shape_cast %1 : vector<1x192x2000xf32> to vector<192x2000xf32>
    %cst = arith.constant dense<0.000000e+00> : vector<16x2000xf32>
    %3 = tpu.matmul %0, %2, %cst {dimension_numbers = #tpu.dot_dimension_numbers<[1], [0], [0], [1], [0, 0, 1, 1], [], []>} : vector<16x192xf32>, vector<192x2000xf32>, vector<16x2000xf32> -> vector<16x2000xf32>
    %c0_4 = arith.constant 0 : index
    %c0_5 = arith.constant 0 : index
    %4 = vector.load %arg3[%c0_4, %c0_5] : memref<16x1xf32, #tpu.memory_space<vmem>>, vector<16x1xf32>
    %5 = vector.broadcast %4 : vector<16x1xf32> to vector<16x2000xf32>
    %6 = arith.addf %3, %5 : vector<16x2000xf32>
    %cst_6 = arith.constant 0.000000e+00 : f32
    %7 = vector.broadcast %cst_6 : f32 to vector<16x2000xf32>
    %8 = arith.maximumf %6, %7 : vector<16x2000xf32>
    %c0_7 = arith.constant 0 : index
    %c0_8 = arith.constant 0 : index
    %c0_9 = arith.constant 0 : index
    %9 = vector.load %arg4[%c0_7, %c0_8, %c0_9] : memref<1x16x2000xf32, #tpu.memory_space<vmem>>, vector<1x16x2000xf32>
    %10 = vector.shape_cast %9 : vector<1x16x2000xf32> to vector<16x2000xf32>
    %11 = vector.shape_cast %8 : vector<16x2000xf32> to vector<1x16x2000xf32>
    tpu.vector_store %arg4[%c0_7, %c0_8, %c0_9], %11 {strides = array<i32>} : memref<1x16x2000xf32, #tpu.memory_space<vmem>>, vector<1x16x2000xf32>,
    return
  }
  func.func @transform_0(%arg0: i32) -> (i32, i32, i32) {
    %c0_i32 = arith.constant 0 : i32
    %c0_i32_0 = arith.constant 0 : i32
    %c0_i32_1 = arith.constant 0 : i32
    return %arg0, %c0_i32, %c0_i32_0 : i32, i32, i32
  }
  func.func @transform_1(%arg0: i32) -> (i32, i32) {
    %c0_i32 = arith.constant 0 : i32
    %c0_i32_0 = arith.constant 0 : i32
    %c0_i32_1 = arith.constant 0 : i32
    return %c0_i32, %c0_i32_0 : i32, i32
  }
  func.func @transform_2(%arg0: i32) -> (i32, i32) {
    %c0_i32 = arith.constant 0 : i32
    %c0_i32_0 = arith.constant 0 : i32
    %c0_i32_1 = arith.constant 0 : i32
    return %c0_i32, %c0_i32_0 : i32, i32
  }
  func.func @transform_3(%arg0: i32) -> (i32, i32, i32) {
    %c0_i32 = arith.constant 0 : i32
    %c0_i32_0 = arith.constant 0 : i32
    %c0_i32_1 = arith.constant 0 : i32
    return %arg0, %c0_i32, %c0_i32_0 : i32, i32, i32
  }
}

module attributes {stable_mosaic.version = 11 : i64} {
  func.func @_conv2_head_kernel(%arg0: i32, %arg1: memref<2x768x200xf32, #tpu.memory_space<vmem>>, %arg2: memref<32x768xf32, #tpu.memory_space<vmem>>, %arg3: memref<32x1xf32, #tpu.memory_space<vmem>>, %arg4: memref<4x200x200xf32, #tpu.memory_space<vmem>>, %arg5: memref<1x200xf32, #tpu.memory_space<vmem>>, %arg6: memref<200x6xf32, #tpu.memory_space<vmem>>, %arg7: memref<1x6xf32, #tpu.memory_space<vmem>>, %arg8: memref<2x6xf32, #tpu.memory_space<vmem>>, %arg9: memref<2x6xf32, #tpu.memory_space<vmem>>, %arg10: memref<2x32x200xf32, #tpu.memory_space<vmem>>, %arg11: memref<2x200xf32, #tpu.memory_space<vmem>>) attributes {dimension_semantics = [#tpu.dimension_semantics<arbitrary>], iteration_bounds = array<i64: 8>, scalar_prefetch = 0 : i64, scratch_operands = 2 : i64, tpu.core_type = #tpu.core_type<tc>, window_params = [{pipeline_mode = #tpu.pipeline_mode<synchronous>, transform_indices = @transform_0, window_bounds = array<i64: 2, 768, 200>}, {pipeline_mode = #tpu.pipeline_mode<synchronous>, transform_indices = @transform_1, window_bounds = array<i64: 32, 768>}, {pipeline_mode = #tpu.pipeline_mode<synchronous>, transform_indices = @transform_2, window_bounds = array<i64: 32, 1>}, {transform_indices = @transform_3, window_bounds = array<i64: 4, 200, 200>}, {pipeline_mode = #tpu.pipeline_mode<synchronous>, transform_indices = @transform_4, window_bounds = array<i64: 1, 200>}, {pipeline_mode = #tpu.pipeline_mode<synchronous>, transform_indices = @transform_5, window_bounds = array<i64: 200, 6>}, {pipeline_mode = #tpu.pipeline_mode<synchronous>, transform_indices = @transform_6, window_bounds = array<i64: 1, 6>}, {pipeline_mode = #tpu.pipeline_mode<synchronous>, transform_indices = @transform_7, window_bounds = array<i64: 2, 6>}, {pipeline_mode = #tpu.pipeline_mode<synchronous>, transform_indices = @transform_8, window_bounds = array<i64: 2, 6>}]} {
    %c0_i32 = arith.constant 0 : i32
    %0 = arith.cmpi eq, %arg0, %c0_i32 : i32
    %1 = arith.extui %0 : i1 to i32
    %c0_i32_0 = arith.constant 0 : i32
    %2 = arith.cmpi ne, %1, %c0_i32_0 : i32
    scf.if %2 {
      %c0_45 = arith.constant 0 : index
      %c0_46 = arith.constant 0 : index
      %68 = vector.load %arg2[%c0_45, %c0_46] : memref<32x768xf32, #tpu.memory_space<vmem>>, vector<32x768xf32>
      %c0_47 = arith.constant 0 : index
      %c0_48 = arith.constant 0 : index
      %c0_49 = arith.constant 0 : index
      %69 = vector.load %arg1[%c0_47, %c0_48, %c0_49] : memref<2x768x200xf32, #tpu.memory_space<vmem>>, vector<1x768x200xf32>
      %70 = vector.shape_cast %69 : vector<1x768x200xf32> to vector<768x200xf32>
      %cst_50 = arith.constant dense<0.000000e+00> : vector<32x200xf32>
      %71 = tpu.matmul %68, %70, %cst_50 {dimension_numbers = #tpu.dot_dimension_numbers<[1], [0], [0], [1], [0, 0, 1, 1], [], []>} : vector<32x768xf32>, vector<768x200xf32>, vector<32x200xf32> -> vector<32x200xf32>
      %c0_51 = arith.constant 0 : index
      %c0_52 = arith.constant 0 : index
      %72 = vector.load %arg3[%c0_51, %c0_52] : memref<32x1xf32, #tpu.memory_space<vmem>>, vector<32x1xf32>
      %73 = vector.broadcast %72 : vector<32x1xf32> to vector<32x200xf32>
      %74 = arith.addf %71, %73 : vector<32x200xf32>
      %cst_53 = arith.constant 0.000000e+00 : f32
      %75 = vector.broadcast %cst_53 : f32 to vector<32x200xf32>
      %76 = arith.maximumf %74, %75 : vector<32x200xf32>
      %c0_54 = arith.constant 0 : index
      %c0_55 = arith.constant 0 : index
      %c0_56 = arith.constant 0 : index
      %77 = vector.load %arg10[%c0_54, %c0_55, %c0_56] : memref<2x32x200xf32, #tpu.memory_space<vmem>>, vector<1x32x200xf32>
      %78 = vector.shape_cast %77 : vector<1x32x200xf32> to vector<32x200xf32>
      %79 = vector.shape_cast %76 : vector<32x200xf32> to vector<1x32x200xf32>
      tpu.vector_store %arg10[%c0_54, %c0_55, %c0_56], %79 {strides = array<i32>} : memref<2x32x200xf32, #tpu.memory_space<vmem>>, vector<1x32x200xf32>,
      %c0_57 = arith.constant 0 : index
      %c0_58 = arith.constant 0 : index
      %80 = vector.load %arg2[%c0_57, %c0_58] : memref<32x768xf32, #tpu.memory_space<vmem>>, vector<32x768xf32>
      %c1_59 = arith.constant 1 : index
      %c0_60 = arith.constant 0 : index
      %c0_61 = arith.constant 0 : index
      %81 = vector.load %arg1[%c1_59, %c0_60, %c0_61] : memref<2x768x200xf32, #tpu.memory_space<vmem>>, vector<1x768x200xf32>
      %82 = vector.shape_cast %81 : vector<1x768x200xf32> to vector<768x200xf32>
      %cst_62 = arith.constant dense<0.000000e+00> : vector<32x200xf32>
      %83 = tpu.matmul %80, %82, %cst_62 {dimension_numbers = #tpu.dot_dimension_numbers<[1], [0], [0], [1], [0, 0, 1, 1], [], []>} : vector<32x768xf32>, vector<768x200xf32>, vector<32x200xf32> -> vector<32x200xf32>
      %c0_63 = arith.constant 0 : index
      %c0_64 = arith.constant 0 : index
      %84 = vector.load %arg3[%c0_63, %c0_64] : memref<32x1xf32, #tpu.memory_space<vmem>>, vector<32x1xf32>
      %85 = vector.broadcast %84 : vector<32x1xf32> to vector<32x200xf32>
      %86 = arith.addf %83, %85 : vector<32x200xf32>
      %cst_65 = arith.constant 0.000000e+00 : f32
      %87 = vector.broadcast %cst_65 : f32 to vector<32x200xf32>
      %88 = arith.maximumf %86, %87 : vector<32x200xf32>
      %c1_66 = arith.constant 1 : index
      %c0_67 = arith.constant 0 : index
      %c0_68 = arith.constant 0 : index
      %89 = vector.load %arg10[%c1_66, %c0_67, %c0_68] : memref<2x32x200xf32, #tpu.memory_space<vmem>>, vector<1x32x200xf32>
      %90 = vector.shape_cast %89 : vector<1x32x200xf32> to vector<32x200xf32>
      %91 = vector.shape_cast %88 : vector<32x200xf32> to vector<1x32x200xf32>
      tpu.vector_store %arg10[%c1_66, %c0_67, %c0_68], %91 {strides = array<i32>} : memref<2x32x200xf32, #tpu.memory_space<vmem>>, vector<1x32x200xf32>,
      %cst_69 = arith.constant 0.000000e+00 : f32
      %92 = vector.broadcast %cst_69 : f32 to vector<2x200xf32>
      %c0_70 = arith.constant 0 : index
      %c0_71 = arith.constant 0 : index
      %93 = vector.load %arg11[%c0_70, %c0_71] : memref<2x200xf32, #tpu.memory_space<vmem>>, vector<2x200xf32>
      tpu.vector_store %arg11[%c0_70, %c0_71], %92 {strides = array<i32>} : memref<2x200xf32, #tpu.memory_space<vmem>>, vector<2x200xf32>,
    } else {
    }
    %c0 = arith.constant 0 : index
    %c0_1 = arith.constant 0 : index
    %3 = vector.load %arg11[%c0, %c0_1] : memref<2x200xf32, #tpu.memory_space<vmem>>, vector<2x200xf32>
    %c4_i32 = arith.constant 4 : i32
    %4 = arith.muli %c4_i32, %arg0 : i32
    %c0_i32_2 = arith.constant 0 : i32
    %5 = arith.addi %4, %c0_i32_2 : i32
    %c0_3 = arith.constant 0 : index
    %6 = arith.index_cast %5 : i32 to index
    %c0_4 = arith.constant 0 : index
    %7 = vector.load %arg10[%c0_3, %6, %c0_4] : memref<2x32x200xf32, #tpu.memory_space<vmem>>, vector<1x1x200xf32>
    %8 = vector.shape_cast %7 : vector<1x1x200xf32> to vector<1x200xf32>
    %c4_i32_5 = arith.constant 4 : i32
    %9 = arith.muli %c4_i32_5, %arg0 : i32
    %c0_i32_6 = arith.constant 0 : i32
    %10 = arith.addi %9, %c0_i32_6 : i32
    %c1 = arith.constant 1 : index
    %11 = arith.index_cast %10 : i32 to index
    %c0_7 = arith.constant 0 : index
    %12 = vector.load %arg10[%c1, %11, %c0_7] : memref<2x32x200xf32, #tpu.memory_space<vmem>>, vector<1x1x200xf32>
    %13 = vector.shape_cast %12 : vector<1x1x200xf32> to vector<1x200xf32>
    %14 = tpu.concatenate %8, %13 in 0 : vector<1x200xf32>, vector<1x200xf32> -> vector<2x200xf32>
    %c0_8 = arith.constant 0 : index
    %c0_9 = arith.constant 0 : index
    %c0_10 = arith.constant 0 : index
    %15 = vector.load %arg4[%c0_8, %c0_9, %c0_10] : memref<4x200x200xf32, #tpu.memory_space<vmem>>, vector<1x200x200xf32>
    %16 = vector.shape_cast %15 : vector<1x200x200xf32> to vector<200x200xf32>
    %cst = arith.constant dense<0.000000e+00> : vector<2x200xf32>
    %17 = tpu.matmul %14, %16, %cst {dimension_numbers = #tpu.dot_dimension_numbers<[1], [0], [0], [1], [0, 0, 1, 1], [], []>} : vector<2x200xf32>, vector<200x200xf32>, vector<2x200xf32> -> vector<2x200xf32>
    %18 = arith.addf %3, %17 : vector<2x200xf32>
    %c4_i32_11 = arith.constant 4 : i32
    %19 = arith.muli %c4_i32_11, %arg0 : i32
    %c1_i32 = arith.constant 1 : i32
    %20 = arith.addi %19, %c1_i32 : i32
    %c0_12 = arith.constant 0 : index
    %21 = arith.index_cast %20 : i32 to index
    %c0_13 = arith.constant 0 : index
    %22 = vector.load %arg10[%c0_12, %21, %c0_13] : memref<2x32x200xf32, #tpu.memory_space<vmem>>, vector<1x1x200xf32>
    %23 = vector.shape_cast %22 : vector<1x1x200xf32> to vector<1x200xf32>
    %c4_i32_14 = arith.constant 4 : i32
    %24 = arith.muli %c4_i32_14, %arg0 : i32
    %c1_i32_15 = arith.constant 1 : i32
    %25 = arith.addi %24, %c1_i32_15 : i32
    %c1_16 = arith.constant 1 : index
    %26 = arith.index_cast %25 : i32 to index
    %c0_17 = arith.constant 0 : index
    %27 = vector.load %arg10[%c1_16, %26, %c0_17] : memref<2x32x200xf32, #tpu.memory_space<vmem>>, vector<1x1x200xf32>
    %28 = vector.shape_cast %27 : vector<1x1x200xf32> to vector<1x200xf32>
    %29 = tpu.concatenate %23, %28 in 0 : vector<1x200xf32>, vector<1x200xf32> -> vector<2x200xf32>
    %c1_18 = arith.constant 1 : index
    %c0_19 = arith.constant 0 : index
    %c0_20 = arith.constant 0 : index
    %30 = vector.load %arg4[%c1_18, %c0_19, %c0_20] : memref<4x200x200xf32, #tpu.memory_space<vmem>>, vector<1x200x200xf32>
    %31 = vector.shape_cast %30 : vector<1x200x200xf32> to vector<200x200xf32>
    %cst_21 = arith.constant dense<0.000000e+00> : vector<2x200xf32>
    %32 = tpu.matmul %29, %31, %cst_21 {dimension_numbers = #tpu.dot_dimension_numbers<[1], [0], [0], [1], [0, 0, 1, 1], [], []>} : vector<2x200xf32>, vector<200x200xf32>, vector<2x200xf32> -> vector<2x200xf32>
    %33 = arith.addf %18, %32 : vector<2x200xf32>
    %c4_i32_22 = arith.constant 4 : i32
    %34 = arith.muli %c4_i32_22, %arg0 : i32
    %c2_i32 = arith.constant 2 : i32
    %35 = arith.addi %34, %c2_i32 : i32
    %c0_23 = arith.constant 0 : index
    %36 = arith.index_cast %35 : i32 to index
    %c0_24 = arith.constant 0 : index
    %37 = vector.load %arg10[%c0_23, %36, %c0_24] : memref<2x32x200xf32, #tpu.memory_space<vmem>>, vector<1x1x200xf32>
    %38 = vector.shape_cast %37 : vector<1x1x200xf32> to vector<1x200xf32>
    %c4_i32_25 = arith.constant 4 : i32
    %39 = arith.muli %c4_i32_25, %arg0 : i32
    %c2_i32_26 = arith.constant 2 : i32
    %40 = arith.addi %39, %c2_i32_26 : i32
    %c1_27 = arith.constant 1 : index
    %41 = arith.index_cast %40 : i32 to index
    %c0_28 = arith.constant 0 : index
    %42 = vector.load %arg10[%c1_27, %41, %c0_28] : memref<2x32x200xf32, #tpu.memory_space<vmem>>, vector<1x1x200xf32>
    %43 = vector.shape_cast %42 : vector<1x1x200xf32> to vector<1x200xf32>
    %44 = tpu.concatenate %38, %43 in 0 : vector<1x200xf32>, vector<1x200xf32> -> vector<2x200xf32>
    %c2 = arith.constant 2 : index
    %c0_29 = arith.constant 0 : index
    %c0_30 = arith.constant 0 : index
    %45 = vector.load %arg4[%c2, %c0_29, %c0_30] : memref<4x200x200xf32, #tpu.memory_space<vmem>>, vector<1x200x200xf32>
    %46 = vector.shape_cast %45 : vector<1x200x200xf32> to vector<200x200xf32>
    %cst_31 = arith.constant dense<0.000000e+00> : vector<2x200xf32>
    %47 = tpu.matmul %44, %46, %cst_31 {dimension_numbers = #tpu.dot_dimension_numbers<[1], [0], [0], [1], [0, 0, 1, 1], [], []>} : vector<2x200xf32>, vector<200x200xf32>, vector<2x200xf32> -> vector<2x200xf32>
    %48 = arith.addf %33, %47 : vector<2x200xf32>
    %c4_i32_32 = arith.constant 4 : i32
    %49 = arith.muli %c4_i32_32, %arg0 : i32
    %c3_i32 = arith.constant 3 : i32
    %50 = arith.addi %49, %c3_i32 : i32
    %c0_33 = arith.constant 0 : index
    %51 = arith.index_cast %50 : i32 to index
    %c0_34 = arith.constant 0 : index
    %52 = vector.load %arg10[%c0_33, %51, %c0_34] : memref<2x32x200xf32, #tpu.memory_space<vmem>>, vector<1x1x200xf32>
    %53 = vector.shape_cast %52 : vector<1x1x200xf32> to vector<1x200xf32>
    %c4_i32_35 = arith.constant 4 : i32
    %54 = arith.muli %c4_i32_35, %arg0 : i32
    %c3_i32_36 = arith.constant 3 : i32
    %55 = arith.addi %54, %c3_i32_36 : i32
    %c1_37 = arith.constant 1 : index
    %56 = arith.index_cast %55 : i32 to index
    %c0_38 = arith.constant 0 : index
    %57 = vector.load %arg10[%c1_37, %56, %c0_38] : memref<2x32x200xf32, #tpu.memory_space<vmem>>, vector<1x1x200xf32>
    %58 = vector.shape_cast %57 : vector<1x1x200xf32> to vector<1x200xf32>
    %59 = tpu.concatenate %53, %58 in 0 : vector<1x200xf32>, vector<1x200xf32> -> vector<2x200xf32>
    %c3 = arith.constant 3 : index
    %c0_39 = arith.constant 0 : index
    %c0_40 = arith.constant 0 : index
    %60 = vector.load %arg4[%c3, %c0_39, %c0_40] : memref<4x200x200xf32, #tpu.memory_space<vmem>>, vector<1x200x200xf32>
    %61 = vector.shape_cast %60 : vector<1x200x200xf32> to vector<200x200xf32>
    %cst_41 = arith.constant dense<0.000000e+00> : vector<2x200xf32>
    %62 = tpu.matmul %59, %61, %cst_41 {dimension_numbers = #tpu.dot_dimension_numbers<[1], [0], [0], [1], [0, 0, 1, 1], [], []>} : vector<2x200xf32>, vector<200x200xf32>, vector<2x200xf32> -> vector<2x200xf32>
    %63 = arith.addf %48, %62 : vector<2x200xf32>
    %c0_42 = arith.constant 0 : index
    %c0_43 = arith.constant 0 : index
    %64 = vector.load %arg11[%c0_42, %c0_43] : memref<2x200xf32, #tpu.memory_space<vmem>>, vector<2x200xf32>
    tpu.vector_store %arg11[%c0_42, %c0_43], %63 {strides = array<i32>} : memref<2x200xf32, #tpu.memory_space<vmem>>, vector<2x200xf32>,
    %c7_i32 = arith.constant 7 : i32
    %65 = arith.cmpi eq, %arg0, %c7_i32 : i32
    %66 = arith.extui %65 : i1 to i32
    %c0_i32_44 = arith.constant 0 : i32
    %67 = arith.cmpi ne, %66, %c0_i32_44 : i32
    scf.if %67 {
      %c0_45 = arith.constant 0 : index
      %c0_46 = arith.constant 0 : index
      %68 = vector.load %arg11[%c0_45, %c0_46] : memref<2x200xf32, #tpu.memory_space<vmem>>, vector<2x200xf32>
      %c0_47 = arith.constant 0 : index
      %c0_48 = arith.constant 0 : index
      %69 = vector.load %arg5[%c0_47, %c0_48] : memref<1x200xf32, #tpu.memory_space<vmem>>, vector<1x200xf32>
      %70 = vector.broadcast %69 : vector<1x200xf32> to vector<2x200xf32>
      %71 = arith.addf %68, %70 : vector<2x200xf32>
      %c0_49 = arith.constant 0 : index
      %c0_50 = arith.constant 0 : index
      %72 = vector.load %arg6[%c0_49, %c0_50] : memref<200x6xf32, #tpu.memory_space<vmem>>, vector<200x6xf32>
      %cst_51 = arith.constant dense<0.000000e+00> : vector<2x6xf32>
      %73 = tpu.matmul %71, %72, %cst_51 {dimension_numbers = #tpu.dot_dimension_numbers<[1], [0], [0], [1], [0, 0, 1, 1], [], []>} : vector<2x200xf32>, vector<200x6xf32>, vector<2x6xf32> -> vector<2x6xf32>
      %c0_52 = arith.constant 0 : index
      %c0_53 = arith.constant 0 : index
      %74 = vector.load %arg7[%c0_52, %c0_53] : memref<1x6xf32, #tpu.memory_space<vmem>>, vector<1x6xf32>
      %75 = vector.broadcast %74 : vector<1x6xf32> to vector<2x6xf32>
      %76 = arith.addf %73, %75 : vector<2x6xf32>
      %c0_54 = arith.constant 0 : index
      %c0_55 = arith.constant 0 : index
      %77 = vector.load %arg8[%c0_54, %c0_55] : memref<2x6xf32, #tpu.memory_space<vmem>>, vector<2x6xf32>
      tpu.vector_store %arg8[%c0_54, %c0_55], %76 {strides = array<i32>} : memref<2x6xf32, #tpu.memory_space<vmem>>, vector<2x6xf32>,
      %cst_56 = arith.constant dense<0xFF800000> : vector<2xf32>
      %78 = vector.multi_reduction <maximumf>, %76, %cst_56 [1] : vector<2x6xf32> to vector<2xf32>
      %79 = vector.shape_cast %78 : vector<2xf32> to vector<2x1xf32>
      %80 = vector.broadcast %79 : vector<2x1xf32> to vector<2x6xf32>
      %81 = arith.subf %76, %80 : vector<2x6xf32>
      %82 = math.exp %81 : vector<2x6xf32>
      %cst_57 = arith.constant dense<0.000000e+00> : vector<2xf32>
      %83 = vector.multi_reduction <add>, %82, %cst_57 [1] : vector<2x6xf32> to vector<2xf32>
      %84 = vector.shape_cast %83 : vector<2xf32> to vector<2x1xf32>
      %85 = math.log %84 : vector<2x1xf32>
      %86 = vector.broadcast %85 : vector<2x1xf32> to vector<2x6xf32>
      %87 = arith.subf %81, %86 : vector<2x6xf32>
      %c0_58 = arith.constant 0 : index
      %c0_59 = arith.constant 0 : index
      %88 = vector.load %arg9[%c0_58, %c0_59] : memref<2x6xf32, #tpu.memory_space<vmem>>, vector<2x6xf32>
      tpu.vector_store %arg9[%c0_58, %c0_59], %87 {strides = array<i32>} : memref<2x6xf32, #tpu.memory_space<vmem>>, vector<2x6xf32>,
    } else {
    }
    return
  }
  func.func @transform_0(%arg0: i32) -> (i32, i32, i32) {
    %c0_i32 = arith.constant 0 : i32
    %c0_i32_0 = arith.constant 0 : i32
    %c0_i32_1 = arith.constant 0 : i32
    %c0_i32_2 = arith.constant 0 : i32
    return %c0_i32, %c0_i32_0, %c0_i32_1 : i32, i32, i32
  }
  func.func @transform_1(%arg0: i32) -> (i32, i32) {
    %c0_i32 = arith.constant 0 : i32
    %c0_i32_0 = arith.constant 0 : i32
    %c0_i32_1 = arith.constant 0 : i32
    return %c0_i32, %c0_i32_0 : i32, i32
  }
  func.func @transform_2(%arg0: i32) -> (i32, i32) {
    %c0_i32 = arith.constant 0 : i32
    %c0_i32_0 = arith.constant 0 : i32
    %c0_i32_1 = arith.constant 0 : i32
    return %c0_i32, %c0_i32_0 : i32, i32
  }
  func.func @transform_3(%arg0: i32) -> (i32, i32, i32) {
    %c0_i32 = arith.constant 0 : i32
    %c0_i32_0 = arith.constant 0 : i32
    %c0_i32_1 = arith.constant 0 : i32
    return %arg0, %c0_i32, %c0_i32_0 : i32, i32, i32
  }
  func.func @transform_4(%arg0: i32) -> (i32, i32) {
    %c0_i32 = arith.constant 0 : i32
    %c0_i32_0 = arith.constant 0 : i32
    %c0_i32_1 = arith.constant 0 : i32
    return %c0_i32, %c0_i32_0 : i32, i32
  }
  func.func @transform_5(%arg0: i32) -> (i32, i32) {
    %c0_i32 = arith.constant 0 : i32
    %c0_i32_0 = arith.constant 0 : i32
    %c0_i32_1 = arith.constant 0 : i32
    return %c0_i32, %c0_i32_0 : i32, i32
  }
  func.func @transform_6(%arg0: i32) -> (i32, i32) {
    %c0_i32 = arith.constant 0 : i32
    %c0_i32_0 = arith.constant 0 : i32
    %c0_i32_1 = arith.constant 0 : i32
    return %c0_i32, %c0_i32_0 : i32, i32
  }
  func.func @transform_7(%arg0: i32) -> (i32, i32) {
    %c0_i32 = arith.constant 0 : i32
    %c0_i32_0 = arith.constant 0 : i32
    %c0_i32_1 = arith.constant 0 : i32
    return %c0_i32, %c0_i32_0 : i32, i32
  }
  func.func @transform_8(%arg0: i32) -> (i32, i32) {
    %c0_i32 = arith.constant 0 : i32
    %c0_i32_0 = arith.constant 0 : i32
    %c0_i32_1 = arith.constant 0 : i32
    return %c0_i32, %c0_i32_0 : i32, i32
  }
}

</mosaic_0001>

<llo_original>
// kernel: cnn3d_forward.2
$region0: #{cnn3d_forward.2}
  #allocation0 [shape = 'u32[]', space=smem, size = 0x4, offset = 0x4, fixed_abs, tag = 'smem constant byte address 0x4 - core index']
  #allocation1 [shape = 'u32[144,128]{1,0:T(1,128)}', space=vmem, size = 0x12000, scoped, tag = 'internal scratch']
  %s0 = inlined_call_operand.vmem [shape: f32[2,192,2000], index: 0, kind: input, shape index: {}]
  %s1 = inlined_call_operand.vmem [shape: f32[16,192], index: 1, kind: input, shape index: {}]
  %s2 = inlined_call_operand.vmem [shape: f32[16,1], index: 2, kind: input, shape index: {}]
  %s3 = inlined_call_operand.vmem [shape: f32[2,16,2000], index: 3, kind: output, shape index: {}]
  %s4 = sld [smem:[#allocation0]]
  $region45: #{cnn3d_forward.2} parent=0
    _
  %s6 = ssub.s32 1, %s4
  %s7 = scalar_select 0, %s6, %s4
  loop: start=0, step=1, limit=4
  $region2: #{cnn3d_forward.2} parent=0 // loop_pre_header
    _
  $region3: #{cnn3d_forward.2} parent=0 // loop_header
    %s9 = sphi 0, %s13
    %p10 = scmp.ge.s32.totalorder %s9, 4
    %s19 = sphi 0, %s21
    %s22 = sphi 0, %s19
    %s23 = sphi 0, %s22
    %s39 = sphi 0, %s23
    %s43 = sphi 0, %s43
    %s45 = sphi 0, %s43
    %s46 = sphi 0, %s45
    %s60 = sphi 0, %s46
    %s64 = sphi 0, %s64
    %s66 = sphi 0, %s64
    %s67 = sphi 0, %s66
    %s81 = sphi 0, %s67
    %s87 = sphi 0, %s89
    %s90 = sphi 0, %s87
    %s91 = sphi 0, %s90
    %s107 = sphi 0, %s91
  $region4: #{cnn3d_forward.2} parent=0 // loop_header_branch
    %12 = sbr.rel (%p10) target = $region8
  $region5: #{cnn3d_forward.2} parent=0 // loop_body
    %s14 = ssub.s32 %s9, 1
    %s15 = ssub.s32 %s9, 2
    %s16 = sadd.s32 %s9, 1
    %s17 = ssub.s32 %s9, %s16
    %p18 = scmp.eq.s32.totalorder %s17, 0
    %s20 = sadd.s32 %s19, 1
    %s21 = scalar_select %p18, %s19, %s20
    %p24 = pneg %p18
    %p25 = scmp.eq.s32.totalorder %s9, 1
    %p26 = por %p24, %p25
    %p27 = scmp.ne.s32.totalorder %s19, %s22
    %p28 = scmp.eq.s32.totalorder %s9, 0
    %p29 = por %p27, %p28
    %p30 = scmp.ne.s32.totalorder %s19, %s22
    %p31 = scmp.eq.s32.totalorder %s14, 1
    %p32 = por %p30, %p31
    %p33 = scmp.ne.s32.totalorder %s22, %s23
    %p34 = scmp.eq.s32.totalorder %s14, 0
    %p35 = por %p33, %p34
    %p36 = scmp.ne.s32.totalorder %s22, %s23
    %p37 = scmp.eq.s32.totalorder %s15, 1
    %p38 = por %p36, %p37
    %p40 = scmp.ne.s32.totalorder %s23, %s39
    %p41 = scmp.eq.s32.totalorder %s15, 0
    %p42 = por %p40, %p41
    %s44 = sadd.s32 %s43, 1
    %p47 = scmp.eq.s32.totalorder %s9, 1
    %p48 = scmp.ne.s32.totalorder %s43, %s45
    %p49 = scmp.eq.s32.totalorder %s9, 0
    %p50 = por %p48, %p49
    %p51 = scmp.ne.s32.totalorder %s43, %s45
    %p52 = scmp.eq.s32.totalorder %s14, 1
    %p53 = por %p51, %p52
    %p54 = scmp.ne.s32.totalorder %s45, %s46
    %p55 = scmp.eq.s32.totalorder %s14, 0
    %p56 = por %p54, %p55
    %p57 = scmp.ne.s32.totalorder %s45, %s46
    %p58 = scmp.eq.s32.totalorder %s15, 1
    %p59 = por %p57, %p58
    %p61 = scmp.ne.s32.totalorder %s46, %s60
    %p62 = scmp.eq.s32.totalorder %s15, 0
    %p63 = por %p61, %p62
    %s65 = sadd.s32 %s64, 1
    %p68 = scmp.eq.s32.totalorder %s9, 1
    %p69 = scmp.ne.s32.totalorder %s64, %s66
    %p70 = scmp.eq.s32.totalorder %s9, 0
    %p71 = por %p69, %p70
    %p72 = scmp.ne.s32.totalorder %s64, %s66
    %p73 = scmp.eq.s32.totalorder %s14, 1
    %p74 = por %p72, %p73
    %p75 = scmp.ne.s32.totalorder %s66, %s67
    %p76 = scmp.eq.s32.totalorder %s14, 0
    %p77 = por %p75, %p76
    %p78 = scmp.ne.s32.totalorder %s66, %s67
    %p79 = scmp.eq.s32.totalorder %s15, 1
    %p80 = por %p78, %p79
    %p82 = scmp.ne.s32.totalorder %s67, %s81
    %p83 = scmp.eq.s32.totalorder %s15, 0
    %p84 = por %p82, %p83
    %s85 = ssub.s32 %s9, %s16
    %p86 = scmp.eq.s32.totalorder %s85, 0
    %s88 = sadd.s32 %s87, 1
    %s89 = scalar_select %p86, %s87, %s88
    %p92 = pneg %p86
    %p93 = scmp.eq.s32.totalorder %s9, 1
    %p94 = por %p92, %p93
    %p95 = scmp.ne.s32.totalorder %s87, %s90
    %p96 = scmp.eq.s32.totalorder %s9, 0
    %p97 = por %p95, %p96
    %p98 = scmp.ne.s32.totalorder %s87, %s90
    %p99 = scmp.eq.s32.totalorder %s14, 1
    %p100 = por %p98, %p99
    %p101 = scmp.ne.s32.totalorder %s90, %s91
    %p102 = scmp.eq.s32.totalorder %s14, 0
    %p103 = por %p101, %p102
    %p104 = scmp.ne.s32.totalorder %s90, %s91
    %p105 = scmp.eq.s32.totalorder %s15, 1
    %p106 = por %p104, %p105
    %p108 = scmp.ne.s32.totalorder %s91, %s107
    %p109 = scmp.eq.s32.totalorder %s15, 0
    %p110 = por %p108, %p109
    %p111 = scmp.le.s32.totalorder 1, %s9
    %p112 = scmp.lt.s32.totalorder %s9, 3
    %p113 = pnand %p111, %p112
    %p114 = pneg %p113
    // Predicated region
    $region9: #{cnn3d_forward.2} parent=5 // pred_check
      _
    $region10: #{cnn3d_forward.2} parent=5 // pred_check_branch
      %116 = sbr.rel (%p113) target = $region12
    $region11: #{cnn3d_forward.2} parent=5 // pred_region
      %s117 = ssub.s32 %s9, 1
      // Predicated region
      $region13: #{cnn3d_forward.2} parent=11 // pred_check
        %p118 = pneg %p56
      $region14: #{cnn3d_forward.2} parent=11 // pred_check_branch
        %120 = sbr.rel (%p118) target = $region16
      $region15: #{cnn3d_forward.2} parent=11 // pred_region
        _
      $region16: #{cnn3d_forward.2} parent=11 // pred_fallthru
        _
      // Predicated region
      $region17: #{cnn3d_forward.2} parent=11 // pred_check
        %p121 = pneg %p77
      $region18: #{cnn3d_forward.2} parent=11 // pred_check_branch
        %123 = sbr.rel (%p121) target = $region20
      $region19: #{cnn3d_forward.2} parent=11 // pred_region
        _
      $region20: #{cnn3d_forward.2} parent=11 // pred_fallthru
        _
    $region12: #{cnn3d_forward.2} parent=5 // pred_fallthru
      _
    %p124 = scmp.lt.s32.totalorder %s9, 2
    // Predicated region
    $region21: #{cnn3d_forward.2} parent=5 // pred_check
      %p125 = pneg %p124
    $region22: #{cnn3d_forward.2} parent=5 // pred_check_branch
      %127 = sbr.rel (%p125) target = $region24
    $region23: #{cnn3d_forward.2} parent=5 // pred_region
      // Predicated region
      $region25: #{cnn3d_forward.2} parent=23 // pred_check
        %p128 = pneg %p29
      $region26: #{cnn3d_forward.2} parent=23 // pred_check_branch
        %130 = sbr.rel (%p128) target = $region28
      $region27: #{cnn3d_forward.2} parent=23 // pred_region
        %p131 = scmp.lt.s32.totalorder %s9, 1
        %s132 = scalar_select %p131, %s9, 1
        %s133 = smul.addr %s132, 384
        %s134 = smul.addr %s133, 8
        %s135 = scalar_lea.vmem %s0, %s134
      $region28: #{cnn3d_forward.2} parent=23 // pred_fallthru
        _
    $region24: #{cnn3d_forward.2} parent=5 // pred_fallthru
      _
    %p136 = scmp.le.s32.totalorder 1, %s9
    %p137 = scmp.lt.s32.totalorder %s9, 3
    %p138 = pnand %p136, %p137
    %p139 = pneg %p138
    // Predicated region
    $region29: #{cnn3d_forward.2} parent=5 // pred_check
      _
    $region30: #{cnn3d_forward.2} parent=5 // pred_check_branch
      %141 = sbr.rel (%p138) target = $region32
    $region31: #{cnn3d_forward.2} parent=5 // pred_region
      %s142 = ssub.s32 %s9, 1
      %p143 = scmp.lt.s32.totalorder %s14, 1
      %s144 = scalar_select %p143, %s14, 1
      %s145 = smul.addr %s144, 384
      %s146 = smul.addr %s145, 8
      %s147 = scalar_lea.vmem %s0, %s146
      %p148 = pneg %p35
      %p149 = pneg %p32
      %p150 = pneg %p56
      %p151 = pneg %p53
      %p152 = pneg %p77
      %p153 = pneg %p74
      %p154 = pneg %p103
      %p155 = pneg %p100
      %p156 = scmp.lt.s32.totalorder %s14, 1
      %s157 = scalar_select %p156, %s14, 1
      %s158 = smul.addr %s157, 32
      %s159 = smul.addr %s158, 8
      %s160 = scalar_lea.vmem %s3, %s159
      %p161 = scmp.lt.s32.totalorder %s14, 1
      %s162 = scalar_select %p161, %s14, 1
      %s163 = smul.addr %s162, 384
      %s164 = smul.addr %s163, 8
      %s165 = scalar_lea.vmem %s0, %s164
      %p166 = scmp.lt.s32.totalorder %s14, 1
      %s167 = scalar_select %p166, %s14, 1
      %s168 = smul.addr %s167, 32
      %s169 = smul.addr %s168, 8
      %s170 = scalar_lea.vmem %s3, %s169
      %v171 = vld [vmem:[%s1] sm:$0xff]
      %v172 = vld [vmem:[%s1 + $0x8] sm:$0xff]
      %v173 = vld [vmem:[%s1 + $0x10] sm:$0xff]
      %v174 = vld [vmem:[%s1 + $0x18] sm:$0xff]
      %v175 = vld [vmem:[%s165] sm:$0xff]
      %v176 = vld [vmem:[%s165 + $0x8] sm:$0xff]
      %v177 = vld [vmem:[%s165 + $0x10] sm:$0xff]
      %v178 = vld [vmem:[%s165 + $0x18] sm:$0xff]
      %v179 = vld [vmem:[%s165 + $0x20] sm:$0xff]
      %v180 = vld [vmem:[%s165 + $0x28] sm:$0xff]
      %v181 = vld [vmem:[%s165 + $0x30] sm:$0xff]
      %v182 = vld [vmem:[%s165 + $0x38] sm:$0xff]
      %v183 = vld [vmem:[%s165 + $0x40] sm:$0xff]
      %v184 = vld [vmem:[%s165 + $0x48] sm:$0xff]
      %v185 = vld [vmem:[%s165 + $0x50] sm:$0xff]
      %v186 = vld [vmem:[%s165 + $0x58] sm:$0xff]
      %v187 = vld [vmem:[%s165 + $0x60] sm:$0xff]
      %v188 = vld [vmem:[%s165 + $0x68] sm:$0xff]
      %v189 = vld [vmem:[%s165 + $0x70] sm:$0xff]
      %v190 = vld [vmem:[%s165 + $0x78] sm:$0xff]
      %v191 = vld [vmem:[%s165 + $0x80] sm:$0xff]
      %v192 = vld [vmem:[%s165 + $0x88] sm:$0xff]
      %v193 = vld [vmem:[%s165 + $0x90] sm:$0xff]
      %v194 = vld [vmem:[%s165 + $0x98] sm:$0xff]
      %v195 = vld [vmem:[%s165 + $0xa0] sm:$0xff]
      %v196 = vld [vmem:[%s165 + $0xa8] sm:$0xff]
      %v197 = vld [vmem:[%s165 + $0xb0] sm:$0xff]
      %v198 = vld [vmem:[%s165 + $0xb8] sm:$0xff]
      %v199 = vld [vmem:[%s165 + $0xc0] sm:$0xff]
      %v200 = vld [vmem:[%s165 + $0xc8] sm:$0xff]
      %v201 = vld [vmem:[%s165 + $0xd0] sm:$0xff]
      %v202 = vld [vmem:[%s165 + $0xd8] sm:$0xff]
      %v203 = vld [vmem:[%s165 + $0xe0] sm:$0xff]
      %v204 = vld [vmem:[%s165 + $0xe8] sm:$0xff]
      %v205 = vld [vmem:[%s165 + $0xf0] sm:$0xff]
      %v206 = vld [vmem:[%s165 + $0xf8] sm:$0xff]
      %v207 = vld [vmem:[%s165 + $0x100] sm:$0xff]
      %v208 = vld [vmem:[%s165 + $0x108] sm:$0xff]
      %v209 = vld [vmem:[%s165 + $0x110] sm:$0xff]
      %v210 = vld [vmem:[%s165 + $0x118] sm:$0xff]
      %v211 = vld [vmem:[%s165 + $0x120] sm:$0xff]
      %v212 = vld [vmem:[%s165 + $0x128] sm:$0xff]
      %v213 = vld [vmem:[%s165 + $0x130] sm:$0xff]
      %v214 = vld [vmem:[%s165 + $0x138] sm:$0xff]
      %v215 = vld [vmem:[%s165 + $0x140] sm:$0xff]
      %v216 = vld [vmem:[%s165 + $0x148] sm:$0xff]
      %v217 = vld [vmem:[%s165 + $0x150] sm:$0xff]
      %v218 = vld [vmem:[%s165 + $0x158] sm:$0xff]
      %v219 = vld [vmem:[%s165 + $0x160] sm:$0xff]
      %v220 = vld [vmem:[%s165 + $0x168] sm:$0xff]
      %v221 = vld [vmem:[%s165 + $0x170] sm:$0xff]
      %v222 = vld [vmem:[%s165 + $0x178] sm:$0xff]
      %v223 = vld [vmem:[%s165 + $0x180] sm:$0xff]
      %v224 = vld [vmem:[%s165 + $0x188] sm:$0xff]
      %v225 = vld [vmem:[%s165 + $0x190] sm:$0xff]
      %v226 = vld [vmem:[%s165 + $0x198] sm:$0xff]
      %v227 = vld [vmem:[%s165 + $0x1a0] sm:$0xff]
      %v228 = vld [vmem:[%s165 + $0x1a8] sm:$0xff]
      %v229 = vld [vmem:[%s165 + $0x1b0] sm:$0xff]
      %v230 = vld [vmem:[%s165 + $0x1b8] sm:$0xff]
      %v231 = vld [vmem:[%s165 + $0x1c0] sm:$0xff]
      %v232 = vld [vmem:[%s165 + $0x1c8] sm:$0xff]
      %v233 = vld [vmem:[%s165 + $0x1d0] sm:$0xff]
      %v234 = vld [vmem:[%s165 + $0x1d8] sm:$0xff]
      %v235 = vld [vmem:[%s165 + $0x1e0] sm:$0xff]
      %v236 = vld [vmem:[%s165 + $0x1e8] sm:$0xff]
      %v237 = vld [vmem:[%s165 + $0x1f0] sm:$0xff]
      %v238 = vld [vmem:[%s165 + $0x1f8] sm:$0xff]
      %v239 = vld [vmem:[%s165 + $0x200] sm:$0xff]
      %v240 = vld [vmem:[%s165 + $0x208] sm:$0xff]
      %v241 = vld [vmem:[%s165 + $0x210] sm:$0xff]
      %v242 = vld [vmem:[%s165 + $0x218] sm:$0xff]
      %v243 = vld [vmem:[%s165 + $0x220] sm:$0xff]
      %v244 = vld [vmem:[%s165 + $0x228] sm:$0xff]
      %v245 = vld [vmem:[%s165 + $0x230] sm:$0xff]
      %v246 = vld [vmem:[%s165 + $0x238] sm:$0xff]
      %v247 = vld [vmem:[%s165 + $0x240] sm:$0xff]
      %v248 = vld [vmem:[%s165 + $0x248] sm:$0xff]
      %v249 = vld [vmem:[%s165 + $0x250] sm:$0xff]
      %v250 = vld [vmem:[%s165 + $0x258] sm:$0xff]
      %v251 = vld [vmem:[%s165 + $0x260] sm:$0xff]
      %v252 = vld [vmem:[%s165 + $0x268] sm:$0xff]
      %v253 = vld [vmem:[%s165 + $0x270] sm:$0xff]
      %v254 = vld [vmem:[%s165 + $0x278] sm:$0xff]
      %v255 = vld [vmem:[%s165 + $0x280] sm:$0xff]
      %v256 = vld [vmem:[%s165 + $0x288] sm:$0xff]
      %v257 = vld [vmem:[%s165 + $0x290] sm:$0xff]
      %v258 = vld [vmem:[%s165 + $0x298] sm:$0xff]
      %v259 = vld [vmem:[%s165 + $0x2a0] sm:$0xff]
      %v260 = vld [vmem:[%s165 + $0x2a8] sm:$0xff]
      %v261 = vld [vmem:[%s165 + $0x2b0] sm:$0xff]
      %v262 = vld [vmem:[%s165 + $0x2b8] sm:$0xff]
      %v263 = vld [vmem:[%s165 + $0x2c0] sm:$0xff]
      %v264 = vld [vmem:[%s165 + $0x2c8] sm:$0xff]
      %v265 = vld [vmem:[%s165 + $0x2d0] sm:$0xff]
      %v266 = vld [vmem:[%s165 + $0x2d8] sm:$0xff]
      %v267 = vld [vmem:[%s165 + $0x2e0] sm:$0xff]
      %v268 = vld [vmem:[%s165 + $0x2e8] sm:$0xff]
      %v269 = vld [vmem:[%s165 + $0x2f0] sm:$0xff]
      %v270 = vld [vmem:[%s165 + $0x2f8] sm:$0xff]
      %v271 = vld [vmem:[%s165 + $0x300] sm:$0xff]
      %v272 = vld [vmem:[%s165 + $0x308] sm:$0xff]
      %v273 = vld [vmem:[%s165 + $0x310] sm:$0xff]
      %v274 = vld [vmem:[%s165 + $0x318] sm:$0xff]
      %v275 = vld [vmem:[%s165 + $0x320] sm:$0xff]
      %v276 = vld [vmem:[%s165 + $0x328] sm:$0xff]
      %v277 = vld [vmem:[%s165 + $0x330] sm:$0xff]
      %v278 = vld [vmem:[%s165 + $0x338] sm:$0xff]
      %v279 = vld [vmem:[%s165 + $0x340] sm:$0xff]
      %v280 = vld [vmem:[%s165 + $0x348] sm:$0xff]
      %v281 = vld [vmem:[%s165 + $0x350] sm:$0xff]
      %v282 = vld [vmem:[%s165 + $0x358] sm:$0xff]
      %v283 = vld [vmem:[%s165 + $0x360] sm:$0xff]
      %v284 = vld [vmem:[%s165 + $0x368] sm:$0xff]
      %v285 = vld [vmem:[%s165 + $0x370] sm:$0xff]
      %v286 = vld [vmem:[%s165 + $0x378] sm:$0xff]
      %v287 = vld [vmem:[%s165 + $0x380] sm:$0xff]
      %v288 = vld [vmem:[%s165 + $0x388] sm:$0xff]
      %v289 = vld [vmem:[%s165 + $0x390] sm:$0xff]
      %v290 = vld [vmem:[%s165 + $0x398] sm:$0xff]
      %v291 = vld [vmem:[%s165 + $0x3a0] sm:$0xff]
      %v292 = vld [vmem:[%s165 + $0x3a8] sm:$0xff]
      %v293 = vld [vmem:[%s165 + $0x3b0] sm:$0xff]
      %v294 = vld [vmem:[%s165 + $0x3b8] sm:$0xff]
      %v295 = vld [vmem:[%s165 + $0x3c0] sm:$0xff]
      %v296 = vld [vmem:[%s165 + $0x3c8] sm:$0xff]
      %v297 = vld [vmem:[%s165 + $0x3d0] sm:$0xff]
      %v298 = vld [vmem:[%s165 + $0x3d8] sm:$0xff]
      %v299 = vld [vmem:[%s165 + $0x3e0] sm:$0xff]
      %v300 = vld [vmem:[%s165 + $0x3e8] sm:$0xff]
      %v301 = vld [vmem:[%s165 + $0x3f0] sm:$0xff]
      %v302 = vld [vmem:[%s165 + $0x3f8] sm:$0xff]
      %v303 = vld [vmem:[%s165 + $0x400] sm:$0xff]
      %v304 = vld [vmem:[%s165 + $0x408] sm:$0xff]
      %v305 = vld [vmem:[%s165 + $0x410] sm:$0xff]
      %v306 = vld [vmem:[%s165 + $0x418] sm:$0xff]
      %v307 = vld [vmem:[%s165 + $0x420] sm:$0xff]
      %v308 = vld [vmem:[%s165 + $0x428] sm:$0xff]
      %v309 = vld [vmem:[%s165 + $0x430] sm:$0xff]
      %v310 = vld [vmem:[%s165 + $0x438] sm:$0xff]
      %v311 = vld [vmem:[%s165 + $0x440] sm:$0xff]
      %v312 = vld [vmem:[%s165 + $0x448] sm:$0xff]
      %v313 = vld [vmem:[%s165 + $0x450] sm:$0xff]
      %v314 = vld [vmem:[%s165 + $0x458] sm:$0xff]
      %v315 = vld [vmem:[%s165 + $0x460] sm:$0xff]
      %v316 = vld [vmem:[%s165 + $0x468] sm:$0xff]
      %v317 = vld [vmem:[%s165 + $0x470] sm:$0xff]
      %v318 = vld [vmem:[%s165 + $0x478] sm:$0xff]
      %v319 = vld [vmem:[%s165 + $0x480] sm:$0xff]
      %v320 = vld [vmem:[%s165 + $0x488] sm:$0xff]
      %v321 = vld [vmem:[%s165 + $0x490] sm:$0xff]
      %v322 = vld [vmem:[%s165 + $0x498] sm:$0xff]
      %v323 = vld [vmem:[%s165 + $0x4a0] sm:$0xff]
      %v324 = vld [vmem:[%s165 + $0x4a8] sm:$0xff]
      %v325 = vld [vmem:[%s165 + $0x4b0] sm:$0xff]
      %v326 = vld [vmem:[%s165 + $0x4b8] sm:$0xff]
      %v327 = vld [vmem:[%s165 + $0x4c0] sm:$0xff]
      %v328 = vld [vmem:[%s165 + $0x4c8] sm:$0xff]
      %v329 = vld [vmem:[%s165 + $0x4d0] sm:$0xff]
      %v330 = vld [vmem:[%s165 + $0x4d8] sm:$0xff]
      %v331 = vld [vmem:[%s165 + $0x4e0] sm:$0xff]
      %v332 = vld [vmem:[%s165 + $0x4e8] sm:$0xff]
      %v333 = vld [vmem:[%s165 + $0x4f0] sm:$0xff]
      %v334 = vld [vmem:[%s165 + $0x4f8] sm:$0xff]
      %v335 = vld [vmem:[%s165 + $0x500] sm:$0xff]
      %v336 = vld [vmem:[%s165 + $0x508] sm:$0xff]
      %v337 = vld [vmem:[%s165 + $0x510] sm:$0xff]
      %v338 = vld [vmem:[%s165 + $0x518] sm:$0xff]
      %v339 = vld [vmem:[%s165 + $0x520] sm:$0xff]
      %v340 = vld [vmem:[%s165 + $0x528] sm:$0xff]
      %v341 = vld [vmem:[%s165 + $0x530] sm:$0xff]
      %v342 = vld [vmem:[%s165 + $0x538] sm:$0xff]
      %v343 = vld [vmem:[%s165 + $0x540] sm:$0xff]
      %v344 = vld [vmem:[%s165 + $0x548] sm:$0xff]
      %v345 = vld [vmem:[%s165 + $0x550] sm:$0xff]
      %v346 = vld [vmem:[%s165 + $0x558] sm:$0xff]
      %v347 = vld [vmem:[%s165 + $0x560] sm:$0xff]
      %v348 = vld [vmem:[%s165 + $0x568] sm:$0xff]
      %v349 = vld [vmem:[%s165 + $0x570] sm:$0xff]
      %v350 = vld [vmem:[%s165 + $0x578] sm:$0xff]
      %v351 = vld [vmem:[%s165 + $0x580] sm:$0xff]
      %v352 = vld [vmem:[%s165 + $0x588] sm:$0xff]
      %v353 = vld [vmem:[%s165 + $0x590] sm:$0xff]
      %v354 = vld [vmem:[%s165 + $0x598] sm:$0xff]
      %v355 = vld [vmem:[%s165 + $0x5a0] sm:$0xff]
      %v356 = vld [vmem:[%s165 + $0x5a8] sm:$0xff]
      %v357 = vld [vmem:[%s165 + $0x5b0] sm:$0xff]
      %v358 = vld [vmem:[%s165 + $0x5b8] sm:$0xff]
      %v359 = vld [vmem:[%s165 + $0x5c0] sm:$0xff]
      %v360 = vld [vmem:[%s165 + $0x5c8] sm:$0xff]
      %v361 = vld [vmem:[%s165 + $0x5d0] sm:$0xff]
      %v362 = vld [vmem:[%s165 + $0x5d8] sm:$0xff]
      %v363 = vld [vmem:[%s165 + $0x5e0] sm:$0xff]
      %v364 = vld [vmem:[%s165 + $0x5e8] sm:$0xff]
      %v365 = vld [vmem:[%s165 + $0x5f0] sm:$0xff]
      %v366 = vld [vmem:[%s165 + $0x5f8] sm:$0xff]
      %v367 = vld [vmem:[%s165 + $0x600] sm:$0xff]
      %v368 = vld [vmem:[%s165 + $0x608] sm:$0xff]
      %v369 = vld [vmem:[%s165 + $0x610] sm:$0xff]
      %v370 = vld [vmem:[%s165 + $0x618] sm:$0xff]
      %v371 = vld [vmem:[%s165 + $0x620] sm:$0xff]
      %v372 = vld [vmem:[%s165 + $0x628] sm:$0xff]
      %v373 = vld [vmem:[%s165 + $0x630] sm:$0xff]
      %v374 = vld [vmem:[%s165 + $0x638] sm:$0xff]
      %v375 = vld [vmem:[%s165 + $0x640] sm:$0xff]
      %v376 = vld [vmem:[%s165 + $0x648] sm:$0xff]
      %v377 = vld [vmem:[%s165 + $0x650] sm:$0xff]
      %v378 = vld [vmem:[%s165 + $0x658] sm:$0xff]
      %v379 = vld [vmem:[%s165 + $0x660] sm:$0xff]
      %v380 = vld [vmem:[%s165 + $0x668] sm:$0xff]
      %v381 = vld [vmem:[%s165 + $0x670] sm:$0xff]
      %v382 = vld [vmem:[%s165 + $0x678] sm:$0xff]
      %v383 = vld [vmem:[%s165 + $0x680] sm:$0xff]
      %v384 = vld [vmem:[%s165 + $0x688] sm:$0xff]
      %v385 = vld [vmem:[%s165 + $0x690] sm:$0xff]
      %v386 = vld [vmem:[%s165 + $0x698] sm:$0xff]
      %v387 = vld [vmem:[%s165 + $0x6a0] sm:$0xff]
      %v388 = vld [vmem:[%s165 + $0x6a8] sm:$0xff]
      %v389 = vld [vmem:[%s165 + $0x6b0] sm:$0xff]
      %v390 = vld [vmem:[%s165 + $0x6b8] sm:$0xff]
      %v391 = vld [vmem:[%s165 + $0x6c0] sm:$0xff]
      %v392 = vld [vmem:[%s165 + $0x6c8] sm:$0xff]
      %v393 = vld [vmem:[%s165 + $0x6d0] sm:$0xff]
      %v394 = vld [vmem:[%s165 + $0x6d8] sm:$0xff]
      %v395 = vld [vmem:[%s165 + $0x6e0] sm:$0xff]
      %v396 = vld [vmem:[%s165 + $0x6e8] sm:$0xff]
      %v397 = vld [vmem:[%s165 + $0x6f0] sm:$0xff]
      %v398 = vld [vmem:[%s165 + $0x6f8] sm:$0xff]
      %v399 = vld [vmem:[%s165 + $0x700] sm:$0xff]
      %v400 = vld [vmem:[%s165 + $0x708] sm:$0xff]
      %v401 = vld [vmem:[%s165 + $0x710] sm:$0xff]
      %v402 = vld [vmem:[%s165 + $0x718] sm:$0xff]
      %v403 = vld [vmem:[%s165 + $0x720] sm:$0xff]
      %v404 = vld [vmem:[%s165 + $0x728] sm:$0xff]
      %v405 = vld [vmem:[%s165 + $0x730] sm:$0xff]
      %v406 = vld [vmem:[%s165 + $0x738] sm:$0xff]
      %v407 = vld [vmem:[%s165 + $0x740] sm:$0xff]
      %v408 = vld [vmem:[%s165 + $0x748] sm:$0xff]
      %v409 = vld [vmem:[%s165 + $0x750] sm:$0xff]
      %v410 = vld [vmem:[%s165 + $0x758] sm:$0xff]
      %v411 = vld [vmem:[%s165 + $0x760] sm:$0xff]
      %v412 = vld [vmem:[%s165 + $0x768] sm:$0xff]
      %v413 = vld [vmem:[%s165 + $0x770] sm:$0xff]
      %v414 = vld [vmem:[%s165 + $0x778] sm:$0xff]
      %v415 = vld [vmem:[%s165 + $0x780] sm:$0xff]
      %v416 = vld [vmem:[%s165 + $0x788] sm:$0xff]
      %v417 = vld [vmem:[%s165 + $0x790] sm:$0xff]
      %v418 = vld [vmem:[%s165 + $0x798] sm:$0xff]
      %v419 = vld [vmem:[%s165 + $0x7a0] sm:$0xff]
      %v420 = vld [vmem:[%s165 + $0x7a8] sm:$0xff]
      %v421 = vld [vmem:[%s165 + $0x7b0] sm:$0xff]
      %v422 = vld [vmem:[%s165 + $0x7b8] sm:$0xff]
      %v423 = vld [vmem:[%s165 + $0x7c0] sm:$0xff]
      %v424 = vld [vmem:[%s165 + $0x7c8] sm:$0xff]
      %v425 = vld [vmem:[%s165 + $0x7d0] sm:$0xff]
      %v426 = vld [vmem:[%s165 + $0x7d8] sm:$0xff]
      %v427 = vld [vmem:[%s165 + $0x7e0] sm:$0xff]
      %v428 = vld [vmem:[%s165 + $0x7e8] sm:$0xff]
      %v429 = vld [vmem:[%s165 + $0x7f0] sm:$0xff]
      %v430 = vld [vmem:[%s165 + $0x7f8] sm:$0xff]
      %v431 = vld [vmem:[%s165 + $0x800] sm:$0xff]
      %v432 = vld [vmem:[%s165 + $0x808] sm:$0xff]
      %v433 = vld [vmem:[%s165 + $0x810] sm:$0xff]
      %v434 = vld [vmem:[%s165 + $0x818] sm:$0xff]
      %v435 = vld [vmem:[%s165 + $0x820] sm:$0xff]
      %v436 = vld [vmem:[%s165 + $0x828] sm:$0xff]
      %v437 = vld [vmem:[%s165 + $0x830] sm:$0xff]
      %v438 = vld [vmem:[%s165 + $0x838] sm:$0xff]
      %v439 = vld [vmem:[%s165 + $0x840] sm:$0xff]
      %v440 = vld [vmem:[%s165 + $0x848] sm:$0xff]
      %v441 = vld [vmem:[%s165 + $0x850] sm:$0xff]
      %v442 = vld [vmem:[%s165 + $0x858] sm:$0xff]
      %v443 = vld [vmem:[%s165 + $0x860] sm:$0xff]
      %v444 = vld [vmem:[%s165 + $0x868] sm:$0xff]
      %v445 = vld [vmem:[%s165 + $0x870] sm:$0xff]
      %v446 = vld [vmem:[%s165 + $0x878] sm:$0xff]
      %v447 = vld [vmem:[%s165 + $0x880] sm:$0xff]
      %v448 = vld [vmem:[%s165 + $0x888] sm:$0xff]
      %v449 = vld [vmem:[%s165 + $0x890] sm:$0xff]
      %v450 = vld [vmem:[%s165 + $0x898] sm:$0xff]
      %v451 = vld [vmem:[%s165 + $0x8a0] sm:$0xff]
      %v452 = vld [vmem:[%s165 + $0x8a8] sm:$0xff]
      %v453 = vld [vmem:[%s165 + $0x8b0] sm:$0xff]
      %v454 = vld [vmem:[%s165 + $0x8b8] sm:$0xff]
      %v455 = vld [vmem:[%s165 + $0x8c0] sm:$0xff]
      %v456 = vld [vmem:[%s165 + $0x8c8] sm:$0xff]
      %v457 = vld [vmem:[%s165 + $0x8d0] sm:$0xff]
      %v458 = vld [vmem:[%s165 + $0x8d8] sm:$0xff]
      %v459 = vld [vmem:[%s165 + $0x8e0] sm:$0xff]
      %v460 = vld [vmem:[%s165 + $0x8e8] sm:$0xff]
      %v461 = vld [vmem:[%s165 + $0x8f0] sm:$0xff]
      %v462 = vld [vmem:[%s165 + $0x8f8] sm:$0xff]
      %v463 = vld [vmem:[%s165 + $0x900] sm:$0xff]
      %v464 = vld [vmem:[%s165 + $0x908] sm:$0xff]
      %v465 = vld [vmem:[%s165 + $0x910] sm:$0xff]
      %v466 = vld [vmem:[%s165 + $0x918] sm:$0xff]
      %v467 = vld [vmem:[%s165 + $0x920] sm:$0xff]
      %v468 = vld [vmem:[%s165 + $0x928] sm:$0xff]
      %v469 = vld [vmem:[%s165 + $0x930] sm:$0xff]
      %v470 = vld [vmem:[%s165 + $0x938] sm:$0xff]
      %v471 = vld [vmem:[%s165 + $0x940] sm:$0xff]
      %v472 = vld [vmem:[%s165 + $0x948] sm:$0xff]
      %v473 = vld [vmem:[%s165 + $0x950] sm:$0xff]
      %v474 = vld [vmem:[%s165 + $0x958] sm:$0xff]
      %v475 = vld [vmem:[%s165 + $0x960] sm:$0xff]
      %v476 = vld [vmem:[%s165 + $0x968] sm:$0xff]
      %v477 = vld [vmem:[%s165 + $0x970] sm:$0xff]
      %v478 = vld [vmem:[%s165 + $0x978] sm:$0xff]
      %v479 = vld [vmem:[%s165 + $0x980] sm:$0xff]
      %v480 = vld [vmem:[%s165 + $0x988] sm:$0xff]
      %v481 = vld [vmem:[%s165 + $0x990] sm:$0xff]
      %v482 = vld [vmem:[%s165 + $0x998] sm:$0xff]
      %v483 = vld [vmem:[%s165 + $0x9a0] sm:$0xff]
      %v484 = vld [vmem:[%s165 + $0x9a8] sm:$0xff]
      %v485 = vld [vmem:[%s165 + $0x9b0] sm:$0xff]
      %v486 = vld [vmem:[%s165 + $0x9b8] sm:$0xff]
      %v487 = vld [vmem:[%s165 + $0x9c0] sm:$0xff]
      %v488 = vld [vmem:[%s165 + $0x9c8] sm:$0xff]
      %v489 = vld [vmem:[%s165 + $0x9d0] sm:$0xff]
      %v490 = vld [vmem:[%s165 + $0x9d8] sm:$0xff]
      %v491 = vld [vmem:[%s165 + $0x9e0] sm:$0xff]
      %v492 = vld [vmem:[%s165 + $0x9e8] sm:$0xff]
      %v493 = vld [vmem:[%s165 + $0x9f0] sm:$0xff]
      %v494 = vld [vmem:[%s165 + $0x9f8] sm:$0xff]
      %v495 = vld [vmem:[%s165 + $0xa00] sm:$0xff]
      %v496 = vld [vmem:[%s165 + $0xa08] sm:$0xff]
      %v497 = vld [vmem:[%s165 + $0xa10] sm:$0xff]
      %v498 = vld [vmem:[%s165 + $0xa18] sm:$0xff]
      %v499 = vld [vmem:[%s165 + $0xa20] sm:$0xff]
      %v500 = vld [vmem:[%s165 + $0xa28] sm:$0xff]
      %v501 = vld [vmem:[%s165 + $0xa30] sm:$0xff]
      %v502 = vld [vmem:[%s165 + $0xa38] sm:$0xff]
      %v503 = vld [vmem:[%s165 + $0xa40] sm:$0xff]
      %v504 = vld [vmem:[%s165 + $0xa48] sm:$0xff]
      %v505 = vld [vmem:[%s165 + $0xa50] sm:$0xff]
      %v506 = vld [vmem:[%s165 + $0xa58] sm:$0xff]
      %v507 = vld [vmem:[%s165 + $0xa60] sm:$0xff]
      %v508 = vld [vmem:[%s165 + $0xa68] sm:$0xff]
      %v509 = vld [vmem:[%s165 + $0xa70] sm:$0xff]
      %v510 = vld [vmem:[%s165 + $0xa78] sm:$0xff]
      %v511 = vld [vmem:[%s165 + $0xa80] sm:$0xff]
      %v512 = vld [vmem:[%s165 + $0xa88] sm:$0xff]
      %v513 = vld [vmem:[%s165 + $0xa90] sm:$0xff]
      %v514 = vld [vmem:[%s165 + $0xa98] sm:$0xff]
      %v515 = vld [vmem:[%s165 + $0xaa0] sm:$0xff]
      %v516 = vld [vmem:[%s165 + $0xaa8] sm:$0xff]
      %v517 = vld [vmem:[%s165 + $0xab0] sm:$0xff]
      %v518 = vld [vmem:[%s165 + $0xab8] sm:$0xff]
      %v519 = vld [vmem:[%s165 + $0xac0] sm:$0xff]
      %v520 = vld [vmem:[%s165 + $0xac8] sm:$0xff]
      %v521 = vld [vmem:[%s165 + $0xad0] sm:$0xff]
      %v522 = vld [vmem:[%s165 + $0xad8] sm:$0xff]
      %v523 = vld [vmem:[%s165 + $0xae0] sm:$0xff]
      %v524 = vld [vmem:[%s165 + $0xae8] sm:$0xff]
      %v525 = vld [vmem:[%s165 + $0xaf0] sm:$0xff]
      %v526 = vld [vmem:[%s165 + $0xaf8] sm:$0xff]
      %v527 = vld [vmem:[%s165 + $0xb00] sm:$0xff]
      %v528 = vld [vmem:[%s165 + $0xb08] sm:$0xff]
      %v529 = vld [vmem:[%s165 + $0xb10] sm:$0xff]
      %v530 = vld [vmem:[%s165 + $0xb18] sm:$0xff]
      %v531 = vld [vmem:[%s165 + $0xb20] sm:$0xff]
      %v532 = vld [vmem:[%s165 + $0xb28] sm:$0xff]
      %v533 = vld [vmem:[%s165 + $0xb30] sm:$0xff]
      %v534 = vld [vmem:[%s165 + $0xb38] sm:$0xff]
      %v535 = vld [vmem:[%s165 + $0xb40] sm:$0xff]
      %v536 = vld [vmem:[%s165 + $0xb48] sm:$0xff]
      %v537 = vld [vmem:[%s165 + $0xb50] sm:$0xff]
      %v538 = vld [vmem:[%s165 + $0xb58] sm:$0xff]
      %v539 = vld [vmem:[%s165 + $0xb60] sm:$0xff]
      %v540 = vld [vmem:[%s165 + $0xb68] sm:$0xff]
      %v541 = vld [vmem:[%s165 + $0xb70] sm:$0xff]
      %v542 = vld [vmem:[%s165 + $0xb78] sm:$0xff]
      %v543 = vld [vmem:[%s165 + $0xb80] sm:$0xff]
      %v544 = vld [vmem:[%s165 + $0xb88] sm:$0xff]
      %v545 = vld [vmem:[%s165 + $0xb90] sm:$0xff]
      %v546 = vld [vmem:[%s165 + $0xb98] sm:$0xff]
      %v547 = vld [vmem:[%s165 + $0xba0] sm:$0xff]
      %v548 = vld [vmem:[%s165 + $0xba8] sm:$0xff]
      %v549 = vld [vmem:[%s165 + $0xbb0] sm:$0xff]
      %v550 = vld [vmem:[%s165 + $0xbb8] sm:$0xff]
      %v551 = vld [vmem:[%s165 + $0xbc0] sm:$0xff]
      %v552 = vld [vmem:[%s165 + $0xbc8] sm:$0xff]
      %v553 = vld [vmem:[%s165 + $0xbd0] sm:$0xff]
      %v554 = vld [vmem:[%s165 + $0xbd8] sm:$0xff]
      %v555 = vld [vmem:[%s165 + $0xbe0] sm:$0xff]
      %v556 = vld [vmem:[%s165 + $0xbe8] sm:$0xff]
      %v557 = vld [vmem:[%s165 + $0xbf0] sm:$0xff]
      %v558 = vld [vmem:[%s165 + $0xbf8] sm:$0xff]
      %v559 = vld [vmem:[%s2] sm:$0xff]
      %v560 = vld [vmem:[%s2 + $0x8] sm:$0xff]
      %562 = vset.pattern.permute.xlu0 0
      %563 = vperm.xlu0 %562, %v559
      %v564 = vpop.permute.xlu0 %563
      %567 = vset.pattern.permute.xlu0 0
      %568 = vperm.xlu0 %567, %v560
      %v569 = vpop.permute.xlu0 %568
      %vm571 = vcmask 523264
      %v573 = vsel %vm571, %v172, 0
      %v576 = vsel %vm571, %v174, 0
      %578 = vmatprep.subr.mxu0 %v176
      %579 = vmatpush1.msra.mxu0 %v175
      %580 = vmatprep.subr.mxu0 %v192
      %581 = vmatpush1.msra.mxu0 %v191
      %582 = vmatprep.subr.mxu0 %v208
      %583 = vmatpush1.msra.mxu0 %v207
      %584 = vmatprep.subr.mxu0 %v224
      %585 = vmatpush1.msra.mxu0 %v223
      %586 = vmatprep.subr.mxu0 %v240
      %587 = vmatpush1.msra.mxu0 %v239
      %588 = vmatprep.subr.mxu0 %v256
      %589 = vmatpush1.msra.mxu0 %v255
      %590 = vmatprep.subr.mxu0 %v272
      %591 = vmatpush1.msra.mxu0 %v271
      %592 = vmatprep.subr.mxu0 %v288
      %593 = vmatpush1.msra.mxu0 %v287
      %594 = vmatprep.subr.mxu0 %v304
      %595 = vmatpush1.msra.mxu0 %v303
      %596 = vmatprep.subr.mxu0 %v320
      %597 = vmatpush1.msra.mxu0 %v319
      %598 = vmatprep.subr.mxu0 %v336
      %599 = vmatpush1.msra.mxu0 %v335
      %600 = vmatprep.subr.mxu0 %v352
      %601 = vmatpush1.msra.mxu0 %v351
      %602 = vmatprep.subr.mxu0 %v368
      %603 = vmatpush1.msra.mxu0 %v367
      %604 = vmatprep.subr.mxu0 %v384
      %605 = vmatpush1.msra.mxu0 %v383
      %606 = vmatprep.subr.mxu0 %v400
      %607 = vmatpush1.msra.mxu0 %v399
      %608 = vmatprep.subr.mxu0 %v416
      %609 = vmatpush1.msra.mxu0 %v415
      %610 = vmatprep.subr.mxu0 %v432
      %611 = vmatpush1.msra.mxu0 %v431
      %612 = vmatprep.subr.mxu0 %v448
      %613 = vmatpush1.msra.mxu0 %v447
      %614 = vmatprep.subr.mxu0 %v464
      %615 = vmatpush1.msra.mxu0 %v463
      %616 = vmatprep.subr.mxu0 %v480
      %617 = vmatpush1.msra.mxu0 %v479
      %618 = vmatprep.subr.mxu0 %v496
      %619 = vmatpush1.msra.mxu0 %v495
      %620 = vmatprep.subr.mxu0 %v512
      %621 = vmatpush1.msra.mxu0 %v511
      %622 = vmatprep.subr.mxu0 %v528
      %623 = vmatpush1.msra.mxu0 %v527
      %624 = vmatprep.subr.mxu0 %v544
      %625 = vmatpush1.msra.mxu0 %v543
      %626 = vmatprep.subr.mxu0 0.0
      %627 = vmatpush1.msra.mxu0 0.0
      %628 = vmatprep.subr.mxu0 0.0
      %629 = vmatpush1.msra.mxu0 0.0
      %630 = vmatprep.subr.mxu0 0.0
      %631 = vmatpush1.msra.mxu0 0.0
      %632 = vmatprep.subr.mxu0 0.0
      %633 = vmatpush1.msra.mxu0 0.0
      %634 = vmatprep.subr.mxu0 0.0
      %635 = vmatpush1.msra.mxu0 0.0
      %636 = vmatprep.subr.mxu0 0.0
      %637 = vmatpush1.msra.mxu0 0.0
      %638 = vmatprep.subr.mxu0 0.0
      %639 = vmatpush1.msra.mxu0 0.0
      %640 = vmatprep.subr.mxu0 0.0
      %641 = vmatpush1.msra.mxu0 0.0
      %642 = vmatprep.mubr.f32.mxu0 %v573
      %643 = vmatmul.mubr.f32.gmra.mrb[0].mxu0 %v171
      %v644 = vpop.f32.mrb[0].mxu0
      %v645 = vadd.f32 %v564, %v644
      %v646 = vpop.f32.mrb[0].mxu0
      %v647 = vadd.f32 %v564, %v646
      %648 = vmatprep.mubr.f32.mxu0 %v576
      %649 = vmatmul.mubr.f32.gmra.mrb[0].mxu0 %v173
      %v650 = vpop.f32.mrb[0].mxu0
      %v651 = vadd.f32 %v569, %v650
      %v652 = vpop.f32.mrb[0].mxu0
      %v653 = vadd.f32 %v569, %v652
      %654 = vdwg.mxu0
      %655 = vmatprep.subr.mxu0 %v178
      %656 = vmatpush1.msra.mxu0 %v177
      %657 = vmatprep.subr.mxu0 %v194
      %658 = vmatpush1.msra.mxu0 %v193
      %659 = vmatprep.subr.mxu0 %v210
      %660 = vmatpush1.msra.mxu0 %v209
      %661 = vmatprep.subr.mxu0 %v226
      %662 = vmatpush1.msra.mxu0 %v225
      %663 = vmatprep.subr.mxu0 %v242
      %664 = vmatpush1.msra.mxu0 %v241
      %665 = vmatprep.subr.mxu0 %v258
      %666 = vmatpush1.msra.mxu0 %v257
      %667 = vmatprep.subr.mxu0 %v274
      %668 = vmatpush1.msra.mxu0 %v273
      %669 = vmatprep.subr.mxu0 %v290
      %670 = vmatpush1.msra.mxu0 %v289
      %671 = vmatprep.subr.mxu0 %v306
      %672 = vmatpush1.msra.mxu0 %v305
      %673 = vmatprep.subr.mxu0 %v322
      %674 = vmatpush1.msra.mxu0 %v321
      %675 = vmatprep.subr.mxu0 %v338
      %676 = vmatpush1.msra.mxu0 %v337
      %677 = vmatprep.subr.mxu0 %v354
      %678 = vmatpush1.msra.mxu0 %v353
      %679 = vmatprep.subr.mxu0 %v370
      %680 = vmatpush1.msra.mxu0 %v369
      %681 = vmatprep.subr.mxu0 %v386
      %682 = vmatpush1.msra.mxu0 %v385
      %683 = vmatprep.subr.mxu0 %v402
      %684 = vmatpush1.msra.mxu0 %v401
      %685 = vmatprep.subr.mxu0 %v418
      %686 = vmatpush1.msra.mxu0 %v417
      %687 = vmatprep.subr.mxu0 %v434
      %688 = vmatpush1.msra.mxu0 %v433
      %689 = vmatprep.subr.mxu0 %v450
      %690 = vmatpush1.msra.mxu0 %v449
      %691 = vmatprep.subr.mxu0 %v466
      %692 = vmatpush1.msra.mxu0 %v465
      %693 = vmatprep.subr.mxu0 %v482
      %694 = vmatpush1.msra.mxu0 %v481
      %695 = vmatprep.subr.mxu0 %v498
      %696 = vmatpush1.msra.mxu0 %v497
      %697 = vmatprep.subr.mxu0 %v514
      %698 = vmatpush1.msra.mxu0 %v513
      %699 = vmatprep.subr.mxu0 %v530
      %700 = vmatpush1.msra.mxu0 %v529
      %701 = vmatprep.subr.mxu0 %v546
      %702 = vmatpush1.msra.mxu0 %v545
      %703 = vmatprep.subr.mxu0 0.0
      %704 = vmatpush1.msra.mxu0 0.0
      %705 = vmatprep.subr.mxu0 0.0
      %706 = vmatpush1.msra.mxu0 0.0
      %707 = vmatprep.subr.mxu0 0.0
      %708 = vmatpush1.msra.mxu0 0.0
      %709 = vmatprep.subr.mxu0 0.0
      %710 = vmatpush1.msra.mxu0 0.0
      %711 = vmatprep.subr.mxu0 0.0
      %712 = vmatpush1.msra.mxu0 0.0
      %713 = vmatprep.subr.mxu0 0.0
      %714 = vmatpush1.msra.mxu0 0.0
      %715 = vmatprep.subr.mxu0 0.0
      %716 = vmatpush1.msra.mxu0 0.0
      %717 = vmatprep.subr.mxu0 0.0
      %718 = vmatpush1.msra.mxu0 0.0
      %719 = vmatprep.mubr.f32.mxu0 %v573
      %720 = vmatmul.mubr.f32.gmra.mrb[0].mxu0 %v171
      %v721 = vpop.f32.mrb[0].mxu0
      %v722 = vadd.f32 %v564, %v721
      %v723 = vpop.f32.mrb[0].mxu0
      %v724 = vadd.f32 %v564, %v723
      %725 = vmatprep.mubr.f32.mxu0 %v576
      %726 = vmatmul.mubr.f32.gmra.mrb[0].mxu0 %v173
      %v727 = vpop.f32.mrb[0].mxu0
      %v728 = vadd.f32 %v569, %v727
      %v729 = vpop.f32.mrb[0].mxu0
      %v730 = vadd.f32 %v569, %v729
      %731 = vdwg.mxu0
      %732 = vmatprep.subr.mxu0 %v180
      %733 = vmatpush1.msra.mxu0 %v179
      %734 = vmatprep.subr.mxu0 %v196
      %735 = vmatpush1.msra.mxu0 %v195
      %736 = vmatprep.subr.mxu0 %v212
      %737 = vmatpush1.msra.mxu0 %v211
      %738 = vmatprep.subr.mxu0 %v228
      %739 = vmatpush1.msra.mxu0 %v227
      %740 = vmatprep.subr.mxu0 %v244
      %741 = vmatpush1.msra.mxu0 %v243
      %742 = vmatprep.subr.mxu0 %v260
      %743 = vmatpush1.msra.mxu0 %v259
      %744 = vmatprep.subr.mxu0 %v276
      %745 = vmatpush1.msra.mxu0 %v275
      %746 = vmatprep.subr.mxu0 %v292
      %747 = vmatpush1.msra.mxu0 %v291
      %748 = vmatprep.subr.mxu0 %v308
      %749 = vmatpush1.msra.mxu0 %v307
      %750 = vmatprep.subr.mxu0 %v324
      %751 = vmatpush1.msra.mxu0 %v323
      %752 = vmatprep.subr.mxu0 %v340
      %753 = vmatpush1.msra.mxu0 %v339
      %754 = vmatprep.subr.mxu0 %v356
      %755 = vmatpush1.msra.mxu0 %v355
      %756 = vmatprep.subr.mxu0 %v372
      %757 = vmatpush1.msra.mxu0 %v371
      %758 = vmatprep.subr.mxu0 %v388
      %759 = vmatpush1.msra.mxu0 %v387
      %760 = vmatprep.subr.mxu0 %v404
      %761 = vmatpush1.msra.mxu0 %v403
      %762 = vmatprep.subr.mxu0 %v420
      %763 = vmatpush1.msra.mxu0 %v419
      %764 = vmatprep.subr.mxu0 %v436
      %765 = vmatpush1.msra.mxu0 %v435
      %766 = vmatprep.subr.mxu0 %v452
      %767 = vmatpush1.msra.mxu0 %v451
      %768 = vmatprep.subr.mxu0 %v468
      %769 = vmatpush1.msra.mxu0 %v467
      %770 = vmatprep.subr.mxu0 %v484
      %771 = vmatpush1.msra.mxu0 %v483
      %772 = vmatprep.subr.mxu0 %v500
      %773 = vmatpush1.msra.mxu0 %v499
      %774 = vmatprep.subr.mxu0 %v516
      %775 = vmatpush1.msra.mxu0 %v515
      %776 = vmatprep.subr.mxu0 %v532
      %777 = vmatpush1.msra.mxu0 %v531
      %778 = vmatprep.subr.mxu0 %v548
      %779 = vmatpush1.msra.mxu0 %v547
      %780 = vmatprep.subr.mxu0 0.0
      %781 = vmatpush1.msra.mxu0 0.0
      %782 = vmatprep.subr.mxu0 0.0
      %783 = vmatpush1.msra.mxu0 0.0
      %784 = vmatprep.subr.mxu0 0.0
      %785 = vmatpush1.msra.mxu0 0.0
      %786 = vmatprep.subr.mxu0 0.0
      %787 = vmatpush1.msra.mxu0 0.0
      %788 = vmatprep.subr.mxu0 0.0
      %789 = vmatpush1.msra.mxu0 0.0
      %790 = vmatprep.subr.mxu0 0.0
      %791 = vmatpush1.msra.mxu0 0.0
      %792 = vmatprep.subr.mxu0 0.0
      %793 = vmatpush1.msra.mxu0 0.0
      %794 = vmatprep.subr.mxu0 0.0
      %795 = vmatpush1.msra.mxu0 0.0
      %796 = vmatprep.mubr.f32.mxu0 %v573
      %797 = vmatmul.mubr.f32.gmra.mrb[0].mxu0 %v171
      %v798 = vpop.f32.mrb[0].mxu0
      %v799 = vadd.f32 %v564, %v798
      %v800 = vpop.f32.mrb[0].mxu0
      %v801 = vadd.f32 %v564, %v800
      %802 = vmatprep.mubr.f32.mxu0 %v576
      %803 = vmatmul.mubr.f32.gmra.mrb[0].mxu0 %v173
      %v804 = vpop.f32.mrb[0].mxu0
      %v805 = vadd.f32 %v569, %v804
      %v806 = vpop.f32.mrb[0].mxu0
      %v807 = vadd.f32 %v569, %v806
      %808 = vdwg.mxu0
      %809 = vmatprep.subr.mxu0 %v182
      %810 = vmatpush1.msra.mxu0 %v181
      %811 = vmatprep.subr.mxu0 %v198
      %812 = vmatpush1.msra.mxu0 %v197
      %813 = vmatprep.subr.mxu0 %v214
      %814 = vmatpush1.msra.mxu0 %v213
      %815 = vmatprep.subr.mxu0 %v230
      %816 = vmatpush1.msra.mxu0 %v229
      %817 = vmatprep.subr.mxu0 %v246
      %818 = vmatpush1.msra.mxu0 %v245
      %819 = vmatprep.subr.mxu0 %v262
      %820 = vmatpush1.msra.mxu0 %v261
      %821 = vmatprep.subr.mxu0 %v278
      %822 = vmatpush1.msra.mxu0 %v277
      %823 = vmatprep.subr.mxu0 %v294
      %824 = vmatpush1.msra.mxu0 %v293
      %825 = vmatprep.subr.mxu0 %v310
      %826 = vmatpush1.msra.mxu0 %v309
      %827 = vmatprep.subr.mxu0 %v326
      %828 = vmatpush1.msra.mxu0 %v325
      %829 = vmatprep.subr.mxu0 %v342
      %830 = vmatpush1.msra.mxu0 %v341
      %831 = vmatprep.subr.mxu0 %v358
      %832 = vmatpush1.msra.mxu0 %v357
      %833 = vmatprep.subr.mxu0 %v374
      %834 = vmatpush1.msra.mxu0 %v373
      %835 = vmatprep.subr.mxu0 %v390
      %836 = vmatpush1.msra.mxu0 %v389
      %837 = vmatprep.subr.mxu0 %v406
      %838 = vmatpush1.msra.mxu0 %v405
      %839 = vmatprep.subr.mxu0 %v422
      %840 = vmatpush1.msra.mxu0 %v421
      %841 = vmatprep.subr.mxu0 %v438
      %842 = vmatpush1.msra.mxu0 %v437
      %843 = vmatprep.subr.mxu0 %v454
      %844 = vmatpush1.msra.mxu0 %v453
      %845 = vmatprep.subr.mxu0 %v470
      %846 = vmatpush1.msra.mxu0 %v469
      %847 = vmatprep.subr.mxu0 %v486
      %848 = vmatpush1.msra.mxu0 %v485
      %849 = vmatprep.subr.mxu0 %v502
      %850 = vmatpush1.msra.mxu0 %v501
      %851 = vmatprep.subr.mxu0 %v518
      %852 = vmatpush1.msra.mxu0 %v517
      %853 = vmatprep.subr.mxu0 %v534
      %854 = vmatpush1.msra.mxu0 %v533
      %855 = vmatprep.subr.mxu0 %v550
      %856 = vmatpush1.msra.mxu0 %v549
      %857 = vmatprep.subr.mxu0 0.0
      %858 = vmatpush1.msra.mxu0 0.0
      %859 = vmatprep.subr.mxu0 0.0
      %860 = vmatpush1.msra.mxu0 0.0
      %861 = vmatprep.subr.mxu0 0.0
      %862 = vmatpush1.msra.mxu0 0.0
      %863 = vmatprep.subr.mxu0 0.0
      %864 = vmatpush1.msra.mxu0 0.0
      %865 = vmatprep.subr.mxu0 0.0
      %866 = vmatpush1.msra.mxu0 0.0
      %867 = vmatprep.subr.mxu0 0.0
      %868 = vmatpush1.msra.mxu0 0.0
      %869 = vmatprep.subr.mxu0 0.0
      %870 = vmatpush1.msra.mxu0 0.0
      %871 = vmatprep.subr.mxu0 0.0
      %872 = vmatpush1.msra.mxu0 0.0
      %873 = vmatprep.mubr.f32.mxu0 %v573
      %874 = vmatmul.mubr.f32.gmra.mrb[0].mxu0 %v171
      %v875 = vpop.f32.mrb[0].mxu0
      %v876 = vadd.f32 %v564, %v875
      %v877 = vpop.f32.mrb[0].mxu0
      %v878 = vadd.f32 %v564, %v877
      %879 = vmatprep.mubr.f32.mxu0 %v576
      %880 = vmatmul.mubr.f32.gmra.mrb[0].mxu0 %v173
      %v881 = vpop.f32.mrb[0].mxu0
      %v882 = vadd.f32 %v569, %v881
      %v883 = vpop.f32.mrb[0].mxu0
      %v884 = vadd.f32 %v569, %v883
      %885 = vdwg.mxu0
      %886 = vmatprep.subr.mxu0 %v184
      %887 = vmatpush1.msra.mxu0 %v183
      %888 = vmatprep.subr.mxu0 %v200
      %889 = vmatpush1.msra.mxu0 %v199
      %890 = vmatprep.subr.mxu0 %v216
      %891 = vmatpush1.msra.mxu0 %v215
      %892 = vmatprep.subr.mxu0 %v232
      %893 = vmatpush1.msra.mxu0 %v231
      %894 = vmatprep.subr.mxu0 %v248
      %895 = vmatpush1.msra.mxu0 %v247
      %896 = vmatprep.subr.mxu0 %v264
      %897 = vmatpush1.msra.mxu0 %v263
      %898 = vmatprep.subr.mxu0 %v280
      %899 = vmatpush1.msra.mxu0 %v279
      %900 = vmatprep.subr.mxu0 %v296
      %901 = vmatpush1.msra.mxu0 %v295
      %902 = vmatprep.subr.mxu0 %v312
      %903 = vmatpush1.msra.mxu0 %v311
      %904 = vmatprep.subr.mxu0 %v328
      %905 = vmatpush1.msra.mxu0 %v327
      %906 = vmatprep.subr.mxu0 %v344
      %907 = vmatpush1.msra.mxu0 %v343
      %908 = vmatprep.subr.mxu0 %v360
      %909 = vmatpush1.msra.mxu0 %v359
      %910 = vmatprep.subr.mxu0 %v376
      %911 = vmatpush1.msra.mxu0 %v375
      %912 = vmatprep.subr.mxu0 %v392
      %913 = vmatpush1.msra.mxu0 %v391
      %914 = vmatprep.subr.mxu0 %v408
      %915 = vmatpush1.msra.mxu0 %v407
      %916 = vmatprep.subr.mxu0 %v424
      %917 = vmatpush1.msra.mxu0 %v423
      %918 = vmatprep.subr.mxu0 %v440
      %919 = vmatpush1.msra.mxu0 %v439
      %920 = vmatprep.subr.mxu0 %v456
      %921 = vmatpush1.msra.mxu0 %v455
      %922 = vmatprep.subr.mxu0 %v472
      %923 = vmatpush1.msra.mxu0 %v471
      %924 = vmatprep.subr.mxu0 %v488
      %925 = vmatpush1.msra.mxu0 %v487
      %926 = vmatprep.subr.mxu0 %v504
      %927 = vmatpush1.msra.mxu0 %v503
      %928 = vmatprep.subr.mxu0 %v520
      %929 = vmatpush1.msra.mxu0 %v519
      %930 = vmatprep.subr.mxu0 %v536
      %931 = vmatpush1.msra.mxu0 %v535
      %932 = vmatprep.subr.mxu0 %v552
      %933 = vmatpush1.msra.mxu0 %v551
      %934 = vmatprep.subr.mxu0 0.0
      %935 = vmatpush1.msra.mxu0 0.0
      %936 = vmatprep.subr.mxu0 0.0
      %937 = vmatpush1.msra.mxu0 0.0
      %938 = vmatprep.subr.mxu0 0.0
      %939 = vmatpush1.msra.mxu0 0.0
      %940 = vmatprep.subr.mxu0 0.0
      %941 = vmatpush1.msra.mxu0 0.0
      %942 = vmatprep.subr.mxu0 0.0
      %943 = vmatpush1.msra.mxu0 0.0
      %944 = vmatprep.subr.mxu0 0.0
      %945 = vmatpush1.msra.mxu0 0.0
      %946 = vmatprep.subr.mxu0 0.0
      %947 = vmatpush1.msra.mxu0 0.0
      %948 = vmatprep.subr.mxu0 0.0
      %949 = vmatpush1.msra.mxu0 0.0
      %950 = vmatprep.mubr.f32.mxu0 %v573
      %951 = vmatmul.mubr.f32.gmra.mrb[0].mxu0 %v171
      %v952 = vpop.f32.mrb[0].mxu0
      %v953 = vadd.f32 %v564, %v952
      %v954 = vpop.f32.mrb[0].mxu0
      %v955 = vadd.f32 %v564, %v954
      %956 = vmatprep.mubr.f32.mxu0 %v576
      %957 = vmatmul.mubr.f32.gmra.mrb[0].mxu0 %v173
      %v958 = vpop.f32.mrb[0].mxu0
      %v959 = vadd.f32 %v569, %v958
      %v960 = vpop.f32.mrb[0].mxu0
      %v961 = vadd.f32 %v569, %v960
      %962 = vdwg.mxu0
      %963 = vmatprep.subr.mxu0 %v186
      %964 = vmatpush1.msra.mxu0 %v185
      %965 = vmatprep.subr.mxu0 %v202
      %966 = vmatpush1.msra.mxu0 %v201
      %967 = vmatprep.subr.mxu0 %v218
      %968 = vmatpush1.msra.mxu0 %v217
      %969 = vmatprep.subr.mxu0 %v234
      %970 = vmatpush1.msra.mxu0 %v233
      %971 = vmatprep.subr.mxu0 %v250
      %972 = vmatpush1.msra.mxu0 %v249
      %973 = vmatprep.subr.mxu0 %v266
      %974 = vmatpush1.msra.mxu0 %v265
      %975 = vmatprep.subr.mxu0 %v282
      %976 = vmatpush1.msra.mxu0 %v281
      %977 = vmatprep.subr.mxu0 %v298
      %978 = vmatpush1.msra.mxu0 %v297
      %979 = vmatprep.subr.mxu0 %v314
      %980 = vmatpush1.msra.mxu0 %v313
      %981 = vmatprep.subr.mxu0 %v330
      %982 = vmatpush1.msra.mxu0 %v329
      %983 = vmatprep.subr.mxu0 %v346
      %984 = vmatpush1.msra.mxu0 %v345
      %985 = vmatprep.subr.mxu0 %v362
      %986 = vmatpush1.msra.mxu0 %v361
      %987 = vmatprep.subr.mxu0 %v378
      %988 = vmatpush1.msra.mxu0 %v377
      %989 = vmatprep.subr.mxu0 %v394
      %990 = vmatpush1.msra.mxu0 %v393
      %991 = vmatprep.subr.mxu0 %v410
      %992 = vmatpush1.msra.mxu0 %v409
      %993 = vmatprep.subr.mxu0 %v426
      %994 = vmatpush1.msra.mxu0 %v425
      %995 = vmatprep.subr.mxu0 %v442
      %996 = vmatpush1.msra.mxu0 %v441
      %997 = vmatprep.subr.mxu0 %v458
      %998 = vmatpush1.msra.mxu0 %v457
      %999 = vmatprep.subr.mxu0 %v474
      %1000 = vmatpush1.msra.mxu0 %v473
      %1001 = vmatprep.subr.mxu0 %v490
      %1002 = vmatpush1.msra.mxu0 %v489
      %1003 = vmatprep.subr.mxu0 %v506
      %1004 = vmatpush1.msra.mxu0 %v505
      %1005 = vmatprep.subr.mxu0 %v522
      %1006 = vmatpush1.msra.mxu0 %v521
      %1007 = vmatprep.subr.mxu0 %v538
      %1008 = vmatpush1.msra.mxu0 %v537
      %1009 = vmatprep.subr.mxu0 %v554
      %1010 = vmatpush1.msra.mxu0 %v553
      %1011 = vmatprep.subr.mxu0 0.0
      %1012 = vmatpush1.msra.mxu0 0.0
      %1013 = vmatprep.subr.mxu0 0.0
      %1014 = vmatpush1.msra.mxu0 0.0
      %1015 = vmatprep.subr.mxu0 0.0
      %1016 = vmatpush1.msra.mxu0 0.0
      %1017 = vmatprep.subr.mxu0 0.0
      %1018 = vmatpush1.msra.mxu0 0.0
      %1019 = vmatprep.subr.mxu0 0.0
      %1020 = vmatpush1.msra.mxu0 0.0
      %1021 = vmatprep.subr.mxu0 0.0
      %1022 = vmatpush1.msra.mxu0 0.0
      %1023 = vmatprep.subr.mxu0 0.0
      %1024 = vmatpush1.msra.mxu0 0.0
      %1025 = vmatprep.subr.mxu0 0.0
      %1026 = vmatpush1.msra.mxu0 0.0
      %1027 = vmatprep.mubr.f32.mxu0 %v573
      %1028 = vmatmul.mubr.f32.gmra.mrb[0].mxu0 %v171
      %v1029 = vpop.f32.mrb[0].mxu0
      %v1030 = vadd.f32 %v564, %v1029
      %v1031 = vpop.f32.mrb[0].mxu0
      %v1032 = vadd.f32 %v564, %v1031
      %1033 = vmatprep.mubr.f32.mxu0 %v576
      %1034 = vmatmul.mubr.f32.gmra.mrb[0].mxu0 %v173
      %v1035 = vpop.f32.mrb[0].mxu0
      %v1036 = vadd.f32 %v569, %v1035
      %v1037 = vpop.f32.mrb[0].mxu0
      %v1038 = vadd.f32 %v569, %v1037
      %1039 = vdwg.mxu0
      %1040 = vmatprep.subr.mxu0 %v188
      %1041 = vmatpush1.msra.mxu0 %v187
      %1042 = vmatprep.subr.mxu0 %v204
      %1043 = vmatpush1.msra.mxu0 %v203
      %1044 = vmatprep.subr.mxu0 %v220
      %1045 = vmatpush1.msra.mxu0 %v219
      %1046 = vmatprep.subr.mxu0 %v236
      %1047 = vmatpush1.msra.mxu0 %v235
      %1048 = vmatprep.subr.mxu0 %v252
      %1049 = vmatpush1.msra.mxu0 %v251
      %1050 = vmatprep.subr.mxu0 %v268
      %1051 = vmatpush1.msra.mxu0 %v267
      %1052 = vmatprep.subr.mxu0 %v284
      %1053 = vmatpush1.msra.mxu0 %v283
      %1054 = vmatprep.subr.mxu0 %v300
      %1055 = vmatpush1.msra.mxu0 %v299
      %1056 = vmatprep.subr.mxu0 %v316
      %1057 = vmatpush1.msra.mxu0 %v315
      %1058 = vmatprep.subr.mxu0 %v332
      %1059 = vmatpush1.msra.mxu0 %v331
      %1060 = vmatprep.subr.mxu0 %v348
      %1061 = vmatpush1.msra.mxu0 %v347
      %1062 = vmatprep.subr.mxu0 %v364
      %1063 = vmatpush1.msra.mxu0 %v363
      %1064 = vmatprep.subr.mxu0 %v380
      %1065 = vmatpush1.msra.mxu0 %v379
      %1066 = vmatprep.subr.mxu0 %v396
      %1067 = vmatpush1.msra.mxu0 %v395
      %1068 = vmatprep.subr.mxu0 %v412
      %1069 = vmatpush1.msra.mxu0 %v411
      %1070 = vmatprep.subr.mxu0 %v428
      %1071 = vmatpush1.msra.mxu0 %v427
      %1072 = vmatprep.subr.mxu0 %v444
      %1073 = vmatpush1.msra.mxu0 %v443
      %1074 = vmatprep.subr.mxu0 %v460
      %1075 = vmatpush1.msra.mxu0 %v459
      %1076 = vmatprep.subr.mxu0 %v476
      %1077 = vmatpush1.msra.mxu0 %v475
      %1078 = vmatprep.subr.mxu0 %v492
      %1079 = vmatpush1.msra.mxu0 %v491
      %1080 = vmatprep.subr.mxu0 %v508
      %1081 = vmatpush1.msra.mxu0 %v507
      %1082 = vmatprep.subr.mxu0 %v524
      %1083 = vmatpush1.msra.mxu0 %v523
      %1084 = vmatprep.subr.mxu0 %v540
      %1085 = vmatpush1.msra.mxu0 %v539
      %1086 = vmatprep.subr.mxu0 %v556
      %1087 = vmatpush1.msra.mxu0 %v555
      %1088 = vmatprep.subr.mxu0 0.0
      %1089 = vmatpush1.msra.mxu0 0.0
      %1090 = vmatprep.subr.mxu0 0.0
      %1091 = vmatpush1.msra.mxu0 0.0
      %1092 = vmatprep.subr.mxu0 0.0
      %1093 = vmatpush1.msra.mxu0 0.0
      %1094 = vmatprep.subr.mxu0 0.0
      %1095 = vmatpush1.msra.mxu0 0.0
      %1096 = vmatprep.subr.mxu0 0.0
      %1097 = vmatpush1.msra.mxu0 0.0
      %1098 = vmatprep.subr.mxu0 0.0
      %1099 = vmatpush1.msra.mxu0 0.0
      %1100 = vmatprep.subr.mxu0 0.0
      %1101 = vmatpush1.msra.mxu0 0.0
      %1102 = vmatprep.subr.mxu0 0.0
      %1103 = vmatpush1.msra.mxu0 0.0
      %1104 = vmatprep.mubr.f32.mxu0 %v573
      %1105 = vmatmul.mubr.f32.gmra.mrb[0].mxu0 %v171
      %v1106 = vpop.f32.mrb[0].mxu0
      %v1107 = vadd.f32 %v564, %v1106
      %v1108 = vpop.f32.mrb[0].mxu0
      %v1109 = vadd.f32 %v564, %v1108
      %1110 = vmatprep.mubr.f32.mxu0 %v576
      %1111 = vmatmul.mubr.f32.gmra.mrb[0].mxu0 %v173
      %v1112 = vpop.f32.mrb[0].mxu0
      %v1113 = vadd.f32 %v569, %v1112
      %v1114 = vpop.f32.mrb[0].mxu0
      %v1115 = vadd.f32 %v569, %v1114
      %1116 = vdwg.mxu0
      %1117 = vmatprep.subr.mxu0 %v190
      %1118 = vmatpush1.msra.mxu0 %v189
      %1119 = vmatprep.subr.mxu0 %v206
      %1120 = vmatpush1.msra.mxu0 %v205
      %1121 = vmatprep.subr.mxu0 %v222
      %1122 = vmatpush1.msra.mxu0 %v221
      %1123 = vmatprep.subr.mxu0 %v238
      %1124 = vmatpush1.msra.mxu0 %v237
      %1125 = vmatprep.subr.mxu0 %v254
      %1126 = vmatpush1.msra.mxu0 %v253
      %1127 = vmatprep.subr.mxu0 %v270
      %1128 = vmatpush1.msra.mxu0 %v269
      %1129 = vmatprep.subr.mxu0 %v286
      %1130 = vmatpush1.msra.mxu0 %v285
      %1131 = vmatprep.subr.mxu0 %v302
      %1132 = vmatpush1.msra.mxu0 %v301
      %1133 = vmatprep.subr.mxu0 %v318
      %1134 = vmatpush1.msra.mxu0 %v317
      %1135 = vmatprep.subr.mxu0 %v334
      %1136 = vmatpush1.msra.mxu0 %v333
      %1137 = vmatprep.subr.mxu0 %v350
      %1138 = vmatpush1.msra.mxu0 %v349
      %1139 = vmatprep.subr.mxu0 %v366
      %1140 = vmatpush1.msra.mxu0 %v365
      %1141 = vmatprep.subr.mxu0 %v382
      %1142 = vmatpush1.msra.mxu0 %v381
      %1143 = vmatprep.subr.mxu0 %v398
      %1144 = vmatpush1.msra.mxu0 %v397
      %1145 = vmatprep.subr.mxu0 %v414
      %1146 = vmatpush1.msra.mxu0 %v413
      %1147 = vmatprep.subr.mxu0 %v430
      %1148 = vmatpush1.msra.mxu0 %v429
      %1149 = vmatprep.subr.mxu0 %v446
      %1150 = vmatpush1.msra.mxu0 %v445
      %1151 = vmatprep.subr.mxu0 %v462
      %1152 = vmatpush1.msra.mxu0 %v461
      %1153 = vmatprep.subr.mxu0 %v478
      %1154 = vmatpush1.msra.mxu0 %v477
      %1155 = vmatprep.subr.mxu0 %v494
      %1156 = vmatpush1.msra.mxu0 %v493
      %1157 = vmatprep.subr.mxu0 %v510
      %1158 = vmatpush1.msra.mxu0 %v509
      %1159 = vmatprep.subr.mxu0 %v526
      %1160 = vmatpush1.msra.mxu0 %v525
      %1161 = vmatprep.subr.mxu0 %v542
      %1162 = vmatpush1.msra.mxu0 %v541
      %1163 = vmatprep.subr.mxu0 %v558
      %1164 = vmatpush1.msra.mxu0 %v557
      %1165 = vmatprep.subr.mxu0 0.0
      %1166 = vmatpush1.msra.mxu0 0.0
      %1167 = vmatprep.subr.mxu0 0.0
      %1168 = vmatpush1.msra.mxu0 0.0
      %1169 = vmatprep.subr.mxu0 0.0
      %1170 = vmatpush1.msra.mxu0 0.0
      %1171 = vmatprep.subr.mxu0 0.0
      %1172 = vmatpush1.msra.mxu0 0.0
      %1173 = vmatprep.subr.mxu0 0.0
      %1174 = vmatpush1.msra.mxu0 0.0
      %1175 = vmatprep.subr.mxu0 0.0
      %1176 = vmatpush1.msra.mxu0 0.0
      %1177 = vmatprep.subr.mxu0 0.0
      %1178 = vmatpush1.msra.mxu0 0.0
      %1179 = vmatprep.subr.mxu0 0.0
      %1180 = vmatpush1.msra.mxu0 0.0
      %1181 = vmatprep.mubr.f32.mxu0 %v573
      %1182 = vmatmul.mubr.f32.gmra.mrb[0].mxu0 %v171
      %v1183 = vpop.f32.mrb[0].mxu0
      %v1184 = vadd.f32 %v564, %v1183
      %v1185 = vpop.f32.mrb[0].mxu0
      %v1186 = vadd.f32 %v564, %v1185
      %1187 = vmatprep.mubr.f32.mxu0 %v576
      %1188 = vmatmul.mubr.f32.gmra.mrb[0].mxu0 %v173
      %v1189 = vpop.f32.mrb[0].mxu0
      %v1190 = vadd.f32 %v569, %v1189
      %v1191 = vpop.f32.mrb[0].mxu0
      %v1192 = vadd.f32 %v569, %v1191
      %1193 = vdwg.mxu0
      %v1194 = vmax.f32 %v645, 0.0
      %v1195 = vmax.f32 %v647, 0.0
      %v1196 = vmax.f32 %v722, 0.0
      %v1197 = vmax.f32 %v724, 0.0
      %v1198 = vmax.f32 %v799, 0.0
      %v1199 = vmax.f32 %v801, 0.0
      %v1200 = vmax.f32 %v876, 0.0
      %v1201 = vmax.f32 %v878, 0.0
      %v1202 = vmax.f32 %v953, 0.0
      %v1203 = vmax.f32 %v955, 0.0
      %v1204 = vmax.f32 %v1030, 0.0
      %v1205 = vmax.f32 %v1032, 0.0
      %v1206 = vmax.f32 %v1107, 0.0
      %v1207 = vmax.f32 %v1109, 0.0
      %v1208 = vmax.f32 %v1184, 0.0
      %v1209 = vmax.f32 %v1186, 0.0
      %v1210 = vmax.f32 %v651, 0.0
      %v1211 = vmax.f32 %v653, 0.0
      %v1212 = vmax.f32 %v728, 0.0
      %v1213 = vmax.f32 %v730, 0.0
      %v1214 = vmax.f32 %v805, 0.0
      %v1215 = vmax.f32 %v807, 0.0
      %v1216 = vmax.f32 %v882, 0.0
      %v1217 = vmax.f32 %v884, 0.0
      %v1218 = vmax.f32 %v959, 0.0
      %v1219 = vmax.f32 %v961, 0.0
      %v1220 = vmax.f32 %v1036, 0.0
      %v1221 = vmax.f32 %v1038, 0.0
      %v1222 = vmax.f32 %v1113, 0.0
      %v1223 = vmax.f32 %v1115, 0.0
      %v1224 = vmax.f32 %v1190, 0.0
      %v1225 = vmax.f32 %v1192, 0.0
      %1226 = vst [vmem:[%s170] sm:$0xff] %v1194
      %1227 = vst [vmem:[%s170 + $0x8] sm:$0xff] %v1195
      %1228 = vst [vmem:[%s170 + $0x10] sm:$0xff] %v1196
      %1229 = vst [vmem:[%s170 + $0x18] sm:$0xff] %v1197
      %1230 = vst [vmem:[%s170 + $0x20] sm:$0xff] %v1198
      %1231 = vst [vmem:[%s170 + $0x28] sm:$0xff] %v1199
      %1232 = vst [vmem:[%s170 + $0x30] sm:$0xff] %v1200
      %1233 = vst [vmem:[%s170 + $0x38] sm:$0xff] %v1201
      %1234 = vst [vmem:[%s170 + $0x40] sm:$0xff] %v1202
      %1235 = vst [vmem:[%s170 + $0x48] sm:$0xff] %v1203
      %1236 = vst [vmem:[%s170 + $0x50] sm:$0xff] %v1204
      %1237 = vst [vmem:[%s170 + $0x58] sm:$0xff] %v1205
      %1238 = vst [vmem:[%s170 + $0x60] sm:$0xff] %v1206
      %1239 = vst [vmem:[%s170 + $0x68] sm:$0xff] %v1207
      %1240 = vst [vmem:[%s170 + $0x70] sm:$0xff] %v1208
      %vm1241 = vcmask 654336
      %1242 = vst.msk [vmem:[%s170 + $0x78] sm:$0xff] %vm1241, %v1209
      %1243 = vst [vmem:[%s170 + $0x80] sm:$0xff] %v1210
      %1244 = vst [vmem:[%s170 + $0x88] sm:$0xff] %v1211
      %1245 = vst [vmem:[%s170 + $0x90] sm:$0xff] %v1212
      %1246 = vst [vmem:[%s170 + $0x98] sm:$0xff] %v1213
      %1247 = vst [vmem:[%s170 + $0xa0] sm:$0xff] %v1214
      %1248 = vst [vmem:[%s170 + $0xa8] sm:$0xff] %v1215
      %1249 = vst [vmem:[%s170 + $0xb0] sm:$0xff] %v1216
      %1250 = vst [vmem:[%s170 + $0xb8] sm:$0xff] %v1217
      %1251 = vst [vmem:[%s170 + $0xc0] sm:$0xff] %v1218
      %1252 = vst [vmem:[%s170 + $0xc8] sm:$0xff] %v1219
      %1253 = vst [vmem:[%s170 + $0xd0] sm:$0xff] %v1220
      %1254 = vst [vmem:[%s170 + $0xd8] sm:$0xff] %v1221
      %1255 = vst [vmem:[%s170 + $0xe0] sm:$0xff] %v1222
      %1256 = vst [vmem:[%s170 + $0xe8] sm:$0xff] %v1223
      %1257 = vst [vmem:[%s170 + $0xf0] sm:$0xff] %v1224
      %1258 = vst.msk [vmem:[%s170 + $0xf8] sm:$0xff] %vm1241, %v1225
      %p1259 = scmp.lt.s32.totalorder %s14, 1
      %s1260 = scalar_select %p1259, %s14, 1
      %s1261 = smul.addr %s1260, 32
      %s1262 = smul.addr %s1261, 8
      %s1263 = scalar_lea.vmem %s3, %s1262
      // Predicated region
      $region33: #{cnn3d_forward.2} parent=31 // pred_check
        %p1264 = pneg %p100
      $region34: #{cnn3d_forward.2} parent=31 // pred_check_branch
        %1266 = sbr.rel (%p1264) target = $region36
      $region35: #{cnn3d_forward.2} parent=31 // pred_region
        _
      $region36: #{cnn3d_forward.2} parent=31 // pred_fallthru
        _
    $region32: #{cnn3d_forward.2} parent=5 // pred_fallthru
      _
    %p1267 = scmp.le.s32.totalorder 2, %s9
    // Predicated region
    $region37: #{cnn3d_forward.2} parent=5 // pred_check
      %p1268 = pneg %p1267
    $region38: #{cnn3d_forward.2} parent=5 // pred_check_branch
      %1270 = sbr.rel (%p1268) target = $region40
    $region39: #{cnn3d_forward.2} parent=5 // pred_region
      %s1271 = ssub.s32 %s9, 2
      // Predicated region
      $region41: #{cnn3d_forward.2} parent=39 // pred_check
        %p1272 = pneg %p106
      $region42: #{cnn3d_forward.2} parent=39 // pred_check_branch
        %1274 = sbr.rel (%p1272) target = $region44
      $region43: #{cnn3d_forward.2} parent=39 // pred_region
        %p1275 = scmp.lt.s32.totalorder %s15, 1
        %s1276 = scalar_select %p1275, %s15, 1
        %s1277 = smul.addr %s1276, 32
        %s1278 = smul.addr %s1277, 8
        %s1279 = scalar_lea.vmem %s3, %s1278
      $region44: #{cnn3d_forward.2} parent=39 // pred_fallthru
        _
    $region40: #{cnn3d_forward.2} parent=5 // pred_fallthru
      _
  $region6: #{cnn3d_forward.2} parent=0 // loop_footer
    %s13 = sadd.s32 1, %s9
  $region7: #{cnn3d_forward.2} parent=0 // loop_footer_branch
    %8 = sbr.rel target = $region3
  $region8: #{cnn3d_forward.2} parent=0 // loop_exit
    _

// kernel: cnn3d_forward.3
$region0: #{cnn3d_forward.3}
  #allocation0 [shape = 'u32[]', space=smem, size = 0x4, offset = 0x4, fixed_abs, tag = 'smem constant byte address 0x4 - core index']
  #allocation1 [shape = 'u32[144,128]{1,0:T(1,128)}', space=vmem, size = 0x12000, scoped, tag = 'internal scratch']
  #allocation2 [shape = 'f32[2,32,200]{2,1,0:T(8,128)}', space=vmem, size = 0x10000, scoped, tag = 'scratch operand']
  #allocation3 [shape = 'f32[2,200]{1,0:T(2,128)}', space=vmem, size = 0x800, scoped, tag = 'scratch operand']
  %s0 = inlined_call_operand.vmem [shape: f32[2,768,200], index: 0, kind: input, shape index: {}]
  %s1 = inlined_call_operand.vmem [shape: f32[32,768], index: 1, kind: input, shape index: {}]
  %s2 = inlined_call_operand.vmem [shape: f32[32,1], index: 2, kind: input, shape index: {}]
  %s3 = inlined_call_operand.vmem [shape: f32[32,200,200], index: 3, kind: input, shape index: {}]
  %s4 = inlined_call_operand.vmem [shape: f32[1,200], index: 4, kind: input, shape index: {}]
  %s5 = inlined_call_operand.vmem [shape: f32[200,6], index: 5, kind: input, shape index: {}]
  %s6 = inlined_call_operand.vmem [shape: f32[1,6], index: 6, kind: input, shape index: {}]
  %s7 = inlined_call_operand.hbm [shape: f32[2,6], index: 7, kind: output, shape index: {0}]
  %s8 = inlined_call_operand.hbm [shape: f32[2,6], index: 8, kind: output, shape index: {1}]
  %9 = xla_tuple %s7, %s8
  %s10 = sld [smem:[#allocation0]]
  $region77: #{cnn3d_forward.3} parent=0
    _
  %s12 = ssub.s32 1, %s10
  %s13 = scalar_select 0, %s12, %s10
  $region1: #{cnn3d_forward.3} parent=0
    #allocation4 [shape = 'u8[1024]{0}', space=vmem, size = 0x400, scoped, tag = 'output window, operand 0, single buffered']
    #allocation5 [shape = 's32[2]{0}', space=sflag, size = 0x8, scoped, tag = 'scoped memory for cnn3d_forward.3']
    #allocation6 [shape = 'u8[1024]{0}', space=vmem, size = 0x400, scoped, tag = 'output window, operand 1, single buffered']
    #allocation7 [shape = 's32[1]{0}', space=sflag, size = 0x4, scoped, tag = 'scoped memory for cnn3d_forward.3']
    %14 = vsyncpa [#allocation5], 0
    %15 = vsyncpa [#allocation7], 0
    loop: start=0, step=1, limit=10
    $region2: #{cnn3d_forward.3} parent=1 // loop_pre_header
      _
    $region3: #{cnn3d_forward.3} parent=1 // loop_header
      %s17 = sphi 0, %s21
      %p18 = scmp.ge.s32.totalorder %s17, 10
      %s25 = sphi 0, %s25
      %s27 = sphi 0, %s25
      %s28 = sphi 0, %s27
      %s42 = sphi 0, %s28
      %s46 = sphi 0, %s46
      %s48 = sphi 0, %s46
      %s49 = sphi 0, %s48
      %s63 = sphi 0, %s49
      %s67 = sphi 0, %s67
      %s69 = sphi 0, %s67
      %s70 = sphi 0, %s69
      %s84 = sphi 0, %s70
      %s90 = sphi 0, %s92
      %s93 = sphi 0, %s90
      %s94 = sphi 0, %s93
      %s110 = sphi 0, %s94
      %s114 = sphi 0, %s114
      %s116 = sphi 0, %s114
      %s117 = sphi 0, %s116
      %s131 = sphi 0, %s117
      %s135 = sphi 0, %s135
      %s137 = sphi 0, %s135
      %s138 = sphi 0, %s137
      %s152 = sphi 0, %s138
      %s156 = sphi 0, %s156
      %s158 = sphi 0, %s156
      %s159 = sphi 0, %s158
      %s173 = sphi 0, %s159
      %s177 = sphi 0, %s177
      %s179 = sphi 0, %s177
      %s180 = sphi 0, %s179
      %s194 = sphi 0, %s180
      %s198 = sphi 0, %s198
      %s200 = sphi 0, %s198
      %s201 = sphi 0, %s200
      %s215 = sphi 0, %s201
    $region4: #{cnn3d_forward.3} parent=1 // loop_header_branch
      %20 = sbr.rel (%p18) target = $region8
    $region5: #{cnn3d_forward.3} parent=1 // loop_body
      %s22 = ssub.s32 %s17, 1
      %s23 = ssub.s32 %s17, 2
      %s24 = sadd.s32 %s17, 1
      %s26 = sadd.s32 %s25, 1
      %p29 = scmp.eq.s32.totalorder %s17, 7
      %p30 = scmp.ne.s32.totalorder %s25, %s27
      %p31 = scmp.eq.s32.totalorder %s17, 0
      %p32 = por %p30, %p31
      %p33 = scmp.ne.s32.totalorder %s25, %s27
      %p34 = scmp.eq.s32.totalorder %s22, 7
      %p35 = por %p33, %p34
      %p36 = scmp.ne.s32.totalorder %s27, %s28
      %p37 = scmp.eq.s32.totalorder %s22, 0
      %p38 = por %p36, %p37
      %p39 = scmp.ne.s32.totalorder %s27, %s28
      %p40 = scmp.eq.s32.totalorder %s23, 7
      %p41 = por %p39, %p40
      %p43 = scmp.ne.s32.totalorder %s28, %s42
      %p44 = scmp.eq.s32.totalorder %s23, 0
      %p45 = por %p43, %p44
      %s47 = sadd.s32 %s46, 1
      %p50 = scmp.eq.s32.totalorder %s17, 7
      %p51 = scmp.ne.s32.totalorder %s46, %s48
      %p52 = scmp.eq.s32.totalorder %s17, 0
      %p53 = por %p51, %p52
      %p54 = scmp.ne.s32.totalorder %s46, %s48
      %p55 = scmp.eq.s32.totalorder %s22, 7
      %p56 = por %p54, %p55
      %p57 = scmp.ne.s32.totalorder %s48, %s49
      %p58 = scmp.eq.s32.totalorder %s22, 0
      %p59 = por %p57, %p58
      %p60 = scmp.ne.s32.totalorder %s48, %s49
      %p61 = scmp.eq.s32.totalorder %s23, 7
      %p62 = por %p60, %p61
      %p64 = scmp.ne.s32.totalorder %s49, %s63
      %p65 = scmp.eq.s32.totalorder %s23, 0
      %p66 = por %p64, %p65
      %s68 = sadd.s32 %s67, 1
      %p71 = scmp.eq.s32.totalorder %s17, 7
      %p72 = scmp.ne.s32.totalorder %s67, %s69
      %p73 = scmp.eq.s32.totalorder %s17, 0
      %p74 = por %p72, %p73
      %p75 = scmp.ne.s32.totalorder %s67, %s69
      %p76 = scmp.eq.s32.totalorder %s22, 7
      %p77 = por %p75, %p76
      %p78 = scmp.ne.s32.totalorder %s69, %s70
      %p79 = scmp.eq.s32.totalorder %s22, 0
      %p80 = por %p78, %p79
      %p81 = scmp.ne.s32.totalorder %s69, %s70
      %p82 = scmp.eq.s32.totalorder %s23, 7
      %p83 = por %p81, %p82
      %p85 = scmp.ne.s32.totalorder %s70, %s84
      %p86 = scmp.eq.s32.totalorder %s23, 0
      %p87 = por %p85, %p86
      %s88 = ssub.s32 %s17, %s24
      %p89 = scmp.eq.s32.totalorder %s88, 0
      %s91 = sadd.s32 %s90, 1
      %s92 = scalar_select %p89, %s90, %s91
      %p95 = pneg %p89
      %p96 = scmp.eq.s32.totalorder %s17, 7
      %p97 = por %p95, %p96
      %p98 = scmp.ne.s32.totalorder %s90, %s93
      %p99 = scmp.eq.s32.totalorder %s17, 0
      %p100 = por %p98, %p99
      %p101 = scmp.ne.s32.totalorder %s90, %s93
      %p102 = scmp.eq.s32.totalorder %s22, 7
      %p103 = por %p101, %p102
      %p104 = scmp.ne.s32.totalorder %s93, %s94
      %p105 = scmp.eq.s32.totalorder %s22, 0
      %p106 = por %p104, %p105
      %p107 = scmp.ne.s32.totalorder %s93, %s94
      %p108 = scmp.eq.s32.totalorder %s23, 7
      %p109 = por %p107, %p108
      %p111 = scmp.ne.s32.totalorder %s94, %s110
      %p112 = scmp.eq.s32.totalorder %s23, 0
      %p113 = por %p111, %p112
      %s115 = sadd.s32 %s114, 1
      %p118 = scmp.eq.s32.totalorder %s17, 7
      %p119 = scmp.ne.s32.totalorder %s114, %s116
      %p120 = scmp.eq.s32.totalorder %s17, 0
      %p121 = por %p119, %p120
      %p122 = scmp.ne.s32.totalorder %s114, %s116
      %p123 = scmp.eq.s32.totalorder %s22, 7
      %p124 = por %p122, %p123
      %p125 = scmp.ne.s32.totalorder %s116, %s117
      %p126 = scmp.eq.s32.totalorder %s22, 0
      %p127 = por %p125, %p126
      %p128 = scmp.ne.s32.totalorder %s116, %s117
      %p129 = scmp.eq.s32.totalorder %s23, 7
      %p130 = por %p128, %p129
      %p132 = scmp.ne.s32.totalorder %s117, %s131
      %p133 = scmp.eq.s32.totalorder %s23, 0
      %p134 = por %p132, %p133
      %s136 = sadd.s32 %s135, 1
      %p139 = scmp.eq.s32.totalorder %s17, 7
      %p140 = scmp.ne.s32.totalorder %s135, %s137
      %p141 = scmp.eq.s32.totalorder %s17, 0
      %p142 = por %p140, %p141
      %p143 = scmp.ne.s32.totalorder %s135, %s137
      %p144 = scmp.eq.s32.totalorder %s22, 7
      %p145 = por %p143, %p144
      %p146 = scmp.ne.s32.totalorder %s137, %s138
      %p147 = scmp.eq.s32.totalorder %s22, 0
      %p148 = por %p146, %p147
      %p149 = scmp.ne.s32.totalorder %s137, %s138
      %p150 = scmp.eq.s32.totalorder %s23, 7
      %p151 = por %p149, %p150
      %p153 = scmp.ne.s32.totalorder %s138, %s152
      %p154 = scmp.eq.s32.totalorder %s23, 0
      %p155 = por %p153, %p154
      %s157 = sadd.s32 %s156, 1
      %p160 = scmp.eq.s32.totalorder %s17, 7
      %p161 = scmp.ne.s32.totalorder %s156, %s158
      %p162 = scmp.eq.s32.totalorder %s17, 0
      %p163 = por %p161, %p162
      %p164 = scmp.ne.s32.totalorder %s156, %s158
      %p165 = scmp.eq.s32.totalorder %s22, 7
      %p166 = por %p164, %p165
      %p167 = scmp.ne.s32.totalorder %s158, %s159
      %p168 = scmp.eq.s32.totalorder %s22, 0
      %p169 = por %p167, %p168
      %p170 = scmp.ne.s32.totalorder %s158, %s159
      %p171 = scmp.eq.s32.totalorder %s23, 7
      %p172 = por %p170, %p171
      %p174 = scmp.ne.s32.totalorder %s159, %s173
      %p175 = scmp.eq.s32.totalorder %s23, 0
      %p176 = por %p174, %p175
      %s178 = sadd.s32 %s177, 1
      %p181 = scmp.eq.s32.totalorder %s17, 7
      %p182 = scmp.ne.s32.totalorder %s177, %s179
      %p183 = scmp.eq.s32.totalorder %s17, 0
      %p184 = por %p182, %p183
      %p185 = scmp.ne.s32.totalorder %s177, %s179
      %p186 = scmp.eq.s32.totalorder %s22, 7
      %p187 = por %p185, %p186
      %p188 = scmp.ne.s32.totalorder %s179, %s180
      %p189 = scmp.eq.s32.totalorder %s22, 0
      %p190 = por %p188, %p189
      %p191 = scmp.ne.s32.totalorder %s179, %s180
      %p192 = scmp.eq.s32.totalorder %s23, 7
      %p193 = por %p191, %p192
      %p195 = scmp.ne.s32.totalorder %s180, %s194
      %p196 = scmp.eq.s32.totalorder %s23, 0
      %p197 = por %p195, %p196
      %s199 = sadd.s32 %s198, 1
      %p202 = scmp.eq.s32.totalorder %s17, 7
      %p203 = scmp.ne.s32.totalorder %s198, %s200
      %p204 = scmp.eq.s32.totalorder %s17, 0
      %p205 = por %p203, %p204
      %p206 = scmp.ne.s32.totalorder %s198, %s200
      %p207 = scmp.eq.s32.totalorder %s22, 7
      %p208 = por %p206, %p207
      %p209 = scmp.ne.s32.totalorder %s200, %s201
      %p210 = scmp.eq.s32.totalorder %s22, 0
      %p211 = por %p209, %p210
      %p212 = scmp.ne.s32.totalorder %s200, %s201
      %p213 = scmp.eq.s32.totalorder %s23, 7
      %p214 = por %p212, %p213
      %p216 = scmp.ne.s32.totalorder %s201, %s215
      %p217 = scmp.eq.s32.totalorder %s23, 0
      %p218 = por %p216, %p217
      %p219 = scmp.le.s32.totalorder 1, %s17
      %p220 = scmp.lt.s32.totalorder %s17, 9
      %p221 = pnand %p219, %p220
      %p222 = pneg %p221
      // Predicated region
      $region9: #{cnn3d_forward.3} parent=5 // pred_check
        _
      $region10: #{cnn3d_forward.3} parent=5 // pred_check_branch
        %224 = sbr.rel (%p221) target = $region12
      $region11: #{cnn3d_forward.3} parent=5 // pred_region
        %s225 = ssub.s32 %s17, 1
        // Predicated region
        $region13: #{cnn3d_forward.3} parent=11 // pred_check
          %p226 = pneg %p38
        $region14: #{cnn3d_forward.3} parent=11 // pred_check_branch
          %228 = sbr.rel (%p226) target = $region16
        $region15: #{cnn3d_forward.3} parent=11 // pred_region
          _
        $region16: #{cnn3d_forward.3} parent=11 // pred_fallthru
          _
        // Predicated region
        $region17: #{cnn3d_forward.3} parent=11 // pred_check
          %p229 = pneg %p59
        $region18: #{cnn3d_forward.3} parent=11 // pred_check_branch
          %231 = sbr.rel (%p229) target = $region20
        $region19: #{cnn3d_forward.3} parent=11 // pred_region
          _
        $region20: #{cnn3d_forward.3} parent=11 // pred_fallthru
          _
        // Predicated region
        $region21: #{cnn3d_forward.3} parent=11 // pred_check
          %p232 = pneg %p80
        $region22: #{cnn3d_forward.3} parent=11 // pred_check_branch
          %234 = sbr.rel (%p232) target = $region24
        $region23: #{cnn3d_forward.3} parent=11 // pred_region
          _
        $region24: #{cnn3d_forward.3} parent=11 // pred_fallthru
          _
        // Predicated region
        $region25: #{cnn3d_forward.3} parent=11 // pred_check
          %p235 = pneg %p127
        $region26: #{cnn3d_forward.3} parent=11 // pred_check_branch
          %237 = sbr.rel (%p235) target = $region28
        $region27: #{cnn3d_forward.3} parent=11 // pred_region
          _
        $region28: #{cnn3d_forward.3} parent=11 // pred_fallthru
          _
        // Predicated region
        $region29: #{cnn3d_forward.3} parent=11 // pred_check
          %p238 = pneg %p148
        $region30: #{cnn3d_forward.3} parent=11 // pred_check_branch
          %240 = sbr.rel (%p238) target = $region32
        $region31: #{cnn3d_forward.3} parent=11 // pred_region
          _
        $region32: #{cnn3d_forward.3} parent=11 // pred_fallthru
          _
        // Predicated region
        $region33: #{cnn3d_forward.3} parent=11 // pred_check
          %p241 = pneg %p169
        $region34: #{cnn3d_forward.3} parent=11 // pred_check_branch
          %243 = sbr.rel (%p241) target = $region36
        $region35: #{cnn3d_forward.3} parent=11 // pred_region
          _
        $region36: #{cnn3d_forward.3} parent=11 // pred_fallthru
          _
      $region12: #{cnn3d_forward.3} parent=5 // pred_fallthru
        _
      %p244 = scmp.lt.s32.totalorder %s17, 8
      // Predicated region
      $region37: #{cnn3d_forward.3} parent=5 // pred_check
        %p245 = pneg %p244
      $region38: #{cnn3d_forward.3} parent=5 // pred_check_branch
        %247 = sbr.rel (%p245) target = $region40
      $region39: #{cnn3d_forward.3} parent=5 // pred_region
        // Predicated region
        $region41: #{cnn3d_forward.3} parent=39 // pred_check
          %p248 = pneg %p100
        $region42: #{cnn3d_forward.3} parent=39 // pred_check_branch
          %250 = sbr.rel (%p248) target = $region44
        $region43: #{cnn3d_forward.3} parent=39 // pred_region
          %s251 = smul.u32 4, %s17
          %p252 = scmp.lt.s32.totalorder %s251, 31
          %s253 = scalar_select %p252, %s251, 31
          %s254 = smul.addr %s253, 50
          %s255 = smul.addr %s254, 8
          %s256 = scalar_lea.vmem %s3, %s255
          %s257 = smul.u32 4, %s17
        $region44: #{cnn3d_forward.3} parent=39 // pred_fallthru
          _
      $region40: #{cnn3d_forward.3} parent=5 // pred_fallthru
        _
      %p258 = scmp.le.s32.totalorder 1, %s17
      %p259 = scmp.lt.s32.totalorder %s17, 9
      %p260 = pnand %p258, %p259
      %p261 = pneg %p260
      // Predicated region
      $region45: #{cnn3d_forward.3} parent=5 // pred_check
        _
      $region46: #{cnn3d_forward.3} parent=5 // pred_check_branch
        %263 = sbr.rel (%p260) target = $region48
      $region47: #{cnn3d_forward.3} parent=5 // pred_region
        %s264 = ssub.s32 %s17, 1
        %p265 = pneg %p38
        %p266 = pneg %p35
        %p267 = pneg %p59
        %p268 = pneg %p56
        %p269 = pneg %p80
        %p270 = pneg %p77
        %s271 = smul.u32 4, %s22
        %p272 = scmp.lt.s32.totalorder %s271, 31
        %s273 = scalar_select %p272, %s271, 31
        %s274 = smul.addr %s273, 50
        %s275 = smul.addr %s274, 8
        %s276 = scalar_lea.vmem %s3, %s275
        %p277 = pneg %p106
        %p278 = pneg %p103
        %p279 = pneg %p127
        %p280 = pneg %p124
        %p281 = pneg %p148
        %p282 = pneg %p145
        %p283 = pneg %p169
        %p284 = pneg %p166
        %p285 = pneg %p190
        %p286 = pneg %p187
        %p287 = pneg %p211
        %p288 = pneg %p208
        %s289 = smul.u32 4, %s22
        %p290 = scmp.lt.s32.totalorder %s289, 31
        %s291 = scalar_select %p290, %s289, 31
        %s292 = smul.addr %s291, 50
        %s293 = smul.addr %s292, 8
        %s294 = scalar_lea.vmem %s3, %s293
        %s295 = smul.u32 4, %s22
        %p296 = scmp.eq.s32.totalorder %s22, 0
        // Predicated region
        $region49: #{cnn3d_forward.3} parent=47 // pred_check
          %p297 = pneg %p296
        $region50: #{cnn3d_forward.3} parent=47 // pred_check_branch
          %299 = sbr.rel (%p297) target = $region52
        $region51: #{cnn3d_forward.3} parent=47 // pred_region
          %v300 = vld [vmem:[%s1] sm:$0xff]
          %v301 = vld [vmem:[%s1 + $0x8] sm:$0xff]
          %v302 = vld [vmem:[%s1 + $0x10] sm:$0xff]
          %v303 = vld [vmem:[%s1 + $0x18] sm:$0xff]
          %v304 = vld [vmem:[%s1 + $0x20] sm:$0xff]
          %v305 = vld [vmem:[%s1 + $0x28] sm:$0xff]
          %v306 = vld [vmem:[%s1 + $0x30] sm:$0xff]
          %v307 = vld [vmem:[%s1 + $0x38] sm:$0xff]
          %v308 = vld [vmem:[%s1 + $0x40] sm:$0xff]
          %v309 = vld [vmem:[%s1 + $0x48] sm:$0xff]
          %v310 = vld [vmem:[%s1 + $0x50] sm:$0xff]
          %v311 = vld [vmem:[%s1 + $0x58] sm:$0xff]
          %v312 = vld [vmem:[%s1 + $0x60] sm:$0xff]
          %v313 = vld [vmem:[%s1 + $0x68] sm:$0xff]
          %v314 = vld [vmem:[%s1 + $0x70] sm:$0xff]
          %v315 = vld [vmem:[%s1 + $0x78] sm:$0xff]
          %v316 = vld [vmem:[%s1 + $0x80] sm:$0xff]
          %v317 = vld [vmem:[%s1 + $0x88] sm:$0xff]
          %v318 = vld [vmem:[%s1 + $0x90] sm:$0xff]
          %v319 = vld [vmem:[%s1 + $0x98] sm:$0xff]
          %v320 = vld [vmem:[%s1 + $0xa0] sm:$0xff]
          %v321 = vld [vmem:[%s1 + $0xa8] sm:$0xff]
          %v322 = vld [vmem:[%s1 + $0xb0] sm:$0xff]
          %v323 = vld [vmem:[%s1 + $0xb8] sm:$0xff]
          %v324 = vld [vmem:[%s0] sm:$0xff]
          %v325 = vld [vmem:[%s0 + $0x8] sm:$0xff]
          %v326 = vld [vmem:[%s0 + $0x10] sm:$0xff]
          %v327 = vld [vmem:[%s0 + $0x18] sm:$0xff]
          %v328 = vld [vmem:[%s0 + $0x20] sm:$0xff]
          %v329 = vld [vmem:[%s0 + $0x28] sm:$0xff]
          %v330 = vld [vmem:[%s0 + $0x30] sm:$0xff]
          %v331 = vld [vmem:[%s0 + $0x38] sm:$0xff]
          %v332 = vld [vmem:[%s0 + $0x40] sm:$0xff]
          %v333 = vld [vmem:[%s0 + $0x48] sm:$0xff]
          %v334 = vld [vmem:[%s0 + $0x50] sm:$0xff]
          %v335 = vld [vmem:[%s0 + $0x58] sm:$0xff]
          %v336 = vld [vmem:[%s0 + $0x60] sm:$0xff]
          %v337 = vld [vmem:[%s0 + $0x68] sm:$0xff]
          %v338 = vld [vmem:[%s0 + $0x70] sm:$0xff]
          %v339 = vld [vmem:[%s0 + $0x78] sm:$0xff]
          %v340 = vld [vmem:[%s0 + $0x80] sm:$0xff]
          %v341 = vld [vmem:[%s0 + $0x88] sm:$0xff]
          %v342 = vld [vmem:[%s0 + $0x90] sm:$0xff]
          %v343 = vld [vmem:[%s0 + $0x98] sm:$0xff]
          %v344 = vld [vmem:[%s0 + $0xa0] sm:$0xff]
          %v345 = vld [vmem:[%s0 + $0xa8] sm:$0xff]
          %v346 = vld [vmem:[%s0 + $0xb0] sm:$0xff]
          %v347 = vld [vmem:[%s0 + $0xb8] sm:$0xff]
          %v348 = vld [vmem:[%s0 + $0xc0] sm:$0xff]
          %v349 = vld [vmem:[%s0 + $0xc8] sm:$0xff]
          %v350 = vld [vmem:[%s0 + $0xd0] sm:$0xff]
          %v351 = vld [vmem:[%s0 + $0xd8] sm:$0xff]
          %v352 = vld [vmem:[%s0 + $0xe0] sm:$0xff]
          %v353 = vld [vmem:[%s0 + $0xe8] sm:$0xff]
          %v354 = vld [vmem:[%s0 + $0xf0] sm:$0xff]
          %v355 = vld [vmem:[%s0 + $0xf8] sm:$0xff]
          %v356 = vld [vmem:[%s0 + $0x100] sm:$0xff]
          %v357 = vld [vmem:[%s0 + $0x108] sm:$0xff]
          %v358 = vld [vmem:[%s0 + $0x110] sm:$0xff]
          %v359 = vld [vmem:[%s0 + $0x118] sm:$0xff]
          %v360 = vld [vmem:[%s0 + $0x120] sm:$0xff]
          %v361 = vld [vmem:[%s0 + $0x128] sm:$0xff]
          %v362 = vld [vmem:[%s0 + $0x130] sm:$0xff]
          %v363 = vld [vmem:[%s0 + $0x138] sm:$0xff]
          %v364 = vld [vmem:[%s0 + $0x140] sm:$0xff]
          %v365 = vld [vmem:[%s0 + $0x148] sm:$0xff]
          %v366 = vld [vmem:[%s0 + $0x150] sm:$0xff]
          %v367 = vld [vmem:[%s0 + $0x158] sm:$0xff]
          %v368 = vld [vmem:[%s0 + $0x160] sm:$0xff]
          %v369 = vld [vmem:[%s0 + $0x168] sm:$0xff]
          %v370 = vld [vmem:[%s0 + $0x170] sm:$0xff]
          %v371 = vld [vmem:[%s0 + $0x178] sm:$0xff]
          %v372 = vld [vmem:[%s0 + $0x180] sm:$0xff]
          %v373 = vld [vmem:[%s0 + $0x188] sm:$0xff]
          %v374 = vld [vmem:[%s0 + $0x190] sm:$0xff]
          %v375 = vld [vmem:[%s0 + $0x198] sm:$0xff]
          %v376 = vld [vmem:[%s0 + $0x1a0] sm:$0xff]
          %v377 = vld [vmem:[%s0 + $0x1a8] sm:$0xff]
          %v378 = vld [vmem:[%s0 + $0x1b0] sm:$0xff]
          %v379 = vld [vmem:[%s0 + $0x1b8] sm:$0xff]
          %v380 = vld [vmem:[%s0 + $0x1c0] sm:$0xff]
          %v381 = vld [vmem:[%s0 + $0x1c8] sm:$0xff]
          %v382 = vld [vmem:[%s0 + $0x1d0] sm:$0xff]
          %v383 = vld [vmem:[%s0 + $0x1d8] sm:$0xff]
          %v384 = vld [vmem:[%s0 + $0x1e0] sm:$0xff]
          %v385 = vld [vmem:[%s0 + $0x1e8] sm:$0xff]
          %v386 = vld [vmem:[%s0 + $0x1f0] sm:$0xff]
          %v387 = vld [vmem:[%s0 + $0x1f8] sm:$0xff]
          %v388 = vld [vmem:[%s0 + $0x200] sm:$0xff]
          %v389 = vld [vmem:[%s0 + $0x208] sm:$0xff]
          %v390 = vld [vmem:[%s0 + $0x210] sm:$0xff]
          %v391 = vld [vmem:[%s0 + $0x218] sm:$0xff]
          %v392 = vld [vmem:[%s0 + $0x220] sm:$0xff]
          %v393 = vld [vmem:[%s0 + $0x228] sm:$0xff]
          %v394 = vld [vmem:[%s0 + $0x230] sm:$0xff]
          %v395 = vld [vmem:[%s0 + $0x238] sm:$0xff]
          %v396 = vld [vmem:[%s0 + $0x240] sm:$0xff]
          %v397 = vld [vmem:[%s0 + $0x248] sm:$0xff]
          %v398 = vld [vmem:[%s0 + $0x250] sm:$0xff]
          %v399 = vld [vmem:[%s0 + $0x258] sm:$0xff]
          %v400 = vld [vmem:[%s0 + $0x260] sm:$0xff]
          %v401 = vld [vmem:[%s0 + $0x268] sm:$0xff]
          %v402 = vld [vmem:[%s0 + $0x270] sm:$0xff]
          %v403 = vld [vmem:[%s0 + $0x278] sm:$0xff]
          %v404 = vld [vmem:[%s0 + $0x280] sm:$0xff]
          %v405 = vld [vmem:[%s0 + $0x288] sm:$0xff]
          %v406 = vld [vmem:[%s0 + $0x290] sm:$0xff]
          %v407 = vld [vmem:[%s0 + $0x298] sm:$0xff]
          %v408 = vld [vmem:[%s0 + $0x2a0] sm:$0xff]
          %v409 = vld [vmem:[%s0 + $0x2a8] sm:$0xff]
          %v410 = vld [vmem:[%s0 + $0x2b0] sm:$0xff]
          %v411 = vld [vmem:[%s0 + $0x2b8] sm:$0xff]
          %v412 = vld [vmem:[%s0 + $0x2c0] sm:$0xff]
          %v413 = vld [vmem:[%s0 + $0x2c8] sm:$0xff]
          %v414 = vld [vmem:[%s0 + $0x2d0] sm:$0xff]
          %v415 = vld [vmem:[%s0 + $0x2d8] sm:$0xff]
          %v416 = vld [vmem:[%s0 + $0x2e0] sm:$0xff]
          %v417 = vld [vmem:[%s0 + $0x2e8] sm:$0xff]
          %v418 = vld [vmem:[%s0 + $0x2f0] sm:$0xff]
          %v419 = vld [vmem:[%s0 + $0x2f8] sm:$0xff]
          %v420 = vld [vmem:[%s0 + $0x300] sm:$0xff]
          %v421 = vld [vmem:[%s0 + $0x308] sm:$0xff]
          %v422 = vld [vmem:[%s0 + $0x310] sm:$0xff]
          %v423 = vld [vmem:[%s0 + $0x318] sm:$0xff]
          %v424 = vld [vmem:[%s0 + $0x320] sm:$0xff]
          %v425 = vld [vmem:[%s0 + $0x328] sm:$0xff]
          %v426 = vld [vmem:[%s0 + $0x330] sm:$0xff]
          %v427 = vld [vmem:[%s0 + $0x338] sm:$0xff]
          %v428 = vld [vmem:[%s0 + $0x340] sm:$0xff]
          %v429 = vld [vmem:[%s0 + $0x348] sm:$0xff]
          %v430 = vld [vmem:[%s0 + $0x350] sm:$0xff]
          %v431 = vld [vmem:[%s0 + $0x358] sm:$0xff]
          %v432 = vld [vmem:[%s0 + $0x360] sm:$0xff]
          %v433 = vld [vmem:[%s0 + $0x368] sm:$0xff]
          %v434 = vld [vmem:[%s0 + $0x370] sm:$0xff]
          %v435 = vld [vmem:[%s0 + $0x378] sm:$0xff]
          %v436 = vld [vmem:[%s0 + $0x380] sm:$0xff]
          %v437 = vld [vmem:[%s0 + $0x388] sm:$0xff]
          %v438 = vld [vmem:[%s0 + $0x390] sm:$0xff]
          %v439 = vld [vmem:[%s0 + $0x398] sm:$0xff]
          %v440 = vld [vmem:[%s0 + $0x3a0] sm:$0xff]
          %v441 = vld [vmem:[%s0 + $0x3a8] sm:$0xff]
          %v442 = vld [vmem:[%s0 + $0x3b0] sm:$0xff]
          %v443 = vld [vmem:[%s0 + $0x3b8] sm:$0xff]
          %v444 = vld [vmem:[%s0 + $0x3c0] sm:$0xff]
          %v445 = vld [vmem:[%s0 + $0x3c8] sm:$0xff]
          %v446 = vld [vmem:[%s0 + $0x3d0] sm:$0xff]
          %v447 = vld [vmem:[%s0 + $0x3d8] sm:$0xff]
          %v448 = vld [vmem:[%s0 + $0x3e0] sm:$0xff]
          %v449 = vld [vmem:[%s0 + $0x3e8] sm:$0xff]
          %v450 = vld [vmem:[%s0 + $0x3f0] sm:$0xff]
          %v451 = vld [vmem:[%s0 + $0x3f8] sm:$0xff]
          %v452 = vld [vmem:[%s0 + $0x400] sm:$0xff]
          %v453 = vld [vmem:[%s0 + $0x408] sm:$0xff]
          %v454 = vld [vmem:[%s0 + $0x410] sm:$0xff]
          %v455 = vld [vmem:[%s0 + $0x418] sm:$0xff]
          %v456 = vld [vmem:[%s0 + $0x420] sm:$0xff]
          %v457 = vld [vmem:[%s0 + $0x428] sm:$0xff]
          %v458 = vld [vmem:[%s0 + $0x430] sm:$0xff]
          %v459 = vld [vmem:[%s0 + $0x438] sm:$0xff]
          %v460 = vld [vmem:[%s0 + $0x440] sm:$0xff]
          %v461 = vld [vmem:[%s0 + $0x448] sm:$0xff]
          %v462 = vld [vmem:[%s0 + $0x450] sm:$0xff]
          %v463 = vld [vmem:[%s0 + $0x458] sm:$0xff]
          %v464 = vld [vmem:[%s0 + $0x460] sm:$0xff]
          %v465 = vld [vmem:[%s0 + $0x468] sm:$0xff]
          %v466 = vld [vmem:[%s0 + $0x470] sm:$0xff]
          %v467 = vld [vmem:[%s0 + $0x478] sm:$0xff]
          %v468 = vld [vmem:[%s0 + $0x480] sm:$0xff]
          %v469 = vld [vmem:[%s0 + $0x488] sm:$0xff]
          %v470 = vld [vmem:[%s0 + $0x490] sm:$0xff]
          %v471 = vld [vmem:[%s0 + $0x498] sm:$0xff]
          %v472 = vld [vmem:[%s0 + $0x4a0] sm:$0xff]
          %v473 = vld [vmem:[%s0 + $0x4a8] sm:$0xff]
          %v474 = vld [vmem:[%s0 + $0x4b0] sm:$0xff]
          %v475 = vld [vmem:[%s0 + $0x4b8] sm:$0xff]
          %v476 = vld [vmem:[%s0 + $0x4c0] sm:$0xff]
          %v477 = vld [vmem:[%s0 + $0x4c8] sm:$0xff]
          %v478 = vld [vmem:[%s0 + $0x4d0] sm:$0xff]
          %v479 = vld [vmem:[%s0 + $0x4d8] sm:$0xff]
          %v480 = vld [vmem:[%s0 + $0x4e0] sm:$0xff]
          %v481 = vld [vmem:[%s0 + $0x4e8] sm:$0xff]
          %v482 = vld [vmem:[%s0 + $0x4f0] sm:$0xff]
          %v483 = vld [vmem:[%s0 + $0x4f8] sm:$0xff]
          %v484 = vld [vmem:[%s0 + $0x500] sm:$0xff]
          %v485 = vld [vmem:[%s0 + $0x508] sm:$0xff]
          %v486 = vld [vmem:[%s0 + $0x510] sm:$0xff]
          %v487 = vld [vmem:[%s0 + $0x518] sm:$0xff]
          %v488 = vld [vmem:[%s0 + $0x520] sm:$0xff]
          %v489 = vld [vmem:[%s0 + $0x528] sm:$0xff]
          %v490 = vld [vmem:[%s0 + $0x530] sm:$0xff]
          %v491 = vld [vmem:[%s0 + $0x538] sm:$0xff]
          %v492 = vld [vmem:[%s0 + $0x540] sm:$0xff]
          %v493 = vld [vmem:[%s0 + $0x548] sm:$0xff]
          %v494 = vld [vmem:[%s0 + $0x550] sm:$0xff]
          %v495 = vld [vmem:[%s0 + $0x558] sm:$0xff]
          %v496 = vld [vmem:[%s0 + $0x560] sm:$0xff]
          %v497 = vld [vmem:[%s0 + $0x568] sm:$0xff]
          %v498 = vld [vmem:[%s0 + $0x570] sm:$0xff]
          %v499 = vld [vmem:[%s0 + $0x578] sm:$0xff]
          %v500 = vld [vmem:[%s0 + $0x580] sm:$0xff]
          %v501 = vld [vmem:[%s0 + $0x588] sm:$0xff]
          %v502 = vld [vmem:[%s0 + $0x590] sm:$0xff]
          %v503 = vld [vmem:[%s0 + $0x598] sm:$0xff]
          %v504 = vld [vmem:[%s0 + $0x5a0] sm:$0xff]
          %v505 = vld [vmem:[%s0 + $0x5a8] sm:$0xff]
          %v506 = vld [vmem:[%s0 + $0x5b0] sm:$0xff]
          %v507 = vld [vmem:[%s0 + $0x5b8] sm:$0xff]
          %v508 = vld [vmem:[%s0 + $0x5c0] sm:$0xff]
          %v509 = vld [vmem:[%s0 + $0x5c8] sm:$0xff]
          %v510 = vld [vmem:[%s0 + $0x5d0] sm:$0xff]
          %v511 = vld [vmem:[%s0 + $0x5d8] sm:$0xff]
          %v512 = vld [vmem:[%s0 + $0x5e0] sm:$0xff]
          %v513 = vld [vmem:[%s0 + $0x5e8] sm:$0xff]
          %v514 = vld [vmem:[%s0 + $0x5f0] sm:$0xff]
          %v515 = vld [vmem:[%s0 + $0x5f8] sm:$0xff]
          %v516 = vld [vmem:[%s2] sm:$0xff]
          %v517 = vld [vmem:[%s2 + $0x8] sm:$0xff]
          %v518 = vld [vmem:[%s2 + $0x10] sm:$0xff]
          %v519 = vld [vmem:[%s2 + $0x18] sm:$0xff]
          %521 = vset.pattern.permute.xlu0 0
          %522 = vperm.xlu0 %521, %v516
          %v523 = vpop.permute.xlu0 %522
          %526 = vset.pattern.permute.xlu0 0
          %527 = vperm.xlu0 %526, %v517
          %v528 = vpop.permute.xlu0 %527
          %531 = vset.pattern.permute.xlu0 0
          %532 = vperm.xlu0 %531, %v518
          %v533 = vpop.permute.xlu0 %532
          %536 = vset.pattern.permute.xlu0 0
          %537 = vperm.xlu0 %536, %v519
          %v538 = vpop.permute.xlu0 %537
          %540 = vmatprep.subr.mxu0 %v325
          %541 = vmatpush1.msra.mxu0 %v324
          %542 = vmatprep.subr.mxu0 %v327
          %543 = vmatpush1.msra.mxu0 %v326
          %544 = vmatprep.subr.mxu0 %v329
          %545 = vmatpush1.msra.mxu0 %v328
          %546 = vmatprep.subr.mxu0 %v331
          %547 = vmatpush1.msra.mxu0 %v330
          %548 = vmatprep.subr.mxu0 %v333
          %549 = vmatpush1.msra.mxu0 %v332
          %550 = vmatprep.subr.mxu0 %v335
          %551 = vmatpush1.msra.mxu0 %v334
          %552 = vmatprep.subr.mxu0 %v337
          %553 = vmatpush1.msra.mxu0 %v336
          %554 = vmatprep.subr.mxu0 %v339
          %555 = vmatpush1.msra.mxu0 %v338
          %556 = vmatprep.subr.mxu0 %v341
          %557 = vmatpush1.msra.mxu0 %v340
          %558 = vmatprep.subr.mxu0 %v343
          %559 = vmatpush1.msra.mxu0 %v342
          %560 = vmatprep.subr.mxu0 %v345
          %561 = vmatpush1.msra.mxu0 %v344
          %562 = vmatprep.subr.mxu0 %v347
          %563 = vmatpush1.msra.mxu0 %v346
          %564 = vmatprep.subr.mxu0 %v349
          %565 = vmatpush1.msra.mxu0 %v348
          %566 = vmatprep.subr.mxu0 %v351
          %567 = vmatpush1.msra.mxu0 %v350
          %568 = vmatprep.subr.mxu0 %v353
          %569 = vmatpush1.msra.mxu0 %v352
          %570 = vmatprep.subr.mxu0 %v355
          %571 = vmatpush1.msra.mxu0 %v354
          %572 = vmatprep.subr.mxu0 %v357
          %573 = vmatpush1.msra.mxu0 %v356
          %574 = vmatprep.subr.mxu0 %v359
          %575 = vmatpush1.msra.mxu0 %v358
          %576 = vmatprep.subr.mxu0 %v361
          %577 = vmatpush1.msra.mxu0 %v360
          %578 = vmatprep.subr.mxu0 %v363
          %579 = vmatpush1.msra.mxu0 %v362
          %580 = vmatprep.subr.mxu0 %v365
          %581 = vmatpush1.msra.mxu0 %v364
          %582 = vmatprep.subr.mxu0 %v367
          %583 = vmatpush1.msra.mxu0 %v366
          %584 = vmatprep.subr.mxu0 %v369
          %585 = vmatpush1.msra.mxu0 %v368
          %586 = vmatprep.subr.mxu0 %v371
          %587 = vmatpush1.msra.mxu0 %v370
          %588 = vmatprep.subr.mxu0 %v373
          %589 = vmatpush1.msra.mxu0 %v372
          %590 = vmatprep.subr.mxu0 %v375
          %591 = vmatpush1.msra.mxu0 %v374
          %592 = vmatprep.subr.mxu0 %v377
          %593 = vmatpush1.msra.mxu0 %v376
          %594 = vmatprep.subr.mxu0 %v379
          %595 = vmatpush1.msra.mxu0 %v378
          %596 = vmatprep.subr.mxu0 %v381
          %597 = vmatpush1.msra.mxu0 %v380
          %598 = vmatprep.subr.mxu0 %v383
          %599 = vmatpush1.msra.mxu0 %v382
          %600 = vmatprep.subr.mxu0 %v385
          %601 = vmatpush1.msra.mxu0 %v384
          %602 = vmatprep.subr.mxu0 %v387
          %603 = vmatpush1.msra.mxu0 %v386
          %604 = vmatprep.mubr.f32.mxu0 %v301
          %605 = vmatmul.mubr.f32.gmra.mrb[0].mxu0 %v300
          %v606 = vpop.f32.mrb[0].mxu0
          %v607 = vadd.f32 %v523, %v606
          %v608 = vpop.f32.mrb[0].mxu0
          %v609 = vadd.f32 %v523, %v608
          %610 = vmatprep.mubr.f32.mxu0 %v307
          %611 = vmatmul.mubr.f32.gmra.mrb[0].mxu0 %v306
          %v612 = vpop.f32.mrb[0].mxu0
          %v613 = vadd.f32 %v528, %v612
          %v614 = vpop.f32.mrb[0].mxu0
          %v615 = vadd.f32 %v528, %v614
          %616 = vmatprep.mubr.f32.mxu0 %v313
          %617 = vmatmul.mubr.f32.gmra.mrb[0].mxu0 %v312
          %v618 = vpop.f32.mrb[0].mxu0
          %v619 = vadd.f32 %v533, %v618
          %v620 = vpop.f32.mrb[0].mxu0
          %v621 = vadd.f32 %v533, %v620
          %622 = vmatprep.mubr.f32.mxu0 %v319
          %623 = vmatmul.mubr.f32.gmra.mrb[0].mxu0 %v318
          %v624 = vpop.f32.mrb[0].mxu0
          %v625 = vadd.f32 %v538, %v624
          %v626 = vpop.f32.mrb[0].mxu0
          %v627 = vadd.f32 %v538, %v626
          %628 = vdwg.mxu0
          %629 = vmatprep.subr.mxu0 %v389
          %630 = vmatpush1.msra.mxu0 %v388
          %631 = vmatprep.subr.mxu0 %v391
          %632 = vmatpush1.msra.mxu0 %v390
          %633 = vmatprep.subr.mxu0 %v393
          %634 = vmatpush1.msra.mxu0 %v392
          %635 = vmatprep.subr.mxu0 %v395
          %636 = vmatpush1.msra.mxu0 %v394
          %637 = vmatprep.subr.mxu0 %v397
          %638 = vmatpush1.msra.mxu0 %v396
          %639 = vmatprep.subr.mxu0 %v399
          %640 = vmatpush1.msra.mxu0 %v398
          %641 = vmatprep.subr.mxu0 %v401
          %642 = vmatpush1.msra.mxu0 %v400
          %643 = vmatprep.subr.mxu0 %v403
          %644 = vmatpush1.msra.mxu0 %v402
          %645 = vmatprep.subr.mxu0 %v405
          %646 = vmatpush1.msra.mxu0 %v404
          %647 = vmatprep.subr.mxu0 %v407
          %648 = vmatpush1.msra.mxu0 %v406
          %649 = vmatprep.subr.mxu0 %v409
          %650 = vmatpush1.msra.mxu0 %v408
          %651 = vmatprep.subr.mxu0 %v411
          %652 = vmatpush1.msra.mxu0 %v410
          %653 = vmatprep.subr.mxu0 %v413
          %654 = vmatpush1.msra.mxu0 %v412
          %655 = vmatprep.subr.mxu0 %v415
          %656 = vmatpush1.msra.mxu0 %v414
          %657 = vmatprep.subr.mxu0 %v417
          %658 = vmatpush1.msra.mxu0 %v416
          %659 = vmatprep.subr.mxu0 %v419
          %660 = vmatpush1.msra.mxu0 %v418
          %661 = vmatprep.subr.mxu0 %v421
          %662 = vmatpush1.msra.mxu0 %v420
          %663 = vmatprep.subr.mxu0 %v423
          %664 = vmatpush1.msra.mxu0 %v422
          %665 = vmatprep.subr.mxu0 %v425
          %666 = vmatpush1.msra.mxu0 %v424
          %667 = vmatprep.subr.mxu0 %v427
          %668 = vmatpush1.msra.mxu0 %v426
          %669 = vmatprep.subr.mxu0 %v429
          %670 = vmatpush1.msra.mxu0 %v428
          %671 = vmatprep.subr.mxu0 %v431
          %672 = vmatpush1.msra.mxu0 %v430
          %673 = vmatprep.subr.mxu0 %v433
          %674 = vmatpush1.msra.mxu0 %v432
          %675 = vmatprep.subr.mxu0 %v435
          %676 = vmatpush1.msra.mxu0 %v434
          %677 = vmatprep.subr.mxu0 %v437
          %678 = vmatpush1.msra.mxu0 %v436
          %679 = vmatprep.subr.mxu0 %v439
          %680 = vmatpush1.msra.mxu0 %v438
          %681 = vmatprep.subr.mxu0 %v441
          %682 = vmatpush1.msra.mxu0 %v440
          %683 = vmatprep.subr.mxu0 %v443
          %684 = vmatpush1.msra.mxu0 %v442
          %685 = vmatprep.subr.mxu0 %v445
          %686 = vmatpush1.msra.mxu0 %v444
          %687 = vmatprep.subr.mxu0 %v447
          %688 = vmatpush1.msra.mxu0 %v446
          %689 = vmatprep.subr.mxu0 %v449
          %690 = vmatpush1.msra.mxu0 %v448
          %691 = vmatprep.subr.mxu0 %v451
          %692 = vmatpush1.msra.mxu0 %v450
          %693 = vmatprep.mubr.f32.mxu0 %v303
          %694 = vmatmul.mubr.f32.gmra.mrb[0].mxu0 %v302
          %v695 = vpop.f32.mrb[0].mxu0
          %v696 = vadd.f32 %v607, %v695
          %v697 = vpop.f32.mrb[0].mxu0
          %v698 = vadd.f32 %v609, %v697
          %699 = vmatprep.mubr.f32.mxu0 %v309
          %700 = vmatmul.mubr.f32.gmra.mrb[0].mxu0 %v308
          %v701 = vpop.f32.mrb[0].mxu0
          %v702 = vadd.f32 %v613, %v701
          %v703 = vpop.f32.mrb[0].mxu0
          %v704 = vadd.f32 %v615, %v703
          %705 = vmatprep.mubr.f32.mxu0 %v315
          %706 = vmatmul.mubr.f32.gmra.mrb[0].mxu0 %v314
          %v707 = vpop.f32.mrb[0].mxu0
          %v708 = vadd.f32 %v619, %v707
          %v709 = vpop.f32.mrb[0].mxu0
          %v710 = vadd.f32 %v621, %v709
          %711 = vmatprep.mubr.f32.mxu0 %v321
          %712 = vmatmul.mubr.f32.gmra.mrb[0].mxu0 %v320
          %v713 = vpop.f32.mrb[0].mxu0
          %v714 = vadd.f32 %v625, %v713
          %v715 = vpop.f32.mrb[0].mxu0
          %v716 = vadd.f32 %v627, %v715
          %717 = vdwg.mxu0
          %718 = vmatprep.subr.mxu0 %v453
          %719 = vmatpush1.msra.mxu0 %v452
          %720 = vmatprep.subr.mxu0 %v455
          %721 = vmatpush1.msra.mxu0 %v454
          %722 = vmatprep.subr.mxu0 %v457
          %723 = vmatpush1.msra.mxu0 %v456
          %724 = vmatprep.subr.mxu0 %v459
          %725 = vmatpush1.msra.mxu0 %v458
          %726 = vmatprep.subr.mxu0 %v461
          %727 = vmatpush1.msra.mxu0 %v460
          %728 = vmatprep.subr.mxu0 %v463
          %729 = vmatpush1.msra.mxu0 %v462
          %730 = vmatprep.subr.mxu0 %v465
          %731 = vmatpush1.msra.mxu0 %v464
          %732 = vmatprep.subr.mxu0 %v467
          %733 = vmatpush1.msra.mxu0 %v466
          %734 = vmatprep.subr.mxu0 %v469
          %735 = vmatpush1.msra.mxu0 %v468
          %736 = vmatprep.subr.mxu0 %v471
          %737 = vmatpush1.msra.mxu0 %v470
          %738 = vmatprep.subr.mxu0 %v473
          %739 = vmatpush1.msra.mxu0 %v472
          %740 = vmatprep.subr.mxu0 %v475
          %741 = vmatpush1.msra.mxu0 %v474
          %742 = vmatprep.subr.mxu0 %v477
          %743 = vmatpush1.msra.mxu0 %v476
          %744 = vmatprep.subr.mxu0 %v479
          %745 = vmatpush1.msra.mxu0 %v478
          %746 = vmatprep.subr.mxu0 %v481
          %747 = vmatpush1.msra.mxu0 %v480
          %748 = vmatprep.subr.mxu0 %v483
          %749 = vmatpush1.msra.mxu0 %v482
          %750 = vmatprep.subr.mxu0 %v485
          %751 = vmatpush1.msra.mxu0 %v484
          %752 = vmatprep.subr.mxu0 %v487
          %753 = vmatpush1.msra.mxu0 %v486
          %754 = vmatprep.subr.mxu0 %v489
          %755 = vmatpush1.msra.mxu0 %v488
          %756 = vmatprep.subr.mxu0 %v491
          %757 = vmatpush1.msra.mxu0 %v490
          %758 = vmatprep.subr.mxu0 %v493
          %759 = vmatpush1.msra.mxu0 %v492
          %760 = vmatprep.subr.mxu0 %v495
          %761 = vmatpush1.msra.mxu0 %v494
          %762 = vmatprep.subr.mxu0 %v497
          %763 = vmatpush1.msra.mxu0 %v496
          %764 = vmatprep.subr.mxu0 %v499
          %765 = vmatpush1.msra.mxu0 %v498
          %766 = vmatprep.subr.mxu0 %v501
          %767 = vmatpush1.msra.mxu0 %v500
          %768 = vmatprep.subr.mxu0 %v503
          %769 = vmatpush1.msra.mxu0 %v502
          %770 = vmatprep.subr.mxu0 %v505
          %771 = vmatpush1.msra.mxu0 %v504
          %772 = vmatprep.subr.mxu0 %v507
          %773 = vmatpush1.msra.mxu0 %v506
          %774 = vmatprep.subr.mxu0 %v509
          %775 = vmatpush1.msra.mxu0 %v508
          %776 = vmatprep.subr.mxu0 %v511
          %777 = vmatpush1.msra.mxu0 %v510
          %778 = vmatprep.subr.mxu0 %v513
          %779 = vmatpush1.msra.mxu0 %v512
          %780 = vmatprep.subr.mxu0 %v515
          %781 = vmatpush1.msra.mxu0 %v514
          %782 = vmatprep.mubr.f32.mxu0 %v305
          %783 = vmatmul.mubr.f32.gmra.mrb[0].mxu0 %v304
          %v784 = vpop.f32.mrb[0].mxu0
          %v785 = vadd.f32 %v696, %v784
          %v786 = vpop.f32.mrb[0].mxu0
          %v787 = vadd.f32 %v698, %v786
          %788 = vmatprep.mubr.f32.mxu0 %v311
          %789 = vmatmul.mubr.f32.gmra.mrb[0].mxu0 %v310
          %v790 = vpop.f32.mrb[0].mxu0
          %v791 = vadd.f32 %v702, %v790
          %v792 = vpop.f32.mrb[0].mxu0
          %v793 = vadd.f32 %v704, %v792
          %794 = vmatprep.mubr.f32.mxu0 %v317
          %795 = vmatmul.mubr.f32.gmra.mrb[0].mxu0 %v316
          %v796 = vpop.f32.mrb[0].mxu0
          %v797 = vadd.f32 %v708, %v796
          %v798 = vpop.f32.mrb[0].mxu0
          %v799 = vadd.f32 %v710, %v798
          %800 = vmatprep.mubr.f32.mxu0 %v323
          %801 = vmatmul.mubr.f32.gmra.mrb[0].mxu0 %v322
          %v802 = vpop.f32.mrb[0].mxu0
          %v803 = vadd.f32 %v714, %v802
          %v804 = vpop.f32.mrb[0].mxu0
          %v805 = vadd.f32 %v716, %v804
          %806 = vdwg.mxu0
          %v807 = vmax.f32 %v785, 0.0
          %v808 = vmax.f32 %v787, 0.0
          %v809 = vmax.f32 %v791, 0.0
          %v810 = vmax.f32 %v793, 0.0
          %v811 = vmax.f32 %v797, 0.0
          %v812 = vmax.f32 %v799, 0.0
          %v813 = vmax.f32 %v803, 0.0
          %v814 = vmax.f32 %v805, 0.0
          %815 = vst [vmem:[#allocation2] sm:$0xff] %v807
          %vm816 = vcmask 588800
          %817 = vst.msk [vmem:[#allocation2 + $0x8] sm:$0xff] %vm816, %v808
          %818 = vst [vmem:[#allocation2 + $0x10] sm:$0xff] %v809
          %819 = vst.msk [vmem:[#allocation2 + $0x18] sm:$0xff] %vm816, %v810
          %820 = vst [vmem:[#allocation2 + $0x20] sm:$0xff] %v811
          %821 = vst.msk [vmem:[#allocation2 + $0x28] sm:$0xff] %vm816, %v812
          %822 = vst [vmem:[#allocation2 + $0x30] sm:$0xff] %v813
          %823 = vst.msk [vmem:[#allocation2 + $0x38] sm:$0xff] %vm816, %v814
          %v824 = vld [vmem:[%s1] sm:$0xff]
          %v825 = vld [vmem:[%s1 + $0x8] sm:$0xff]
          %v826 = vld [vmem:[%s1 + $0x10] sm:$0xff]
          %v827 = vld [vmem:[%s1 + $0x18] sm:$0xff]
          %v828 = vld [vmem:[%s1 + $0x20] sm:$0xff]
          %v829 = vld [vmem:[%s1 + $0x28] sm:$0xff]
          %v830 = vld [vmem:[%s1 + $0x30] sm:$0xff]
          %v831 = vld [vmem:[%s1 + $0x38] sm:$0xff]
          %v832 = vld [vmem:[%s1 + $0x40] sm:$0xff]
          %v833 = vld [vmem:[%s1 + $0x48] sm:$0xff]
          %v834 = vld [vmem:[%s1 + $0x50] sm:$0xff]
          %v835 = vld [vmem:[%s1 + $0x58] sm:$0xff]
          %v836 = vld [vmem:[%s1 + $0x60] sm:$0xff]
          %v837 = vld [vmem:[%s1 + $0x68] sm:$0xff]
          %v838 = vld [vmem:[%s1 + $0x70] sm:$0xff]
          %v839 = vld [vmem:[%s1 + $0x78] sm:$0xff]
          %v840 = vld [vmem:[%s1 + $0x80] sm:$0xff]
          %v841 = vld [vmem:[%s1 + $0x88] sm:$0xff]
          %v842 = vld [vmem:[%s1 + $0x90] sm:$0xff]
          %v843 = vld [vmem:[%s1 + $0x98] sm:$0xff]
          %v844 = vld [vmem:[%s1 + $0xa0] sm:$0xff]
          %v845 = vld [vmem:[%s1 + $0xa8] sm:$0xff]
          %v846 = vld [vmem:[%s1 + $0xb0] sm:$0xff]
          %v847 = vld [vmem:[%s1 + $0xb8] sm:$0xff]
          %s848 = scalar_lea.vmem %s0, 1536
          %v849 = vld [vmem:[%s848] sm:$0xff]
          %v850 = vld [vmem:[%s848 + $0x8] sm:$0xff]
          %v851 = vld [vmem:[%s848 + $0x10] sm:$0xff]
          %v852 = vld [vmem:[%s848 + $0x18] sm:$0xff]
          %v853 = vld [vmem:[%s848 + $0x20] sm:$0xff]
          %v854 = vld [vmem:[%s848 + $0x28] sm:$0xff]
          %v855 = vld [vmem:[%s848 + $0x30] sm:$0xff]
          %v856 = vld [vmem:[%s848 + $0x38] sm:$0xff]
          %v857 = vld [vmem:[%s848 + $0x40] sm:$0xff]
          %v858 = vld [vmem:[%s848 + $0x48] sm:$0xff]
          %v859 = vld [vmem:[%s848 + $0x50] sm:$0xff]
          %v860 = vld [vmem:[%s848 + $0x58] sm:$0xff]
          %v861 = vld [vmem:[%s848 + $0x60] sm:$0xff]
          %v862 = vld [vmem:[%s848 + $0x68] sm:$0xff]
          %v863 = vld [vmem:[%s848 + $0x70] sm:$0xff]
          %v864 = vld [vmem:[%s848 + $0x78] sm:$0xff]
          %v865 = vld [vmem:[%s848 + $0x80] sm:$0xff]
          %v866 = vld [vmem:[%s848 + $0x88] sm:$0xff]
          %v867 = vld [vmem:[%s848 + $0x90] sm:$0xff]
          %v868 = vld [vmem:[%s848 + $0x98] sm:$0xff]
          %v869 = vld [vmem:[%s848 + $0xa0] sm:$0xff]
          %v870 = vld [vmem:[%s848 + $0xa8] sm:$0xff]
          %v871 = vld [vmem:[%s848 + $0xb0] sm:$0xff]
          %v872 = vld [vmem:[%s848 + $0xb8] sm:$0xff]
          %v873 = vld [vmem:[%s848 + $0xc0] sm:$0xff]
          %v874 = vld [vmem:[%s848 + $0xc8] sm:$0xff]
          %v875 = vld [vmem:[%s848 + $0xd0] sm:$0xff]
          %v876 = vld [vmem:[%s848 + $0xd8] sm:$0xff]
          %v877 = vld [vmem:[%s848 + $0xe0] sm:$0xff]
          %v878 = vld [vmem:[%s848 + $0xe8] sm:$0xff]
          %v879 = vld [vmem:[%s848 + $0xf0] sm:$0xff]
          %v880 = vld [vmem:[%s848 + $0xf8] sm:$0xff]
          %v881 = vld [vmem:[%s848 + $0x100] sm:$0xff]
          %v882 = vld [vmem:[%s848 + $0x108] sm:$0xff]
          %v883 = vld [vmem:[%s848 + $0x110] sm:$0xff]
          %v884 = vld [vmem:[%s848 + $0x118] sm:$0xff]
          %v885 = vld [vmem:[%s848 + $0x120] sm:$0xff]
          %v886 = vld [vmem:[%s848 + $0x128] sm:$0xff]
          %v887 = vld [vmem:[%s848 + $0x130] sm:$0xff]
          %v888 = vld [vmem:[%s848 + $0x138] sm:$0xff]
          %v889 = vld [vmem:[%s848 + $0x140] sm:$0xff]
          %v890 = vld [vmem:[%s848 + $0x148] sm:$0xff]
          %v891 = vld [vmem:[%s848 + $0x150] sm:$0xff]
          %v892 = vld [vmem:[%s848 + $0x158] sm:$0xff]
          %v893 = vld [vmem:[%s848 + $0x160] sm:$0xff]
          %v894 = vld [vmem:[%s848 + $0x168] sm:$0xff]
          %v895 = vld [vmem:[%s848 + $0x170] sm:$0xff]
          %v896 = vld [vmem:[%s848 + $0x178] sm:$0xff]
          %v897 = vld [vmem:[%s848 + $0x180] sm:$0xff]
          %v898 = vld [vmem:[%s848 + $0x188] sm:$0xff]
          %v899 = vld [vmem:[%s848 + $0x190] sm:$0xff]
          %v900 = vld [vmem:[%s848 + $0x198] sm:$0xff]
          %v901 = vld [vmem:[%s848 + $0x1a0] sm:$0xff]
          %v902 = vld [vmem:[%s848 + $0x1a8] sm:$0xff]
          %v903 = vld [vmem:[%s848 + $0x1b0] sm:$0xff]
          %v904 = vld [vmem:[%s848 + $0x1b8] sm:$0xff]
          %v905 = vld [vmem:[%s848 + $0x1c0] sm:$0xff]
          %v906 = vld [vmem:[%s848 + $0x1c8] sm:$0xff]
          %v907 = vld [vmem:[%s848 + $0x1d0] sm:$0xff]
          %v908 = vld [vmem:[%s848 + $0x1d8] sm:$0xff]
          %v909 = vld [vmem:[%s848 + $0x1e0] sm:$0xff]
          %v910 = vld [vmem:[%s848 + $0x1e8] sm:$0xff]
          %v911 = vld [vmem:[%s848 + $0x1f0] sm:$0xff]
          %v912 = vld [vmem:[%s848 + $0x1f8] sm:$0xff]
          %v913 = vld [vmem:[%s848 + $0x200] sm:$0xff]
          %v914 = vld [vmem:[%s848 + $0x208] sm:$0xff]
          %v915 = vld [vmem:[%s848 + $0x210] sm:$0xff]
          %v916 = vld [vmem:[%s848 + $0x218] sm:$0xff]
          %v917 = vld [vmem:[%s848 + $0x220] sm:$0xff]
          %v918 = vld [vmem:[%s848 + $0x228] sm:$0xff]
          %v919 = vld [vmem:[%s848 + $0x230] sm:$0xff]
          %v920 = vld [vmem:[%s848 + $0x238] sm:$0xff]
          %v921 = vld [vmem:[%s848 + $0x240] sm:$0xff]
          %v922 = vld [vmem:[%s848 + $0x248] sm:$0xff]
          %v923 = vld [vmem:[%s848 + $0x250] sm:$0xff]
          %v924 = vld [vmem:[%s848 + $0x258] sm:$0xff]
          %v925 = vld [vmem:[%s848 + $0x260] sm:$0xff]
          %v926 = vld [vmem:[%s848 + $0x268] sm:$0xff]
          %v927 = vld [vmem:[%s848 + $0x270] sm:$0xff]
          %v928 = vld [vmem:[%s848 + $0x278] sm:$0xff]
          %v929 = vld [vmem:[%s848 + $0x280] sm:$0xff]
          %v930 = vld [vmem:[%s848 + $0x288] sm:$0xff]
          %v931 = vld [vmem:[%s848 + $0x290] sm:$0xff]
          %v932 = vld [vmem:[%s848 + $0x298] sm:$0xff]
          %v933 = vld [vmem:[%s848 + $0x2a0] sm:$0xff]
          %v934 = vld [vmem:[%s848 + $0x2a8] sm:$0xff]
          %v935 = vld [vmem:[%s848 + $0x2b0] sm:$0xff]
          %v936 = vld [vmem:[%s848 + $0x2b8] sm:$0xff]
          %v937 = vld [vmem:[%s848 + $0x2c0] sm:$0xff]
          %v938 = vld [vmem:[%s848 + $0x2c8] sm:$0xff]
          %v939 = vld [vmem:[%s848 + $0x2d0] sm:$0xff]
          %v940 = vld [vmem:[%s848 + $0x2d8] sm:$0xff]
          %v941 = vld [vmem:[%s848 + $0x2e0] sm:$0xff]
          %v942 = vld [vmem:[%s848 + $0x2e8] sm:$0xff]
          %v943 = vld [vmem:[%s848 + $0x2f0] sm:$0xff]
          %v944 = vld [vmem:[%s848 + $0x2f8] sm:$0xff]
          %v945 = vld [vmem:[%s848 + $0x300] sm:$0xff]
          %v946 = vld [vmem:[%s848 + $0x308] sm:$0xff]
          %v947 = vld [vmem:[%s848 + $0x310] sm:$0xff]
          %v948 = vld [vmem:[%s848 + $0x318] sm:$0xff]
          %v949 = vld [vmem:[%s848 + $0x320] sm:$0xff]
          %v950 = vld [vmem:[%s848 + $0x328] sm:$0xff]
          %v951 = vld [vmem:[%s848 + $0x330] sm:$0xff]
          %v952 = vld [vmem:[%s848 + $0x338] sm:$0xff]
          %v953 = vld [vmem:[%s848 + $0x340] sm:$0xff]
          %v954 = vld [vmem:[%s848 + $0x348] sm:$0xff]
          %v955 = vld [vmem:[%s848 + $0x350] sm:$0xff]
          %v956 = vld [vmem:[%s848 + $0x358] sm:$0xff]
          %v957 = vld [vmem:[%s848 + $0x360] sm:$0xff]
          %v958 = vld [vmem:[%s848 + $0x368] sm:$0xff]
          %v959 = vld [vmem:[%s848 + $0x370] sm:$0xff]
          %v960 = vld [vmem:[%s848 + $0x378] sm:$0xff]
          %v961 = vld [vmem:[%s848 + $0x380] sm:$0xff]
          %v962 = vld [vmem:[%s848 + $0x388] sm:$0xff]
          %v963 = vld [vmem:[%s848 + $0x390] sm:$0xff]
          %v964 = vld [vmem:[%s848 + $0x398] sm:$0xff]
          %v965 = vld [vmem:[%s848 + $0x3a0] sm:$0xff]
          %v966 = vld [vmem:[%s848 + $0x3a8] sm:$0xff]
          %v967 = vld [vmem:[%s848 + $0x3b0] sm:$0xff]
          %v968 = vld [vmem:[%s848 + $0x3b8] sm:$0xff]
          %v969 = vld [vmem:[%s848 + $0x3c0] sm:$0xff]
          %v970 = vld [vmem:[%s848 + $0x3c8] sm:$0xff]
          %v971 = vld [vmem:[%s848 + $0x3d0] sm:$0xff]
          %v972 = vld [vmem:[%s848 + $0x3d8] sm:$0xff]
          %v973 = vld [vmem:[%s848 + $0x3e0] sm:$0xff]
          %v974 = vld [vmem:[%s848 + $0x3e8] sm:$0xff]
          %v975 = vld [vmem:[%s848 + $0x3f0] sm:$0xff]
          %v976 = vld [vmem:[%s848 + $0x3f8] sm:$0xff]
          %v977 = vld [vmem:[%s848 + $0x400] sm:$0xff]
          %v978 = vld [vmem:[%s848 + $0x408] sm:$0xff]
          %v979 = vld [vmem:[%s848 + $0x410] sm:$0xff]
          %v980 = vld [vmem:[%s848 + $0x418] sm:$0xff]
          %v981 = vld [vmem:[%s848 + $0x420] sm:$0xff]
          %v982 = vld [vmem:[%s848 + $0x428] sm:$0xff]
          %v983 = vld [vmem:[%s848 + $0x430] sm:$0xff]
          %v984 = vld [vmem:[%s848 + $0x438] sm:$0xff]
          %v985 = vld [vmem:[%s848 + $0x440] sm:$0xff]
          %v986 = vld [vmem:[%s848 + $0x448] sm:$0xff]
          %v987 = vld [vmem:[%s848 + $0x450] sm:$0xff]
          %v988 = vld [vmem:[%s848 + $0x458] sm:$0xff]
          %v989 = vld [vmem:[%s848 + $0x460] sm:$0xff]
          %v990 = vld [vmem:[%s848 + $0x468] sm:$0xff]
          %v991 = vld [vmem:[%s848 + $0x470] sm:$0xff]
          %v992 = vld [vmem:[%s848 + $0x478] sm:$0xff]
          %v993 = vld [vmem:[%s848 + $0x480] sm:$0xff]
          %v994 = vld [vmem:[%s848 + $0x488] sm:$0xff]
          %v995 = vld [vmem:[%s848 + $0x490] sm:$0xff]
          %v996 = vld [vmem:[%s848 + $0x498] sm:$0xff]
          %v997 = vld [vmem:[%s848 + $0x4a0] sm:$0xff]
          %v998 = vld [vmem:[%s848 + $0x4a8] sm:$0xff]
          %v999 = vld [vmem:[%s848 + $0x4b0] sm:$0xff]
          %v1000 = vld [vmem:[%s848 + $0x4b8] sm:$0xff]
          %v1001 = vld [vmem:[%s848 + $0x4c0] sm:$0xff]
          %v1002 = vld [vmem:[%s848 + $0x4c8] sm:$0xff]
          %v1003 = vld [vmem:[%s848 + $0x4d0] sm:$0xff]
          %v1004 = vld [vmem:[%s848 + $0x4d8] sm:$0xff]
          %v1005 = vld [vmem:[%s848 + $0x4e0] sm:$0xff]
          %v1006 = vld [vmem:[%s848 + $0x4e8] sm:$0xff]
          %v1007 = vld [vmem:[%s848 + $0x4f0] sm:$0xff]
          %v1008 = vld [vmem:[%s848 + $0x4f8] sm:$0xff]
          %v1009 = vld [vmem:[%s848 + $0x500] sm:$0xff]
          %v1010 = vld [vmem:[%s848 + $0x508] sm:$0xff]
          %v1011 = vld [vmem:[%s848 + $0x510] sm:$0xff]
          %v1012 = vld [vmem:[%s848 + $0x518] sm:$0xff]
          %v1013 = vld [vmem:[%s848 + $0x520] sm:$0xff]
          %v1014 = vld [vmem:[%s848 + $0x528] sm:$0xff]
          %v1015 = vld [vmem:[%s848 + $0x530] sm:$0xff]
          %v1016 = vld [vmem:[%s848 + $0x538] sm:$0xff]
          %v1017 = vld [vmem:[%s848 + $0x540] sm:$0xff]
          %v1018 = vld [vmem:[%s848 + $0x548] sm:$0xff]
          %v1019 = vld [vmem:[%s848 + $0x550] sm:$0xff]
          %v1020 = vld [vmem:[%s848 + $0x558] sm:$0xff]
          %v1021 = vld [vmem:[%s848 + $0x560] sm:$0xff]
          %v1022 = vld [vmem:[%s848 + $0x568] sm:$0xff]
          %v1023 = vld [vmem:[%s848 + $0x570] sm:$0xff]
          %v1024 = vld [vmem:[%s848 + $0x578] sm:$0xff]
          %v1025 = vld [vmem:[%s848 + $0x580] sm:$0xff]
          %v1026 = vld [vmem:[%s848 + $0x588] sm:$0xff]
          %v1027 = vld [vmem:[%s848 + $0x590] sm:$0xff]
          %v1028 = vld [vmem:[%s848 + $0x598] sm:$0xff]
          %v1029 = vld [vmem:[%s848 + $0x5a0] sm:$0xff]
          %v1030 = vld [vmem:[%s848 + $0x5a8] sm:$0xff]
          %v1031 = vld [vmem:[%s848 + $0x5b0] sm:$0xff]
          %v1032 = vld [vmem:[%s848 + $0x5b8] sm:$0xff]
          %v1033 = vld [vmem:[%s848 + $0x5c0] sm:$0xff]
          %v1034 = vld [vmem:[%s848 + $0x5c8] sm:$0xff]
          %v1035 = vld [vmem:[%s848 + $0x5d0] sm:$0xff]
          %v1036 = vld [vmem:[%s848 + $0x5d8] sm:$0xff]
          %v1037 = vld [vmem:[%s848 + $0x5e0] sm:$0xff]
          %v1038 = vld [vmem:[%s848 + $0x5e8] sm:$0xff]
          %v1039 = vld [vmem:[%s848 + $0x5f0] sm:$0xff]
          %v1040 = vld [vmem:[%s848 + $0x5f8] sm:$0xff]
          %v1041 = vld [vmem:[%s2] sm:$0xff]
          %v1042 = vld [vmem:[%s2 + $0x8] sm:$0xff]
          %v1043 = vld [vmem:[%s2 + $0x10] sm:$0xff]
          %v1044 = vld [vmem:[%s2 + $0x18] sm:$0xff]
          %1046 = vset.pattern.permute.xlu0 0
          %1047 = vperm.xlu0 %1046, %v1041
          %v1048 = vpop.permute.xlu0 %1047
          %1051 = vset.pattern.permute.xlu0 0
          %1052 = vperm.xlu0 %1051, %v1042
          %v1053 = vpop.permute.xlu0 %1052
          %1056 = vset.pattern.permute.xlu0 0
          %1057 = vperm.xlu0 %1056, %v1043
          %v1058 = vpop.permute.xlu0 %1057
          %1061 = vset.pattern.permute.xlu0 0
          %1062 = vperm.xlu0 %1061, %v1044
          %v1063 = vpop.permute.xlu0 %1062
          %1065 = vmatprep.subr.mxu0 %v850
          %1066 = vmatpush1.msra.mxu0 %v849
          %1067 = vmatprep.subr.mxu0 %v852
          %1068 = vmatpush1.msra.mxu0 %v851
          %1069 = vmatprep.subr.mxu0 %v854
          %1070 = vmatpush1.msra.mxu0 %v853
          %1071 = vmatprep.subr.mxu0 %v856
          %1072 = vmatpush1.msra.mxu0 %v855
          %1073 = vmatprep.subr.mxu0 %v858
          %1074 = vmatpush1.msra.mxu0 %v857
          %1075 = vmatprep.subr.mxu0 %v860
          %1076 = vmatpush1.msra.mxu0 %v859
          %1077 = vmatprep.subr.mxu0 %v862
          %1078 = vmatpush1.msra.mxu0 %v861
          %1079 = vmatprep.subr.mxu0 %v864
          %1080 = vmatpush1.msra.mxu0 %v863
          %1081 = vmatprep.subr.mxu0 %v866
          %1082 = vmatpush1.msra.mxu0 %v865
          %1083 = vmatprep.subr.mxu0 %v868
          %1084 = vmatpush1.msra.mxu0 %v867
          %1085 = vmatprep.subr.mxu0 %v870
          %1086 = vmatpush1.msra.mxu0 %v869
          %1087 = vmatprep.subr.mxu0 %v872
          %1088 = vmatpush1.msra.mxu0 %v871
          %1089 = vmatprep.subr.mxu0 %v874
          %1090 = vmatpush1.msra.mxu0 %v873
          %1091 = vmatprep.subr.mxu0 %v876
          %1092 = vmatpush1.msra.mxu0 %v875
          %1093 = vmatprep.subr.mxu0 %v878
          %1094 = vmatpush1.msra.mxu0 %v877
          %1095 = vmatprep.subr.mxu0 %v880
          %1096 = vmatpush1.msra.mxu0 %v879
          %1097 = vmatprep.subr.mxu0 %v882
          %1098 = vmatpush1.msra.mxu0 %v881
          %1099 = vmatprep.subr.mxu0 %v884
          %1100 = vmatpush1.msra.mxu0 %v883
          %1101 = vmatprep.subr.mxu0 %v886
          %1102 = vmatpush1.msra.mxu0 %v885
          %1103 = vmatprep.subr.mxu0 %v888
          %1104 = vmatpush1.msra.mxu0 %v887
          %1105 = vmatprep.subr.mxu0 %v890
          %1106 = vmatpush1.msra.mxu0 %v889
          %1107 = vmatprep.subr.mxu0 %v892
          %1108 = vmatpush1.msra.mxu0 %v891
          %1109 = vmatprep.subr.mxu0 %v894
          %1110 = vmatpush1.msra.mxu0 %v893
          %1111 = vmatprep.subr.mxu0 %v896
          %1112 = vmatpush1.msra.mxu0 %v895
          %1113 = vmatprep.subr.mxu0 %v898
          %1114 = vmatpush1.msra.mxu0 %v897
          %1115 = vmatprep.subr.mxu0 %v900
          %1116 = vmatpush1.msra.mxu0 %v899
          %1117 = vmatprep.subr.mxu0 %v902
          %1118 = vmatpush1.msra.mxu0 %v901
          %1119 = vmatprep.subr.mxu0 %v904
          %1120 = vmatpush1.msra.mxu0 %v903
          %1121 = vmatprep.subr.mxu0 %v906
          %1122 = vmatpush1.msra.mxu0 %v905
          %1123 = vmatprep.subr.mxu0 %v908
          %1124 = vmatpush1.msra.mxu0 %v907
          %1125 = vmatprep.subr.mxu0 %v910
          %1126 = vmatpush1.msra.mxu0 %v909
          %1127 = vmatprep.subr.mxu0 %v912
          %1128 = vmatpush1.msra.mxu0 %v911
          %1129 = vmatprep.mubr.f32.mxu0 %v825
          %1130 = vmatmul.mubr.f32.gmra.mrb[0].mxu0 %v824
          %v1131 = vpop.f32.mrb[0].mxu0
          %v1132 = vadd.f32 %v1048, %v1131
          %v1133 = vpop.f32.mrb[0].mxu0
          %v1134 = vadd.f32 %v1048, %v1133
          %1135 = vmatprep.mubr.f32.mxu0 %v831
          %1136 = vmatmul.mubr.f32.gmra.mrb[0].mxu0 %v830
          %v1137 = vpop.f32.mrb[0].mxu0
          %v1138 = vadd.f32 %v1053, %v1137
          %v1139 = vpop.f32.mrb[0].mxu0
          %v1140 = vadd.f32 %v1053, %v1139
          %1141 = vmatprep.mubr.f32.mxu0 %v837
          %1142 = vmatmul.mubr.f32.gmra.mrb[0].mxu0 %v836
          %v1143 = vpop.f32.mrb[0].mxu0
          %v1144 = vadd.f32 %v1058, %v1143
          %v1145 = vpop.f32.mrb[0].mxu0
          %v1146 = vadd.f32 %v1058, %v1145
          %1147 = vmatprep.mubr.f32.mxu0 %v843
          %1148 = vmatmul.mubr.f32.gmra.mrb[0].mxu0 %v842
          %v1149 = vpop.f32.mrb[0].mxu0
          %v1150 = vadd.f32 %v1063, %v1149
          %v1151 = vpop.f32.mrb[0].mxu0
          %v1152 = vadd.f32 %v1063, %v1151
          %1153 = vdwg.mxu0
          %1154 = vmatprep.subr.mxu0 %v914
          %1155 = vmatpush1.msra.mxu0 %v913
          %1156 = vmatprep.subr.mxu0 %v916
          %1157 = vmatpush1.msra.mxu0 %v915
          %1158 = vmatprep.subr.mxu0 %v918
          %1159 = vmatpush1.msra.mxu0 %v917
          %1160 = vmatprep.subr.mxu0 %v920
          %1161 = vmatpush1.msra.mxu0 %v919
          %1162 = vmatprep.subr.mxu0 %v922
          %1163 = vmatpush1.msra.mxu0 %v921
          %1164 = vmatprep.subr.mxu0 %v924
          %1165 = vmatpush1.msra.mxu0 %v923
          %1166 = vmatprep.subr.mxu0 %v926
          %1167 = vmatpush1.msra.mxu0 %v925
          %1168 = vmatprep.subr.mxu0 %v928
          %1169 = vmatpush1.msra.mxu0 %v927
          %1170 = vmatprep.subr.mxu0 %v930
          %1171 = vmatpush1.msra.mxu0 %v929
          %1172 = vmatprep.subr.mxu0 %v932
          %1173 = vmatpush1.msra.mxu0 %v931
          %1174 = vmatprep.subr.mxu0 %v934
          %1175 = vmatpush1.msra.mxu0 %v933
          %1176 = vmatprep.subr.mxu0 %v936
          %1177 = vmatpush1.msra.mxu0 %v935
          %1178 = vmatprep.subr.mxu0 %v938
          %1179 = vmatpush1.msra.mxu0 %v937
          %1180 = vmatprep.subr.mxu0 %v940
          %1181 = vmatpush1.msra.mxu0 %v939
          %1182 = vmatprep.subr.mxu0 %v942
          %1183 = vmatpush1.msra.mxu0 %v941
          %1184 = vmatprep.subr.mxu0 %v944
          %1185 = vmatpush1.msra.mxu0 %v943
          %1186 = vmatprep.subr.mxu0 %v946
          %1187 = vmatpush1.msra.mxu0 %v945
          %1188 = vmatprep.subr.mxu0 %v948
          %1189 = vmatpush1.msra.mxu0 %v947
          %1190 = vmatprep.subr.mxu0 %v950
          %1191 = vmatpush1.msra.mxu0 %v949
          %1192 = vmatprep.subr.mxu0 %v952
          %1193 = vmatpush1.msra.mxu0 %v951
          %1194 = vmatprep.subr.mxu0 %v954
          %1195 = vmatpush1.msra.mxu0 %v953
          %1196 = vmatprep.subr.mxu0 %v956
          %1197 = vmatpush1.msra.mxu0 %v955
          %1198 = vmatprep.subr.mxu0 %v958
          %1199 = vmatpush1.msra.mxu0 %v957
          %1200 = vmatprep.subr.mxu0 %v960
          %1201 = vmatpush1.msra.mxu0 %v959
          %1202 = vmatprep.subr.mxu0 %v962
          %1203 = vmatpush1.msra.mxu0 %v961
          %1204 = vmatprep.subr.mxu0 %v964
          %1205 = vmatpush1.msra.mxu0 %v963
          %1206 = vmatprep.subr.mxu0 %v966
          %1207 = vmatpush1.msra.mxu0 %v965
          %1208 = vmatprep.subr.mxu0 %v968
          %1209 = vmatpush1.msra.mxu0 %v967
          %1210 = vmatprep.subr.mxu0 %v970
          %1211 = vmatpush1.msra.mxu0 %v969
          %1212 = vmatprep.subr.mxu0 %v972
          %1213 = vmatpush1.msra.mxu0 %v971
          %1214 = vmatprep.subr.mxu0 %v974
          %1215 = vmatpush1.msra.mxu0 %v973
          %1216 = vmatprep.subr.mxu0 %v976
          %1217 = vmatpush1.msra.mxu0 %v975
          %1218 = vmatprep.mubr.f32.mxu0 %v827
          %1219 = vmatmul.mubr.f32.gmra.mrb[0].mxu0 %v826
          %v1220 = vpop.f32.mrb[0].mxu0
          %v1221 = vadd.f32 %v1132, %v1220
          %v1222 = vpop.f32.mrb[0].mxu0
          %v1223 = vadd.f32 %v1134, %v1222
          %1224 = vmatprep.mubr.f32.mxu0 %v833
          %1225 = vmatmul.mubr.f32.gmra.mrb[0].mxu0 %v832
          %v1226 = vpop.f32.mrb[0].mxu0
          %v1227 = vadd.f32 %v1138, %v1226
          %v1228 = vpop.f32.mrb[0].mxu0
          %v1229 = vadd.f32 %v1140, %v1228
          %1230 = vmatprep.mubr.f32.mxu0 %v839
          %1231 = vmatmul.mubr.f32.gmra.mrb[0].mxu0 %v838
          %v1232 = vpop.f32.mrb[0].mxu0
          %v1233 = vadd.f32 %v1144, %v1232
          %v1234 = vpop.f32.mrb[0].mxu0
          %v1235 = vadd.f32 %v1146, %v1234
          %1236 = vmatprep.mubr.f32.mxu0 %v845
          %1237 = vmatmul.mubr.f32.gmra.mrb[0].mxu0 %v844
          %v1238 = vpop.f32.mrb[0].mxu0
          %v1239 = vadd.f32 %v1150, %v1238
          %v1240 = vpop.f32.mrb[0].mxu0
          %v1241 = vadd.f32 %v1152, %v1240
          %1242 = vdwg.mxu0
          %1243 = vmatprep.subr.mxu0 %v978
          %1244 = vmatpush1.msra.mxu0 %v977
          %1245 = vmatprep.subr.mxu0 %v980
          %1246 = vmatpush1.msra.mxu0 %v979
          %1247 = vmatprep.subr.mxu0 %v982
          %1248 = vmatpush1.msra.mxu0 %v981
          %1249 = vmatprep.subr.mxu0 %v984
          %1250 = vmatpush1.msra.mxu0 %v983
          %1251 = vmatprep.subr.mxu0 %v986
          %1252 = vmatpush1.msra.mxu0 %v985
          %1253 = vmatprep.subr.mxu0 %v988
          %1254 = vmatpush1.msra.mxu0 %v987
          %1255 = vmatprep.subr.mxu0 %v990
          %1256 = vmatpush1.msra.mxu0 %v989
          %1257 = vmatprep.subr.mxu0 %v992
          %1258 = vmatpush1.msra.mxu0 %v991
          %1259 = vmatprep.subr.mxu0 %v994
          %1260 = vmatpush1.msra.mxu0 %v993
          %1261 = vmatprep.subr.mxu0 %v996
          %1262 = vmatpush1.msra.mxu0 %v995
          %1263 = vmatprep.subr.mxu0 %v998
          %1264 = vmatpush1.msra.mxu0 %v997
          %1265 = vmatprep.subr.mxu0 %v1000
          %1266 = vmatpush1.msra.mxu0 %v999
          %1267 = vmatprep.subr.mxu0 %v1002
          %1268 = vmatpush1.msra.mxu0 %v1001
          %1269 = vmatprep.subr.mxu0 %v1004
          %1270 = vmatpush1.msra.mxu0 %v1003
          %1271 = vmatprep.subr.mxu0 %v1006
          %1272 = vmatpush1.msra.mxu0 %v1005
          %1273 = vmatprep.subr.mxu0 %v1008
          %1274 = vmatpush1.msra.mxu0 %v1007
          %1275 = vmatprep.subr.mxu0 %v1010
          %1276 = vmatpush1.msra.mxu0 %v1009
          %1277 = vmatprep.subr.mxu0 %v1012
          %1278 = vmatpush1.msra.mxu0 %v1011
          %1279 = vmatprep.subr.mxu0 %v1014
          %1280 = vmatpush1.msra.mxu0 %v1013
          %1281 = vmatprep.subr.mxu0 %v1016
          %1282 = vmatpush1.msra.mxu0 %v1015
          %1283 = vmatprep.subr.mxu0 %v1018
          %1284 = vmatpush1.msra.mxu0 %v1017
          %1285 = vmatprep.subr.mxu0 %v1020
          %1286 = vmatpush1.msra.mxu0 %v1019
          %1287 = vmatprep.subr.mxu0 %v1022
          %1288 = vmatpush1.msra.mxu0 %v1021
          %1289 = vmatprep.subr.mxu0 %v1024
          %1290 = vmatpush1.msra.mxu0 %v1023
          %1291 = vmatprep.subr.mxu0 %v1026
          %1292 = vmatpush1.msra.mxu0 %v1025
          %1293 = vmatprep.subr.mxu0 %v1028
          %1294 = vmatpush1.msra.mxu0 %v1027
          %1295 = vmatprep.subr.mxu0 %v1030
          %1296 = vmatpush1.msra.mxu0 %v1029
          %1297 = vmatprep.subr.mxu0 %v1032
          %1298 = vmatpush1.msra.mxu0 %v1031
          %1299 = vmatprep.subr.mxu0 %v1034
          %1300 = vmatpush1.msra.mxu0 %v1033
          %1301 = vmatprep.subr.mxu0 %v1036
          %1302 = vmatpush1.msra.mxu0 %v1035
          %1303 = vmatprep.subr.mxu0 %v1038
          %1304 = vmatpush1.msra.mxu0 %v1037
          %1305 = vmatprep.subr.mxu0 %v1040
          %1306 = vmatpush1.msra.mxu0 %v1039
          %1307 = vmatprep.mubr.f32.mxu0 %v829
          %1308 = vmatmul.mubr.f32.gmra.mrb[0].mxu0 %v828
          %v1309 = vpop.f32.mrb[0].mxu0
          %v1310 = vadd.f32 %v1221, %v1309
          %v1311 = vpop.f32.mrb[0].mxu0
          %v1312 = vadd.f32 %v1223, %v1311
          %1313 = vmatprep.mubr.f32.mxu0 %v835
          %1314 = vmatmul.mubr.f32.gmra.mrb[0].mxu0 %v834
          %v1315 = vpop.f32.mrb[0].mxu0
          %v1316 = vadd.f32 %v1227, %v1315
          %v1317 = vpop.f32.mrb[0].mxu0
          %v1318 = vadd.f32 %v1229, %v1317
          %1319 = vmatprep.mubr.f32.mxu0 %v841
          %1320 = vmatmul.mubr.f32.gmra.mrb[0].mxu0 %v840
          %v1321 = vpop.f32.mrb[0].mxu0
          %v1322 = vadd.f32 %v1233, %v1321
          %v1323 = vpop.f32.mrb[0].mxu0
          %v1324 = vadd.f32 %v1235, %v1323
          %1325 = vmatprep.mubr.f32.mxu0 %v847
          %1326 = vmatmul.mubr.f32.gmra.mrb[0].mxu0 %v846
          %v1327 = vpop.f32.mrb[0].mxu0
          %v1328 = vadd.f32 %v1239, %v1327
          %v1329 = vpop.f32.mrb[0].mxu0
          %v1330 = vadd.f32 %v1241, %v1329
          %1331 = vdwg.mxu0
          %v1332 = vmax.f32 %v1310, 0.0
          %v1333 = vmax.f32 %v1312, 0.0
          %v1334 = vmax.f32 %v1316, 0.0
          %v1335 = vmax.f32 %v1318, 0.0
          %v1336 = vmax.f32 %v1322, 0.0
          %v1337 = vmax.f32 %v1324, 0.0
          %v1338 = vmax.f32 %v1328, 0.0
          %v1339 = vmax.f32 %v1330, 0.0
          %s1340 = scalar_lea.vmem [#allocation2], 64
          %1341 = vst [vmem:[%s1340] sm:$0xff] %v1332
          %1342 = vst.msk [vmem:[%s1340 + $0x8] sm:$0xff] %vm816, %v1333
          %1343 = vst [vmem:[%s1340 + $0x10] sm:$0xff] %v1334
          %1344 = vst.msk [vmem:[%s1340 + $0x18] sm:$0xff] %vm816, %v1335
          %1345 = vst [vmem:[%s1340 + $0x20] sm:$0xff] %v1336
          %1346 = vst.msk [vmem:[%s1340 + $0x28] sm:$0xff] %vm816, %v1337
          %1347 = vst [vmem:[%s1340 + $0x30] sm:$0xff] %v1338
          %1348 = vst.msk [vmem:[%s1340 + $0x38] sm:$0xff] %vm816, %v1339
          %vm1349 = vcmask 1041408
          %vm1350 = vcmask 584706
          %vm1351 = vmor %vm1350, %vm1349
          %1352 = vst.msk [vmem:[#allocation3] sm:$0xf] %vm1351, 0.0
        $region52: #{cnn3d_forward.3} parent=47 // pred_fallthru
          _
        %v1353 = vld [vmem:[#allocation3] sm:$0xf]
        %s1354 = smul.u32 %s22, 4
        %s1355 = sshra.s32 %s1354, 3
        %s1356 = sand.u32 %s1354, 7
        %s1357 = sshra.s32 %s1354, 3
        %s1358 = sand.u32 %s1354, 7
        %s1359 = smul.u32 %s1355, 2
        %s1360 = smul.u32 %s1359, 8
        %s1361 = sadd.s32 %s1360, %s1358
        %s1362 = scalar_lea.vmem [#allocation2], %s1361
        %v1363 = vld [vmem:[%s1362] ss:$8 sm:$0x3]
        %s1364 = sadd.s32 64, %s1361
        %s1365 = scalar_lea.vmem [#allocation2], %s1364
        %v1366 = vld [vmem:[%s1365] ss:$8 sm:$0x3]
        %v1368 = vlaneseq
        %v1369 = vshrl.u32 %v1368, 7
        %v1370 = vsub.s32 0, %v1369
        %v1371 = vrot.slane %v1363, %v1370
        %v1372 = vlaneseq
        %v1373 = vshrl.u32 %v1372, 7
        %v1374 = vsub.s32 1, %v1373
        %v1375 = vrot.slane %v1363, %v1374
        %v1379 = vlaneseq
        %v1380 = vshrl.u32 %v1379, 7
        %v1381 = vsub.s32 0, %v1380
        %v1382 = vrot.slane %v1366, %v1381
        %v1383 = vlaneseq
        %v1384 = vshrl.u32 %v1383, 7
        %v1385 = vsub.s32 1, %v1384
        %v1386 = vrot.slane %v1366, %v1385
        %vm1389 = vcmask 1040384
        %v1390 = vsel %vm1389, %v1371, %v1382
        %v1391 = vsel %vm1389, %v1375, %v1386
        %v1392 = vld [vmem:[%s294] sm:$0xff]
        %v1393 = vld [vmem:[%s294 + $0x8] sm:$0xff]
        %v1394 = vld [vmem:[%s294 + $0x10] sm:$0xff]
        %v1395 = vld [vmem:[%s294 + $0x18] sm:$0xff]
        %v1396 = vld [vmem:[%s294 + $0x20] sm:$0xff]
        %v1397 = vld [vmem:[%s294 + $0x28] sm:$0xff]
        %v1398 = vld [vmem:[%s294 + $0x30] sm:$0xff]
        %v1399 = vld [vmem:[%s294 + $0x38] sm:$0xff]
        %v1400 = vld [vmem:[%s294 + $0x40] sm:$0xff]
        %v1401 = vld [vmem:[%s294 + $0x48] sm:$0xff]
        %v1402 = vld [vmem:[%s294 + $0x50] sm:$0xff]
        %v1403 = vld [vmem:[%s294 + $0x58] sm:$0xff]
        %v1404 = vld [vmem:[%s294 + $0x60] sm:$0xff]
        %v1405 = vld [vmem:[%s294 + $0x68] sm:$0xff]
        %v1406 = vld [vmem:[%s294 + $0x70] sm:$0xff]
        %v1407 = vld [vmem:[%s294 + $0x78] sm:$0xff]
        %v1408 = vld [vmem:[%s294 + $0x80] sm:$0xff]
        %v1409 = vld [vmem:[%s294 + $0x88] sm:$0xff]
        %v1410 = vld [vmem:[%s294 + $0x90] sm:$0xff]
        %v1411 = vld [vmem:[%s294 + $0x98] sm:$0xff]
        %v1412 = vld [vmem:[%s294 + $0xa0] sm:$0xff]
        %v1413 = vld [vmem:[%s294 + $0xa8] sm:$0xff]
        %v1414 = vld [vmem:[%s294 + $0xb0] sm:$0xff]
        %v1415 = vld [vmem:[%s294 + $0xb8] sm:$0xff]
        %v1416 = vld [vmem:[%s294 + $0xc0] sm:$0xff]
        %v1417 = vld [vmem:[%s294 + $0xc8] sm:$0xff]
        %v1418 = vld [vmem:[%s294 + $0xd0] sm:$0xff]
        %v1419 = vld [vmem:[%s294 + $0xd8] sm:$0xff]
        %v1420 = vld [vmem:[%s294 + $0xe0] sm:$0xff]
        %v1421 = vld [vmem:[%s294 + $0xe8] sm:$0xff]
        %v1422 = vld [vmem:[%s294 + $0xf0] sm:$0xff]
        %v1423 = vld [vmem:[%s294 + $0xf8] sm:$0xff]
        %v1424 = vld [vmem:[%s294 + $0x100] sm:$0xff]
        %v1425 = vld [vmem:[%s294 + $0x108] sm:$0xff]
        %v1426 = vld [vmem:[%s294 + $0x110] sm:$0xff]
        %v1427 = vld [vmem:[%s294 + $0x118] sm:$0xff]
        %v1428 = vld [vmem:[%s294 + $0x120] sm:$0xff]
        %v1429 = vld [vmem:[%s294 + $0x128] sm:$0xff]
        %v1430 = vld [vmem:[%s294 + $0x130] sm:$0xff]
        %v1431 = vld [vmem:[%s294 + $0x138] sm:$0xff]
        %v1432 = vld [vmem:[%s294 + $0x140] sm:$0xff]
        %v1433 = vld [vmem:[%s294 + $0x148] sm:$0xff]
        %v1434 = vld [vmem:[%s294 + $0x150] sm:$0xff]
        %v1435 = vld [vmem:[%s294 + $0x158] sm:$0xff]
        %v1436 = vld [vmem:[%s294 + $0x160] sm:$0xff]
        %v1437 = vld [vmem:[%s294 + $0x168] sm:$0xff]
        %v1438 = vld [vmem:[%s294 + $0x170] sm:$0xff]
        %v1439 = vld [vmem:[%s294 + $0x178] sm:$0xff]
        %v1440 = vld [vmem:[%s294 + $0x180] sm:$0xff]
        %v1441 = vld [vmem:[%s294 + $0x188] sm:$0xff]
        %vm1442 = vcmask 588800
        %v1444 = vsel %vm1442, %v1391, 0
        %1446 = vmatprep.subr.mxu0 %v1393
        %1447 = vmatpush1.msra.mxu0 %v1392
        %1448 = vmatprep.subr.mxu0 %v1395
        %1449 = vmatpush1.msra.mxu0 %v1394
        %1450 = vmatprep.subr.mxu0 %v1397
        %1451 = vmatpush1.msra.mxu0 %v1396
        %1452 = vmatprep.subr.mxu0 %v1399
        %1453 = vmatpush1.msra.mxu0 %v1398
        %1454 = vmatprep.subr.mxu0 %v1401
        %1455 = vmatpush1.msra.mxu0 %v1400
        %1456 = vmatprep.subr.mxu0 %v1403
        %1457 = vmatpush1.msra.mxu0 %v1402
        %1458 = vmatprep.subr.mxu0 %v1405
        %1459 = vmatpush1.msra.mxu0 %v1404
        %1460 = vmatprep.subr.mxu0 %v1407
        %1461 = vmatpush1.msra.mxu0 %v1406
        %1462 = vmatprep.subr.mxu0 %v1409
        %1463 = vmatpush1.msra.mxu0 %v1408
        %1464 = vmatprep.subr.mxu0 %v1411
        %1465 = vmatpush1.msra.mxu0 %v1410
        %1466 = vmatprep.subr.mxu0 %v1413
        %1467 = vmatpush1.msra.mxu0 %v1412
        %1468 = vmatprep.subr.mxu0 %v1415
        %1469 = vmatpush1.msra.mxu0 %v1414
        %1470 = vmatprep.subr.mxu0 %v1417
        %1471 = vmatpush1.msra.mxu0 %v1416
        %1472 = vmatprep.subr.mxu0 %v1419
        %1473 = vmatpush1.msra.mxu0 %v1418
        %1474 = vmatprep.subr.mxu0 %v1421
        %1475 = vmatpush1.msra.mxu0 %v1420
        %1476 = vmatprep.subr.mxu0 %v1423
        %1477 = vmatpush1.msra.mxu0 %v1422
        %1478 = vmatprep.subr.mxu0 %v1425
        %1479 = vmatpush1.msra.mxu0 %v1424
        %1480 = vmatprep.subr.mxu0 %v1427
        %1481 = vmatpush1.msra.mxu0 %v1426
        %1482 = vmatprep.subr.mxu0 %v1429
        %1483 = vmatpush1.msra.mxu0 %v1428
        %1484 = vmatprep.subr.mxu0 %v1431
        %1485 = vmatpush1.msra.mxu0 %v1430
        %1486 = vmatprep.subr.mxu0 %v1433
        %1487 = vmatpush1.msra.mxu0 %v1432
        %1488 = vmatprep.subr.mxu0 %v1435
        %1489 = vmatpush1.msra.mxu0 %v1434
        %1490 = vmatprep.subr.mxu0 %v1437
        %1491 = vmatpush1.msra.mxu0 %v1436
        %1492 = vmatprep.subr.mxu0 %v1439
        %1493 = vmatpush1.msra.mxu0 %v1438
        %1494 = vmatprep.subr.mxu0 %v1441
        %1495 = vmatpush1.msra.mxu0 %v1440
        %1496 = vmatprep.subr.mxu0 0.0
        %1497 = vmatpush1.msra.mxu0 0.0
        %1498 = vmatprep.subr.mxu0 0.0
        %1499 = vmatpush1.msra.mxu0 0.0
        %1500 = vmatprep.subr.mxu0 0.0
        %1501 = vmatpush1.msra.mxu0 0.0
        %1502 = vmatprep.subr.mxu0 0.0
        %1503 = vmatpush1.msra.mxu0 0.0
        %1504 = vmatprep.subr.mxu0 0.0
        %1505 = vmatpush1.msra.mxu0 0.0
        %1506 = vmatprep.subr.mxu0 0.0
        %1507 = vmatpush1.msra.mxu0 0.0
        %1508 = vmatprep.subr.mxu0 0.0
        %1509 = vmatpush1.msra.mxu0 0.0
        %1510 = vmatprep.mubr.f32.mxu0 %v1444
        %1511 = vmatmul.mubr.f32.gmra.mrb[0].mxu0 %v1390
        %v1512 = vpop.f32.mrb[0].mxu0
        %v1513 = vadd.f32 0.0, %v1512
        %v1514 = vpop.f32.mrb[0].mxu0
        %v1515 = vadd.f32 0.0, %v1514
        %1516 = vdwg.mxu0
        %v1519 = vcombine.low %v1513, %v1515
        %v1521 = vunpack.c.l.s4 1983009808
        %v1522 = vunpack.c.0.s8 %v1521
        %v1523 = vlaneseq
        %v1524 = vshrl.u32 %v1523, 7
        %v1525 = vsub.s32 %v1522, %v1524
        %v1526 = vrot.slane %v1519, %v1525
        %v1528 = vadd.f32 %v1353, %v1526
        %s1529 = sadd.s32 %s1354, 1
        %s1530 = sshra.s32 %s1529, 3
        %s1531 = sand.u32 %s1529, 7
        %s1532 = sshra.s32 %s1529, 3
        %s1533 = sand.u32 %s1529, 7
        %s1534 = smul.u32 %s1530, 2
        %s1535 = smul.u32 %s1534, 8
        %s1536 = sadd.s32 %s1535, %s1533
        %s1537 = scalar_lea.vmem [#allocation2], %s1536
        %v1538 = vld [vmem:[%s1537] ss:$8 sm:$0x3]
        %s1539 = sadd.s32 64, %s1536
        %s1540 = scalar_lea.vmem [#allocation2], %s1539
        %v1541 = vld [vmem:[%s1540] ss:$8 sm:$0x3]
        %v1543 = vlaneseq
        %v1544 = vshrl.u32 %v1543, 7
        %v1545 = vsub.s32 0, %v1544
        %v1546 = vrot.slane %v1538, %v1545
        %v1547 = vlaneseq
        %v1548 = vshrl.u32 %v1547, 7
        %v1549 = vsub.s32 1, %v1548
        %v1550 = vrot.slane %v1538, %v1549
        %v1554 = vlaneseq
        %v1555 = vshrl.u32 %v1554, 7
        %v1556 = vsub.s32 0, %v1555
        %v1557 = vrot.slane %v1541, %v1556
        %v1558 = vlaneseq
        %v1559 = vshrl.u32 %v1558, 7
        %v1560 = vsub.s32 1, %v1559
        %v1561 = vrot.slane %v1541, %v1560
        %v1564 = vsel %vm1389, %v1546, %v1557
        %v1565 = vsel %vm1389, %v1550, %v1561
        %s1566 = scalar_lea.vmem %s294, 400
        %v1567 = vld [vmem:[%s1566] sm:$0xff]
        %v1568 = vld [vmem:[%s1566 + $0x8] sm:$0xff]
        %v1569 = vld [vmem:[%s1566 + $0x10] sm:$0xff]
        %v1570 = vld [vmem:[%s1566 + $0x18] sm:$0xff]
        %v1571 = vld [vmem:[%s1566 + $0x20] sm:$0xff]
        %v1572 = vld [vmem:[%s1566 + $0x28] sm:$0xff]
        %v1573 = vld [vmem:[%s1566 + $0x30] sm:$0xff]
        %v1574 = vld [vmem:[%s1566 + $0x38] sm:$0xff]
        %v1575 = vld [vmem:[%s1566 + $0x40] sm:$0xff]
        %v1576 = vld [vmem:[%s1566 + $0x48] sm:$0xff]
        %v1577 = vld [vmem:[%s1566 + $0x50] sm:$0xff]
        %v1578 = vld [vmem:[%s1566 + $0x58] sm:$0xff]
        %v1579 = vld [vmem:[%s1566 + $0x60] sm:$0xff]
        %v1580 = vld [vmem:[%s1566 + $0x68] sm:$0xff]
        %v1581 = vld [vmem:[%s1566 + $0x70] sm:$0xff]
        %v1582 = vld [vmem:[%s1566 + $0x78] sm:$0xff]
        %v1583 = vld [vmem:[%s1566 + $0x80] sm:$0xff]
        %v1584 = vld [vmem:[%s1566 + $0x88] sm:$0xff]
        %v1585 = vld [vmem:[%s1566 + $0x90] sm:$0xff]
        %v1586 = vld [vmem:[%s1566 + $0x98] sm:$0xff]
        %v1587 = vld [vmem:[%s1566 + $0xa0] sm:$0xff]
        %v1588 = vld [vmem:[%s1566 + $0xa8] sm:$0xff]
        %v1589 = vld [vmem:[%s1566 + $0xb0] sm:$0xff]
        %v1590 = vld [vmem:[%s1566 + $0xb8] sm:$0xff]
        %v1591 = vld [vmem:[%s1566 + $0xc0] sm:$0xff]
        %v1592 = vld [vmem:[%s1566 + $0xc8] sm:$0xff]
        %v1593 = vld [vmem:[%s1566 + $0xd0] sm:$0xff]
        %v1594 = vld [vmem:[%s1566 + $0xd8] sm:$0xff]
        %v1595 = vld [vmem:[%s1566 + $0xe0] sm:$0xff]
        %v1596 = vld [vmem:[%s1566 + $0xe8] sm:$0xff]
        %v1597 = vld [vmem:[%s1566 + $0xf0] sm:$0xff]
        %v1598 = vld [vmem:[%s1566 + $0xf8] sm:$0xff]
        %v1599 = vld [vmem:[%s1566 + $0x100] sm:$0xff]
        %v1600 = vld [vmem:[%s1566 + $0x108] sm:$0xff]
        %v1601 = vld [vmem:[%s1566 + $0x110] sm:$0xff]
        %v1602 = vld [vmem:[%s1566 + $0x118] sm:$0xff]
        %v1603 = vld [vmem:[%s1566 + $0x120] sm:$0xff]
        %v1604 = vld [vmem:[%s1566 + $0x128] sm:$0xff]
        %v1605 = vld [vmem:[%s1566 + $0x130] sm:$0xff]
        %v1606 = vld [vmem:[%s1566 + $0x138] sm:$0xff]
        %v1607 = vld [vmem:[%s1566 + $0x140] sm:$0xff]
        %v1608 = vld [vmem:[%s1566 + $0x148] sm:$0xff]
        %v1609 = vld [vmem:[%s1566 + $0x150] sm:$0xff]
        %v1610 = vld [vmem:[%s1566 + $0x158] sm:$0xff]
        %v1611 = vld [vmem:[%s1566 + $0x160] sm:$0xff]
        %v1612 = vld [vmem:[%s1566 + $0x168] sm:$0xff]
        %v1613 = vld [vmem:[%s1566 + $0x170] sm:$0xff]
        %v1614 = vld [vmem:[%s1566 + $0x178] sm:$0xff]
        %v1615 = vld [vmem:[%s1566 + $0x180] sm:$0xff]
        %v1616 = vld [vmem:[%s1566 + $0x188] sm:$0xff]
        %v1618 = vsel %vm1442, %v1565, 0
        %1620 = vmatprep.subr.mxu0 %v1568
        %1621 = vmatpush1.msra.mxu0 %v1567
        %1622 = vmatprep.subr.mxu0 %v1570
        %1623 = vmatpush1.msra.mxu0 %v1569
        %1624 = vmatprep.subr.mxu0 %v1572
        %1625 = vmatpush1.msra.mxu0 %v1571
        %1626 = vmatprep.subr.mxu0 %v1574
        %1627 = vmatpush1.msra.mxu0 %v1573
        %1628 = vmatprep.subr.mxu0 %v1576
        %1629 = vmatpush1.msra.mxu0 %v1575
        %1630 = vmatprep.subr.mxu0 %v1578
        %1631 = vmatpush1.msra.mxu0 %v1577
        %1632 = vmatprep.subr.mxu0 %v1580
        %1633 = vmatpush1.msra.mxu0 %v1579
        %1634 = vmatprep.subr.mxu0 %v1582
        %1635 = vmatpush1.msra.mxu0 %v1581
        %1636 = vmatprep.subr.mxu0 %v1584
        %1637 = vmatpush1.msra.mxu0 %v1583
        %1638 = vmatprep.subr.mxu0 %v1586
        %1639 = vmatpush1.msra.mxu0 %v1585
        %1640 = vmatprep.subr.mxu0 %v1588
        %1641 = vmatpush1.msra.mxu0 %v1587
        %1642 = vmatprep.subr.mxu0 %v1590
        %1643 = vmatpush1.msra.mxu0 %v1589
        %1644 = vmatprep.subr.mxu0 %v1592
        %1645 = vmatpush1.msra.mxu0 %v1591
        %1646 = vmatprep.subr.mxu0 %v1594
        %1647 = vmatpush1.msra.mxu0 %v1593
        %1648 = vmatprep.subr.mxu0 %v1596
        %1649 = vmatpush1.msra.mxu0 %v1595
        %1650 = vmatprep.subr.mxu0 %v1598
        %1651 = vmatpush1.msra.mxu0 %v1597
        %1652 = vmatprep.subr.mxu0 %v1600
        %1653 = vmatpush1.msra.mxu0 %v1599
        %1654 = vmatprep.subr.mxu0 %v1602
        %1655 = vmatpush1.msra.mxu0 %v1601
        %1656 = vmatprep.subr.mxu0 %v1604
        %1657 = vmatpush1.msra.mxu0 %v1603
        %1658 = vmatprep.subr.mxu0 %v1606
        %1659 = vmatpush1.msra.mxu0 %v1605
        %1660 = vmatprep.subr.mxu0 %v1608
        %1661 = vmatpush1.msra.mxu0 %v1607
        %1662 = vmatprep.subr.mxu0 %v1610
        %1663 = vmatpush1.msra.mxu0 %v1609
        %1664 = vmatprep.subr.mxu0 %v1612
        %1665 = vmatpush1.msra.mxu0 %v1611
        %1666 = vmatprep.subr.mxu0 %v1614
        %1667 = vmatpush1.msra.mxu0 %v1613
        %1668 = vmatprep.subr.mxu0 %v1616
        %1669 = vmatpush1.msra.mxu0 %v1615
        %1670 = vmatprep.subr.mxu0 0.0
        %1671 = vmatpush1.msra.mxu0 0.0
        %1672 = vmatprep.subr.mxu0 0.0
        %1673 = vmatpush1.msra.mxu0 0.0
        %1674 = vmatprep.subr.mxu0 0.0
        %1675 = vmatpush1.msra.mxu0 0.0
        %1676 = vmatprep.subr.mxu0 0.0
        %1677 = vmatpush1.msra.mxu0 0.0
        %1678 = vmatprep.subr.mxu0 0.0
        %1679 = vmatpush1.msra.mxu0 0.0
        %1680 = vmatprep.subr.mxu0 0.0
        %1681 = vmatpush1.msra.mxu0 0.0
        %1682 = vmatprep.subr.mxu0 0.0
        %1683 = vmatpush1.msra.mxu0 0.0
        %1684 = vmatprep.mubr.f32.mxu0 %v1618
        %1685 = vmatmul.mubr.f32.gmra.mrb[0].mxu0 %v1564
        %v1686 = vpop.f32.mrb[0].mxu0
        %v1687 = vadd.f32 0.0, %v1686
        %v1688 = vpop.f32.mrb[0].mxu0
        %v1689 = vadd.f32 0.0, %v1688
        %1690 = vdwg.mxu0
        %v1693 = vcombine.low %v1687, %v1689
        %v1695 = vunpack.c.l.s4 1983009808
        %v1696 = vunpack.c.0.s8 %v1695
        %v1697 = vlaneseq
        %v1698 = vshrl.u32 %v1697, 7
        %v1699 = vsub.s32 %v1696, %v1698
        %v1700 = vrot.slane %v1693, %v1699
        %v1702 = vadd.f32 %v1528, %v1700
        %s1703 = sadd.s32 %s1354, 2
        %s1704 = sshra.s32 %s1703, 3
        %s1705 = sand.u32 %s1703, 7
        %s1706 = sshra.s32 %s1703, 3
        %s1707 = sand.u32 %s1703, 7
        %s1708 = smul.u32 %s1704, 2
        %s1709 = smul.u32 %s1708, 8
        %s1710 = sadd.s32 %s1709, %s1707
        %s1711 = scalar_lea.vmem [#allocation2], %s1710
        %v1712 = vld [vmem:[%s1711] ss:$8 sm:$0x3]
        %s1713 = sadd.s32 64, %s1710
        %s1714 = scalar_lea.vmem [#allocation2], %s1713
        %v1715 = vld [vmem:[%s1714] ss:$8 sm:$0x3]
        %v1717 = vlaneseq
        %v1718 = vshrl.u32 %v1717, 7
        %v1719 = vsub.s32 0, %v1718
        %v1720 = vrot.slane %v1712, %v1719
        %v1721 = vlaneseq
        %v1722 = vshrl.u32 %v1721, 7
        %v1723 = vsub.s32 1, %v1722
        %v1724 = vrot.slane %v1712, %v1723
        %v1728 = vlaneseq
        %v1729 = vshrl.u32 %v1728, 7
        %v1730 = vsub.s32 0, %v1729
        %v1731 = vrot.slane %v1715, %v1730
        %v1732 = vlaneseq
        %v1733 = vshrl.u32 %v1732, 7
        %v1734 = vsub.s32 1, %v1733
        %v1735 = vrot.slane %v1715, %v1734
        %v1738 = vsel %vm1389, %v1720, %v1731
        %v1739 = vsel %vm1389, %v1724, %v1735
        %s1740 = scalar_lea.vmem %s294, 800
        %v1741 = vld [vmem:[%s1740] sm:$0xff]
        %v1742 = vld [vmem:[%s1740 + $0x8] sm:$0xff]
        %v1743 = vld [vmem:[%s1740 + $0x10] sm:$0xff]
        %v1744 = vld [vmem:[%s1740 + $0x18] sm:$0xff]
        %v1745 = vld [vmem:[%s1740 + $0x20] sm:$0xff]
        %v1746 = vld [vmem:[%s1740 + $0x28] sm:$0xff]
        %v1747 = vld [vmem:[%s1740 + $0x30] sm:$0xff]
        %v1748 = vld [vmem:[%s1740 + $0x38] sm:$0xff]
        %v1749 = vld [vmem:[%s1740 + $0x40] sm:$0xff]
        %v1750 = vld [vmem:[%s1740 + $0x48] sm:$0xff]
        %v1751 = vld [vmem:[%s1740 + $0x50] sm:$0xff]
        %v1752 = vld [vmem:[%s1740 + $0x58] sm:$0xff]
        %v1753 = vld [vmem:[%s1740 + $0x60] sm:$0xff]
        %v1754 = vld [vmem:[%s1740 + $0x68] sm:$0xff]
        %v1755 = vld [vmem:[%s1740 + $0x70] sm:$0xff]
        %v1756 = vld [vmem:[%s1740 + $0x78] sm:$0xff]
        %v1757 = vld [vmem:[%s1740 + $0x80] sm:$0xff]
        %v1758 = vld [vmem:[%s1740 + $0x88] sm:$0xff]
        %v1759 = vld [vmem:[%s1740 + $0x90] sm:$0xff]
        %v1760 = vld [vmem:[%s1740 + $0x98] sm:$0xff]
        %v1761 = vld [vmem:[%s1740 + $0xa0] sm:$0xff]
        %v1762 = vld [vmem:[%s1740 + $0xa8] sm:$0xff]
        %v1763 = vld [vmem:[%s1740 + $0xb0] sm:$0xff]
        %v1764 = vld [vmem:[%s1740 + $0xb8] sm:$0xff]
        %v1765 = vld [vmem:[%s1740 + $0xc0] sm:$0xff]
        %v1766 = vld [vmem:[%s1740 + $0xc8] sm:$0xff]
        %v1767 = vld [vmem:[%s1740 + $0xd0] sm:$0xff]
        %v1768 = vld [vmem:[%s1740 + $0xd8] sm:$0xff]
        %v1769 = vld [vmem:[%s1740 + $0xe0] sm:$0xff]
        %v1770 = vld [vmem:[%s1740 + $0xe8] sm:$0xff]
        %v1771 = vld [vmem:[%s1740 + $0xf0] sm:$0xff]
        %v1772 = vld [vmem:[%s1740 + $0xf8] sm:$0xff]
        %v1773 = vld [vmem:[%s1740 + $0x100] sm:$0xff]
        %v1774 = vld [vmem:[%s1740 + $0x108] sm:$0xff]
        %v1775 = vld [vmem:[%s1740 + $0x110] sm:$0xff]
        %v1776 = vld [vmem:[%s1740 + $0x118] sm:$0xff]
        %v1777 = vld [vmem:[%s1740 + $0x120] sm:$0xff]
        %v1778 = vld [vmem:[%s1740 + $0x128] sm:$0xff]
        %v1779 = vld [vmem:[%s1740 + $0x130] sm:$0xff]
        %v1780 = vld [vmem:[%s1740 + $0x138] sm:$0xff]
        %v1781 = vld [vmem:[%s1740 + $0x140] sm:$0xff]
        %v1782 = vld [vmem:[%s1740 + $0x148] sm:$0xff]
        %v1783 = vld [vmem:[%s1740 + $0x150] sm:$0xff]
        %v1784 = vld [vmem:[%s1740 + $0x158] sm:$0xff]
        %v1785 = vld [vmem:[%s1740 + $0x160] sm:$0xff]
        %v1786 = vld [vmem:[%s1740 + $0x168] sm:$0xff]
        %v1787 = vld [vmem:[%s1740 + $0x170] sm:$0xff]
        %v1788 = vld [vmem:[%s1740 + $0x178] sm:$0xff]
        %v1789 = vld [vmem:[%s1740 + $0x180] sm:$0xff]
        %v1790 = vld [vmem:[%s1740 + $0x188] sm:$0xff]
        %v1792 = vsel %vm1442, %v1739, 0
        %1794 = vmatprep.subr.mxu0 %v1742
        %1795 = vmatpush1.msra.mxu0 %v1741
        %1796 = vmatprep.subr.mxu0 %v1744
        %1797 = vmatpush1.msra.mxu0 %v1743
        %1798 = vmatprep.subr.mxu0 %v1746
        %1799 = vmatpush1.msra.mxu0 %v1745
        %1800 = vmatprep.subr.mxu0 %v1748
        %1801 = vmatpush1.msra.mxu0 %v1747
        %1802 = vmatprep.subr.mxu0 %v1750
        %1803 = vmatpush1.msra.mxu0 %v1749
        %1804 = vmatprep.subr.mxu0 %v1752
        %1805 = vmatpush1.msra.mxu0 %v1751
        %1806 = vmatprep.subr.mxu0 %v1754
        %1807 = vmatpush1.msra.mxu0 %v1753
        %1808 = vmatprep.subr.mxu0 %v1756
        %1809 = vmatpush1.msra.mxu0 %v1755
        %1810 = vmatprep.subr.mxu0 %v1758
        %1811 = vmatpush1.msra.mxu0 %v1757
        %1812 = vmatprep.subr.mxu0 %v1760
        %1813 = vmatpush1.msra.mxu0 %v1759
        %1814 = vmatprep.subr.mxu0 %v1762
        %1815 = vmatpush1.msra.mxu0 %v1761
        %1816 = vmatprep.subr.mxu0 %v1764
        %1817 = vmatpush1.msra.mxu0 %v1763
        %1818 = vmatprep.subr.mxu0 %v1766
        %1819 = vmatpush1.msra.mxu0 %v1765
        %1820 = vmatprep.subr.mxu0 %v1768
        %1821 = vmatpush1.msra.mxu0 %v1767
        %1822 = vmatprep.subr.mxu0 %v1770
        %1823 = vmatpush1.msra.mxu0 %v1769
        %1824 = vmatprep.subr.mxu0 %v1772
        %1825 = vmatpush1.msra.mxu0 %v1771
        %1826 = vmatprep.subr.mxu0 %v1774
        %1827 = vmatpush1.msra.mxu0 %v1773
        %1828 = vmatprep.subr.mxu0 %v1776
        %1829 = vmatpush1.msra.mxu0 %v1775
        %1830 = vmatprep.subr.mxu0 %v1778
        %1831 = vmatpush1.msra.mxu0 %v1777
        %1832 = vmatprep.subr.mxu0 %v1780
        %1833 = vmatpush1.msra.mxu0 %v1779
        %1834 = vmatprep.subr.mxu0 %v1782
        %1835 = vmatpush1.msra.mxu0 %v1781
        %1836 = vmatprep.subr.mxu0 %v1784
        %1837 = vmatpush1.msra.mxu0 %v1783
        %1838 = vmatprep.subr.mxu0 %v1786
        %1839 = vmatpush1.msra.mxu0 %v1785
        %1840 = vmatprep.subr.mxu0 %v1788
        %1841 = vmatpush1.msra.mxu0 %v1787
        %1842 = vmatprep.subr.mxu0 %v1790
        %1843 = vmatpush1.msra.mxu0 %v1789
        %1844 = vmatprep.subr.mxu0 0.0
        %1845 = vmatpush1.msra.mxu0 0.0
        %1846 = vmatprep.subr.mxu0 0.0
        %1847 = vmatpush1.msra.mxu0 0.0
        %1848 = vmatprep.subr.mxu0 0.0
        %1849 = vmatpush1.msra.mxu0 0.0
        %1850 = vmatprep.subr.mxu0 0.0
        %1851 = vmatpush1.msra.mxu0 0.0
        %1852 = vmatprep.subr.mxu0 0.0
        %1853 = vmatpush1.msra.mxu0 0.0
        %1854 = vmatprep.subr.mxu0 0.0
        %1855 = vmatpush1.msra.mxu0 0.0
        %1856 = vmatprep.subr.mxu0 0.0
        %1857 = vmatpush1.msra.mxu0 0.0
        %1858 = vmatprep.mubr.f32.mxu0 %v1792
        %1859 = vmatmul.mubr.f32.gmra.mrb[0].mxu0 %v1738
        %v1860 = vpop.f32.mrb[0].mxu0
        %v1861 = vadd.f32 0.0, %v1860
        %v1862 = vpop.f32.mrb[0].mxu0
        %v1863 = vadd.f32 0.0, %v1862
        %1864 = vdwg.mxu0
        %v1867 = vcombine.low %v1861, %v1863
        %v1869 = vunpack.c.l.s4 1983009808
        %v1870 = vunpack.c.0.s8 %v1869
        %v1871 = vlaneseq
        %v1872 = vshrl.u32 %v1871, 7
        %v1873 = vsub.s32 %v1870, %v1872
        %v1874 = vrot.slane %v1867, %v1873
        %v1876 = vadd.f32 %v1702, %v1874
        %s1877 = sadd.s32 %s1354, 3
        %s1878 = sshra.s32 %s1877, 3
        %s1879 = sand.u32 %s1877, 7
        %s1880 = sshra.s32 %s1877, 3
        %s1881 = sand.u32 %s1877, 7
        %s1882 = smul.u32 %s1878, 2
        %s1883 = smul.u32 %s1882, 8
        %s1884 = sadd.s32 %s1883, %s1881
        %s1885 = scalar_lea.vmem [#allocation2], %s1884
        %v1886 = vld [vmem:[%s1885] ss:$8 sm:$0x3]
        %s1887 = sadd.s32 64, %s1884
        %s1888 = scalar_lea.vmem [#allocation2], %s1887
        %v1889 = vld [vmem:[%s1888] ss:$8 sm:$0x3]
        %v1891 = vlaneseq
        %v1892 = vshrl.u32 %v1891, 7
        %v1893 = vsub.s32 0, %v1892
        %v1894 = vrot.slane %v1886, %v1893
        %v1895 = vlaneseq
        %v1896 = vshrl.u32 %v1895, 7
        %v1897 = vsub.s32 1, %v1896
        %v1898 = vrot.slane %v1886, %v1897
        %v1902 = vlaneseq
        %v1903 = vshrl.u32 %v1902, 7
        %v1904 = vsub.s32 0, %v1903
        %v1905 = vrot.slane %v1889, %v1904
        %v1906 = vlaneseq
        %v1907 = vshrl.u32 %v1906, 7
        %v1908 = vsub.s32 1, %v1907
        %v1909 = vrot.slane %v1889, %v1908
        %v1912 = vsel %vm1389, %v1894, %v1905
        %v1913 = vsel %vm1389, %v1898, %v1909
        %s1914 = scalar_lea.vmem %s294, 1200
        %v1915 = vld [vmem:[%s1914] sm:$0xff]
        %v1916 = vld [vmem:[%s1914 + $0x8] sm:$0xff]
        %v1917 = vld [vmem:[%s1914 + $0x10] sm:$0xff]
        %v1918 = vld [vmem:[%s1914 + $0x18] sm:$0xff]
        %v1919 = vld [vmem:[%s1914 + $0x20] sm:$0xff]
        %v1920 = vld [vmem:[%s1914 + $0x28] sm:$0xff]
        %v1921 = vld [vmem:[%s1914 + $0x30] sm:$0xff]
        %v1922 = vld [vmem:[%s1914 + $0x38] sm:$0xff]
        %v1923 = vld [vmem:[%s1914 + $0x40] sm:$0xff]
        %v1924 = vld [vmem:[%s1914 + $0x48] sm:$0xff]
        %v1925 = vld [vmem:[%s1914 + $0x50] sm:$0xff]
        %v1926 = vld [vmem:[%s1914 + $0x58] sm:$0xff]
        %v1927 = vld [vmem:[%s1914 + $0x60] sm:$0xff]
        %v1928 = vld [vmem:[%s1914 + $0x68] sm:$0xff]
        %v1929 = vld [vmem:[%s1914 + $0x70] sm:$0xff]
        %v1930 = vld [vmem:[%s1914 + $0x78] sm:$0xff]
        %v1931 = vld [vmem:[%s1914 + $0x80] sm:$0xff]
        %v1932 = vld [vmem:[%s1914 + $0x88] sm:$0xff]
        %v1933 = vld [vmem:[%s1914 + $0x90] sm:$0xff]
        %v1934 = vld [vmem:[%s1914 + $0x98] sm:$0xff]
        %v1935 = vld [vmem:[%s1914 + $0xa0] sm:$0xff]
        %v1936 = vld [vmem:[%s1914 + $0xa8] sm:$0xff]
        %v1937 = vld [vmem:[%s1914 + $0xb0] sm:$0xff]
        %v1938 = vld [vmem:[%s1914 + $0xb8] sm:$0xff]
        %v1939 = vld [vmem:[%s1914 + $0xc0] sm:$0xff]
        %v1940 = vld [vmem:[%s1914 + $0xc8] sm:$0xff]
        %v1941 = vld [vmem:[%s1914 + $0xd0] sm:$0xff]
        %v1942 = vld [vmem:[%s1914 + $0xd8] sm:$0xff]
        %v1943 = vld [vmem:[%s1914 + $0xe0] sm:$0xff]
        %v1944 = vld [vmem:[%s1914 + $0xe8] sm:$0xff]
        %v1945 = vld [vmem:[%s1914 + $0xf0] sm:$0xff]
        %v1946 = vld [vmem:[%s1914 + $0xf8] sm:$0xff]
        %v1947 = vld [vmem:[%s1914 + $0x100] sm:$0xff]
        %v1948 = vld [vmem:[%s1914 + $0x108] sm:$0xff]
        %v1949 = vld [vmem:[%s1914 + $0x110] sm:$0xff]
        %v1950 = vld [vmem:[%s1914 + $0x118] sm:$0xff]
        %v1951 = vld [vmem:[%s1914 + $0x120] sm:$0xff]
        %v1952 = vld [vmem:[%s1914 + $0x128] sm:$0xff]
        %v1953 = vld [vmem:[%s1914 + $0x130] sm:$0xff]
        %v1954 = vld [vmem:[%s1914 + $0x138] sm:$0xff]
        %v1955 = vld [vmem:[%s1914 + $0x140] sm:$0xff]
        %v1956 = vld [vmem:[%s1914 + $0x148] sm:$0xff]
        %v1957 = vld [vmem:[%s1914 + $0x150] sm:$0xff]
        %v1958 = vld [vmem:[%s1914 + $0x158] sm:$0xff]
        %v1959 = vld [vmem:[%s1914 + $0x160] sm:$0xff]
        %v1960 = vld [vmem:[%s1914 + $0x168] sm:$0xff]
        %v1961 = vld [vmem:[%s1914 + $0x170] sm:$0xff]
        %v1962 = vld [vmem:[%s1914 + $0x178] sm:$0xff]
        %v1963 = vld [vmem:[%s1914 + $0x180] sm:$0xff]
        %v1964 = vld [vmem:[%s1914 + $0x188] sm:$0xff]
        %v1966 = vsel %vm1442, %v1913, 0
        %1968 = vmatprep.subr.mxu0 %v1916
        %1969 = vmatpush1.msra.mxu0 %v1915
        %1970 = vmatprep.subr.mxu0 %v1918
        %1971 = vmatpush1.msra.mxu0 %v1917
        %1972 = vmatprep.subr.mxu0 %v1920
        %1973 = vmatpush1.msra.mxu0 %v1919
        %1974 = vmatprep.subr.mxu0 %v1922
        %1975 = vmatpush1.msra.mxu0 %v1921
        %1976 = vmatprep.subr.mxu0 %v1924
        %1977 = vmatpush1.msra.mxu0 %v1923
        %1978 = vmatprep.subr.mxu0 %v1926
        %1979 = vmatpush1.msra.mxu0 %v1925
        %1980 = vmatprep.subr.mxu0 %v1928
        %1981 = vmatpush1.msra.mxu0 %v1927
        %1982 = vmatprep.subr.mxu0 %v1930
        %1983 = vmatpush1.msra.mxu0 %v1929
        %1984 = vmatprep.subr.mxu0 %v1932
        %1985 = vmatpush1.msra.mxu0 %v1931
        %1986 = vmatprep.subr.mxu0 %v1934
        %1987 = vmatpush1.msra.mxu0 %v1933
        %1988 = vmatprep.subr.mxu0 %v1936
        %1989 = vmatpush1.msra.mxu0 %v1935
        %1990 = vmatprep.subr.mxu0 %v1938
        %1991 = vmatpush1.msra.mxu0 %v1937
        %1992 = vmatprep.subr.mxu0 %v1940
        %1993 = vmatpush1.msra.mxu0 %v1939
        %1994 = vmatprep.subr.mxu0 %v1942
        %1995 = vmatpush1.msra.mxu0 %v1941
        %1996 = vmatprep.subr.mxu0 %v1944
        %1997 = vmatpush1.msra.mxu0 %v1943
        %1998 = vmatprep.subr.mxu0 %v1946
        %1999 = vmatpush1.msra.mxu0 %v1945
        %2000 = vmatprep.subr.mxu0 %v1948
        %2001 = vmatpush1.msra.mxu0 %v1947
        %2002 = vmatprep.subr.mxu0 %v1950
        %2003 = vmatpush1.msra.mxu0 %v1949
        %2004 = vmatprep.subr.mxu0 %v1952
        %2005 = vmatpush1.msra.mxu0 %v1951
        %2006 = vmatprep.subr.mxu0 %v1954
        %2007 = vmatpush1.msra.mxu0 %v1953
        %2008 = vmatprep.subr.mxu0 %v1956
        %2009 = vmatpush1.msra.mxu0 %v1955
        %2010 = vmatprep.subr.mxu0 %v1958
        %2011 = vmatpush1.msra.mxu0 %v1957
        %2012 = vmatprep.subr.mxu0 %v1960
        %2013 = vmatpush1.msra.mxu0 %v1959
        %2014 = vmatprep.subr.mxu0 %v1962
        %2015 = vmatpush1.msra.mxu0 %v1961
        %2016 = vmatprep.subr.mxu0 %v1964
        %2017 = vmatpush1.msra.mxu0 %v1963
        %2018 = vmatprep.subr.mxu0 0.0
        %2019 = vmatpush1.msra.mxu0 0.0
        %2020 = vmatprep.subr.mxu0 0.0
        %2021 = vmatpush1.msra.mxu0 0.0
        %2022 = vmatprep.subr.mxu0 0.0
        %2023 = vmatpush1.msra.mxu0 0.0
        %2024 = vmatprep.subr.mxu0 0.0
        %2025 = vmatpush1.msra.mxu0 0.0
        %2026 = vmatprep.subr.mxu0 0.0
        %2027 = vmatpush1.msra.mxu0 0.0
        %2028 = vmatprep.subr.mxu0 0.0
        %2029 = vmatpush1.msra.mxu0 0.0
        %2030 = vmatprep.subr.mxu0 0.0
        %2031 = vmatpush1.msra.mxu0 0.0
        %2032 = vmatprep.mubr.f32.mxu0 %v1966
        %2033 = vmatmul.mubr.f32.gmra.mrb[0].mxu0 %v1912
        %v2034 = vpop.f32.mrb[0].mxu0
        %v2035 = vadd.f32 0.0, %v2034
        %v2036 = vpop.f32.mrb[0].mxu0
        %v2037 = vadd.f32 0.0, %v2036
        %2038 = vdwg.mxu0
        %v2041 = vcombine.low %v2035, %v2037
        %v2043 = vunpack.c.l.s4 1983009808
        %v2044 = vunpack.c.0.s8 %v2043
        %v2045 = vlaneseq
        %v2046 = vshrl.u32 %v2045, 7
        %v2047 = vsub.s32 %v2044, %v2046
        %v2048 = vrot.slane %v2041, %v2047
        %v2050 = vadd.f32 %v1876, %v2048
        %vm2051 = vcmask 1041408
        %vm2052 = vcmask 584706
        %vm2053 = vmor %vm2052, %vm2051
        %2054 = vst.msk [vmem:[#allocation3] sm:$0xf] %vm2053, %v2050
        %p2055 = scmp.eq.s32.totalorder %s22, 7
        // Predicated region
        $region53: #{cnn3d_forward.3} parent=47 // pred_check
          %p2056 = pneg %p2055
        $region54: #{cnn3d_forward.3} parent=47 // pred_check_branch
          %2058 = sbr.rel (%p2056) target = $region56
        $region55: #{cnn3d_forward.3} parent=47 // pred_region
          %v2059 = vld [vmem:[#allocation3] sm:$0xf]
          %v2060 = vld [vmem:[%s4] sm:$0x3]
          %v2062 = vlaneseq
          %v2063 = vshrl.u32 %v2062, 7
          %v2064 = vsub.s32 0, %v2063
          %v2065 = vrot.slane %v2060, %v2064
          %v2066 = vlaneseq
          %v2067 = vshrl.u32 %v2066, 7
          %v2068 = vsub.s32 1, %v2067
          %v2069 = vrot.slane %v2060, %v2068
          %v2070 = vcombine.low %v2065, %v2069
          %v2072 = vunpack.c.l.s4 1983009808
          %v2073 = vunpack.c.0.s8 %v2072
          %v2074 = vlaneseq
          %v2075 = vshrl.u32 %v2074, 7
          %v2076 = vsub.s32 %v2073, %v2075
          %v2077 = vrot.slane %v2070, %v2076
          %v2079 = vadd.f32 %v2059, %v2077
          %v2080 = vld [vmem:[%s5] sm:$0xff]
          %v2081 = vld [vmem:[%s5 + $0x8] sm:$0xff]
          %v2082 = vld [vmem:[%s5 + $0x10] sm:$0xff]
          %v2083 = vld [vmem:[%s5 + $0x18] sm:$0xff]
          %v2084 = vld [vmem:[%s5 + $0x20] sm:$0xff]
          %v2085 = vld [vmem:[%s5 + $0x28] sm:$0xff]
          %v2086 = vld [vmem:[%s5 + $0x30] sm:$0xff]
          %v2087 = vld [vmem:[%s5 + $0x38] sm:$0xff]
          %v2088 = vld [vmem:[%s5 + $0x40] sm:$0xff]
          %v2089 = vld [vmem:[%s5 + $0x48] sm:$0xff]
          %v2090 = vld [vmem:[%s5 + $0x50] sm:$0xff]
          %v2091 = vld [vmem:[%s5 + $0x58] sm:$0xff]
          %v2092 = vld [vmem:[%s5 + $0x60] sm:$0xff]
          %v2093 = vld [vmem:[%s5 + $0x68] sm:$0xff]
          %v2094 = vld [vmem:[%s5 + $0x70] sm:$0xff]
          %v2095 = vld [vmem:[%s5 + $0x78] sm:$0xff]
          %v2096 = vld [vmem:[%s5 + $0x80] sm:$0xff]
          %v2097 = vld [vmem:[%s5 + $0x88] sm:$0xff]
          %v2098 = vld [vmem:[%s5 + $0x90] sm:$0xff]
          %v2099 = vld [vmem:[%s5 + $0x98] sm:$0xff]
          %v2100 = vld [vmem:[%s5 + $0xa0] sm:$0xff]
          %v2101 = vld [vmem:[%s5 + $0xa8] sm:$0xff]
          %v2102 = vld [vmem:[%s5 + $0xb0] sm:$0xff]
          %v2103 = vld [vmem:[%s5 + $0xb8] sm:$0xff]
          %v2104 = vld [vmem:[%s5 + $0xc0] sm:$0xff]
          %v2105 = vld [vmem:[%s6] sm:$0x1]
          %v2107 = vlaneseq
          %v2108 = vshrl.u32 %v2107, 7
          %v2109 = vsub.s32 0, %v2108
          %v2110 = vrot.slane %v2105, %v2109
          %v2114 = vunpack.c.l.s4 1983009808
          %v2115 = vunpack.c.0.s8 %v2114
          %v2116 = vlaneseq
          %v2117 = vshrl.u32 %v2116, 7
          %v2118 = vsub.s32 %v2115, %v2117
          %v2119 = vrot.slane %v2079, %v2118
          %v2120 = vcombine.high %v2119, %v2119
          %v2122 = vsel %vm1442, %v2120, 0
          %2124 = vmatprep.subr.mxu0 0.0
          %2125 = vmatpush1.msra.mxu0 %v2080
          %2126 = vmatprep.subr.mxu0 0.0
          %2127 = vmatpush1.msra.mxu0 %v2081
          %2128 = vmatprep.subr.mxu0 0.0
          %2129 = vmatpush1.msra.mxu0 %v2082
          %2130 = vmatprep.subr.mxu0 0.0
          %2131 = vmatpush1.msra.mxu0 %v2083
          %2132 = vmatprep.subr.mxu0 0.0
          %2133 = vmatpush1.msra.mxu0 %v2084
          %2134 = vmatprep.subr.mxu0 0.0
          %2135 = vmatpush1.msra.mxu0 %v2085
          %2136 = vmatprep.subr.mxu0 0.0
          %2137 = vmatpush1.msra.mxu0 %v2086
          %2138 = vmatprep.subr.mxu0 0.0
          %2139 = vmatpush1.msra.mxu0 %v2087
          %2140 = vmatprep.subr.mxu0 0.0
          %2141 = vmatpush1.msra.mxu0 %v2088
          %2142 = vmatprep.subr.mxu0 0.0
          %2143 = vmatpush1.msra.mxu0 %v2089
          %2144 = vmatprep.subr.mxu0 0.0
          %2145 = vmatpush1.msra.mxu0 %v2090
          %2146 = vmatprep.subr.mxu0 0.0
          %2147 = vmatpush1.msra.mxu0 %v2091
          %2148 = vmatprep.subr.mxu0 0.0
          %2149 = vmatpush1.msra.mxu0 %v2092
          %2150 = vmatprep.subr.mxu0 0.0
          %2151 = vmatpush1.msra.mxu0 %v2093
          %2152 = vmatprep.subr.mxu0 0.0
          %2153 = vmatpush1.msra.mxu0 %v2094
          %2154 = vmatprep.subr.mxu0 0.0
          %2155 = vmatpush1.msra.mxu0 %v2095
          %2156 = vmatprep.subr.mxu0 0.0
          %2157 = vmatpush1.msra.mxu0 %v2096
          %2158 = vmatprep.subr.mxu0 0.0
          %2159 = vmatpush1.msra.mxu0 %v2097
          %2160 = vmatprep.subr.mxu0 0.0
          %2161 = vmatpush1.msra.mxu0 %v2098
          %2162 = vmatprep.subr.mxu0 0.0
          %2163 = vmatpush1.msra.mxu0 %v2099
          %2164 = vmatprep.subr.mxu0 0.0
          %2165 = vmatpush1.msra.mxu0 %v2100
          %2166 = vmatprep.subr.mxu0 0.0
          %2167 = vmatpush1.msra.mxu0 %v2101
          %2168 = vmatprep.subr.mxu0 0.0
          %2169 = vmatpush1.msra.mxu0 %v2102
          %2170 = vmatprep.subr.mxu0 0.0
          %2171 = vmatpush1.msra.mxu0 %v2103
          %2172 = vmatprep.subr.mxu0 0.0
          %2173 = vmatpush1.msra.mxu0 %v2104
          %2174 = vmatprep.subr.mxu0 0.0
          %2175 = vmatpush1.msra.mxu0 0.0
          %2176 = vmatprep.subr.mxu0 0.0
          %2177 = vmatpush1.msra.mxu0 0.0
          %2178 = vmatprep.subr.mxu0 0.0
          %2179 = vmatpush1.msra.mxu0 0.0
          %2180 = vmatprep.subr.mxu0 0.0
          %2181 = vmatpush1.msra.mxu0 0.0
          %2182 = vmatprep.subr.mxu0 0.0
          %2183 = vmatpush1.msra.mxu0 0.0
          %2184 = vmatprep.subr.mxu0 0.0
          %2185 = vmatpush1.msra.mxu0 0.0
          %2186 = vmatprep.subr.mxu0 0.0
          %2187 = vmatpush1.msra.mxu0 0.0
          %2188 = vmatprep.mubr.f32.mxu0 %v2122
          %2189 = vmatmul.mubr.f32.gmra.mrb[0].mxu0 %v2119
          %v2190 = vpop.f32.mrb[0].mxu0
          %v2191 = vadd.f32 %v2110, %v2190
          %v2192 = vpop.f32.mrb[0].mxu0
          %2193 = vdwg.mxu0
          %vm2194 = vcmask 41984
          %2195 = vst.msk [vmem:[#allocation4] sm:$0x3] %vm2194, %v2191
          %v2196 = vsel %vm2194, %v2191, -inf
          %2197 = vmax.xlane.f32.xlu0 %v2196
          %v2198 = vpop.xlane.xlu0 %2197
          %v2199 = vsub.f32 %v2191, %v2198
          %v2200 = vmul.f32 %v2199, 1.442695
          %v2201 = vpow.pop %v2200
          %v2202 = vsel %vm2194, %v2201, 0.0
          %2203 = vadd.xlane.f32.xlu0 %v2202
          %v2204 = vpop.xlane.xlu0 %2203
          %v2205 = vlog2.pop %v2204
          %v2206 = vmul.f32 %v2205, 0.6931472
          %v2207 = vsub.f32 %v2199, %v2206
          %2208 = vst.msk [vmem:[#allocation6] sm:$0x3] %vm2194, %v2207
        $region56: #{cnn3d_forward.3} parent=47 // pred_fallthru
          _
        // Predicated region
        $region57: #{cnn3d_forward.3} parent=47 // pred_check
          %p2209 = pneg %p187
        $region58: #{cnn3d_forward.3} parent=47 // pred_check_branch
          %2211 = sbr.rel (%p2209) target = $region60
        $region59: #{cnn3d_forward.3} parent=47 // pred_region
          %s2213 = ssub.s32 32, 32
          %2214 = vsyncadd [#allocation5], %s2213
          %s2216 = sshll.u32 [#allocation4], 4
          %s2217 = int_to_ptr.vmem [resolvable:$true] %s2216
          %2219 = dma.vmem_to_hbm [thread:$0]  %s2217, 32, %s7, [#allocation5]
        $region60: #{cnn3d_forward.3} parent=47 // pred_fallthru
          _
        // Predicated region
        $region61: #{cnn3d_forward.3} parent=47 // pred_check
          %p2220 = pneg %p208
        $region62: #{cnn3d_forward.3} parent=47 // pred_check_branch
          %2222 = sbr.rel (%p2220) target = $region64
        $region63: #{cnn3d_forward.3} parent=47 // pred_region
          %s2224 = ssub.s32 32, 32
          %2225 = vsyncadd [#allocation7], %s2224
          %s2227 = sshll.u32 [#allocation6], 4
          %s2228 = int_to_ptr.vmem [resolvable:$true] %s2227
          %2230 = dma.vmem_to_hbm [thread:$0]  %s2228, 32, %s8, [#allocation7]
        $region64: #{cnn3d_forward.3} parent=47 // pred_fallthru
          _
        // Predicated region
        $region65: #{cnn3d_forward.3} parent=47 // pred_check
          %p2231 = pneg %p187
        $region66: #{cnn3d_forward.3} parent=47 // pred_check_branch
          %2233 = sbr.rel (%p2231) target = $region68
        $region67: #{cnn3d_forward.3} parent=47 // pred_region
          %2234 = dma.done [#allocation5], 32
        $region68: #{cnn3d_forward.3} parent=47 // pred_fallthru
          _
        // Predicated region
        $region69: #{cnn3d_forward.3} parent=47 // pred_check
          %p2235 = pneg %p208
        $region70: #{cnn3d_forward.3} parent=47 // pred_check_branch
          %2237 = sbr.rel (%p2235) target = $region72
        $region71: #{cnn3d_forward.3} parent=47 // pred_region
          %2238 = dma.done [#allocation7], 32
        $region72: #{cnn3d_forward.3} parent=47 // pred_fallthru
          _
      $region48: #{cnn3d_forward.3} parent=5 // pred_fallthru
        _
      %p2239 = scmp.le.s32.totalorder 2, %s17
      // Predicated region
      $region73: #{cnn3d_forward.3} parent=5 // pred_check
        %p2240 = pneg %p2239
      $region74: #{cnn3d_forward.3} parent=5 // pred_check_branch
        %2242 = sbr.rel (%p2240) target = $region76
      $region75: #{cnn3d_forward.3} parent=5 // pred_region
        %s2243 = ssub.s32 %s17, 2
      $region76: #{cnn3d_forward.3} parent=5 // pred_fallthru
        _
    $region6: #{cnn3d_forward.3} parent=1 // loop_footer
      %s21 = sadd.s32 1, %s17
    $region7: #{cnn3d_forward.3} parent=1 // loop_footer_branch
      %16 = sbr.rel target = $region3
    $region8: #{cnn3d_forward.3} parent=1 // loop_exit
      _
    %2244 = vsyncpa [#allocation5], 1
    %s2245 = scalar_lea.sflag [#allocation5], 1
    %2246 = vsyncpa %s2245, 1
    %2247 = vsyncpa [#allocation7], 1

</llo_original>
